<compile_context>
chip_gen: v5e
topology: v5e:2x2
jax: 0.10.0
libtpu: 0.0.40
codegen_flags: <defaults>
</compile_context>

<pallas_src>
import functools

import jax
import jax.numpy as jnp
from jax.experimental import pallas as pl
from jax.experimental.pallas import tpu as pltpu


_EPS = 1e-5
_VMEM_LIMIT = 32 * 1024 * 1024   # fits v7x (64 MiB phys) as well as v5e/v6e


def _round_up(x, m):
    return (x + m - 1) // m * m


def _m_tiling(M, cap=256):
    """(M_pad, tm) with tm | M_pad, tm a multiple of 16 (bf16-friendly), tm<=cap."""
    M16 = _round_up(M, 16)
    if M16 <= cap:
        return M16, M16
    return _round_up(M, cap), cap


# ----------------------------- Pallas kernels -----------------------------

def _matmul_kernel(a_ref, b_ref, o_ref):
    # accumulate directly into the resident f32 output block (no acc scratch)
    @pl.when(pl.program_id(1) == 0)
    def _():
        o_ref[...] = jnp.zeros_like(o_ref)

    o_ref[...] += jnp.dot(a_ref[...], b_ref[...],
                          preferred_element_type=jnp.float32)


def pallas_matmul(a, b_padded, out_cols, block_k=128):
    """a: (M, K) float; b_padded: (K_pad, N_pad) bf16 (pre-padded weights).
    Returns (M, out_cols) float32."""
    M, K = a.shape
    K_pad, N_pad = b_padded.shape
    M_pad, tm = _m_tiling(M)
    a_p = jnp.pad(a.astype(jnp.bfloat16), ((0, M_pad - M), (0, K_pad - K)))
    out = pl.pallas_call(
        _matmul_kernel,
        out_shape=jax.ShapeDtypeStruct((M_pad, N_pad), jnp.float32),
        grid_spec=pltpu.PrefetchScalarGridSpec(
            num_scalar_prefetch=0,
            grid=(M_pad // tm, K_pad // block_k),
            in_specs=[
                pl.BlockSpec((tm, block_k), lambda m, k: (m, k)),
                pl.BlockSpec((block_k, N_pad), lambda m, k: (k, 0)),
            ],
            out_specs=pl.BlockSpec((tm, N_pad), lambda m, k: (m, 0)),
        ),
        compiler_params=pltpu.CompilerParams(
            dimension_semantics=("parallel", "arbitrary"),
            vmem_limit_bytes=_VMEM_LIMIT),
    )(a_p, b_padded)
    return out[:M, :out_cols]


def _linear_bn_relu_kernel(a_ref, b_ref, g_ref, bta_ref, o_ref, *, inv_count, eps):
    k = pl.program_id(0)

    @pl.when(k == 0)
    def _():
        o_ref[...] = jnp.zeros_like(o_ref)

    o_ref[...] += jnp.dot(a_ref[...], b_ref[...],
                          preferred_element_type=jnp.float32)

    @pl.when(k == pl.num_programs(0) - 1)
    def _():
        z = o_ref[...]
        mean = jnp.sum(z, axis=0, keepdims=True) * inv_count
        var = jnp.sum(z * z, axis=0, keepdims=True) * inv_count - mean * mean
        scale = g_ref[...] * jax.lax.rsqrt(var + eps)
        shift = bta_ref[...] - mean * scale
        o_ref[...] = jnp.maximum(z * scale + shift, 0.0)


def pallas_linear_bn_relu(x, w_padded, gamma_p, beta_p, out_cols, block_k=128):
    """Fused Linear(no bias) -> BatchNorm1d(batch stats) -> ReLU.
    x: (B, K); w_padded: (K_pad, N_pad) bf16; gamma_p/beta_p: (1, N_pad) f32."""
    Bn, K = x.shape
    K_pad, N_pad = w_padded.shape
    M_pad = _round_up(Bn, 16)
    x_p = jnp.pad(x.astype(jnp.bfloat16), ((0, M_pad - Bn), (0, K_pad - K)))
    out = pl.pallas_call(
        functools.partial(_linear_bn_relu_kernel, inv_count=1.0 / Bn, eps=_EPS),
        out_shape=jax.ShapeDtypeStruct((M_pad, N_pad), jnp.float32),
        grid_spec=pltpu.PrefetchScalarGridSpec(
            num_scalar_prefetch=0,
            grid=(K_pad // block_k,),
            in_specs=[
                pl.BlockSpec((M_pad, block_k), lambda k: (0, k)),
                pl.BlockSpec((block_k, N_pad), lambda k: (k, 0)),
                pl.BlockSpec((1, N_pad), lambda k: (0, 0)),
                pl.BlockSpec((1, N_pad), lambda k: (0, 0)),
            ],
            out_specs=pl.BlockSpec((M_pad, N_pad), lambda k: (0, 0)),
        ),
        compiler_params=pltpu.CompilerParams(
            dimension_semantics=("arbitrary",),
            vmem_limit_bytes=_VMEM_LIMIT),
    )(x_p, w_padded, gamma_p, beta_p)
    return out[:Bn, :out_cols]


def _bn_relu_kernel(x_ref, g_ref, b_ref, o_ref, stat_a, stat_b, *, inv_count, eps):
    phase = pl.program_id(0)
    m = pl.program_id(1)

    @pl.when((phase == 0) & (m == 0))
    def _():
        stat_a[...] = jnp.zeros_like(stat_a)
        stat_b[...] = jnp.zeros_like(stat_b)

    @pl.when(phase == 0)
    def _():
        x = x_ref[...]
        stat_a[...] += jnp.sum(x, axis=0, keepdims=True)
        stat_b[...] += jnp.sum(x * x, axis=0, keepdims=True)
        o_ref[...] = x.astype(o_ref.dtype)       # placeholder, overwritten in phase 1

    @pl.when((phase == 1) & (m == 0))
    def _():
        mean = stat_a[...] * inv_count
        var = stat_b[...] * inv_count - mean * mean
        scale = g_ref[...] * jax.lax.rsqrt(var + eps)
        stat_a[...] = scale
        stat_b[...] = b_ref[...] - mean * scale

    @pl.when(phase == 1)
    def _():
        y = jnp.maximum(x_ref[...] * stat_a[...] + stat_b[...], 0.0)
        o_ref[...] = y.astype(o_ref.dtype)


def pallas_bn_relu(x, gamma_p, beta_p, count):
    """BatchNorm (batch stats over the M rows, per channel) + ReLU in a single
    two-phase pallas_call.  x: (M, C) f32; gamma_p/beta_p: (1, C_pad) f32.
    Returns (M, C) bfloat16 (next matmul operand)."""
    M, C = x.shape
    C_pad = gamma_p.shape[1]
    M_pad, tm = _m_tiling(M)
    x_p = jnp.pad(x, ((0, M_pad - M), (0, C_pad - C)))
    out = pl.pallas_call(
        functools.partial(_bn_relu_kernel, inv_count=1.0 / count, eps=_EPS),
        out_shape=jax.ShapeDtypeStruct((M_pad, C_pad), jnp.bfloat16),
        grid_spec=pltpu.PrefetchScalarGridSpec(
            num_scalar_prefetch=0,
            grid=(2, M_pad // tm),                 # phase (stats, apply) x M tiles
            in_specs=[
                pl.BlockSpec((tm, C_pad), lambda p, m: (m, 0)),
                pl.BlockSpec((1, C_pad), lambda p, m: (0, 0)),
                pl.BlockSpec((1, C_pad), lambda p, m: (0, 0)),
            ],
            out_specs=pl.BlockSpec((tm, C_pad), lambda p, m: (m, 0)),
            scratch_shapes=[pltpu.VMEM((1, C_pad), jnp.float32),
                            pltpu.VMEM((1, C_pad), jnp.float32)],
        ),
        compiler_params=pltpu.CompilerParams(
            dimension_semantics=("arbitrary", "arbitrary"),
            vmem_limit_bytes=_VMEM_LIMIT),
    )(x_p, gamma_p, beta_p)
    return out[:M, :C]


def _bias_tanh01_kernel(x_ref, b_ref, o_ref):
    o_ref[...] = 0.5 * jnp.tanh(x_ref[...] + b_ref[...]) + 0.5


def pallas_bias_tanh01(x, bias_p):
    """out = 0.5*tanh(x + bias) + 0.5.  x: (M, C) f32; bias_p: (1, C_pad) f32."""
    M, C = x.shape
    C_pad = bias_p.shape[1]
    M_pad, tm = _m_tiling(M)
    x_p = jnp.pad(x, ((0, M_pad - M), (0, C_pad - C)))
    out = pl.pallas_call(
        _bias_tanh01_kernel,
        out_shape=jax.ShapeDtypeStruct((M_pad, C_pad), jnp.float32),
        grid_spec=pltpu.PrefetchScalarGridSpec(
            num_scalar_prefetch=0,
            grid=(M_pad // tm,),
            in_specs=[
                pl.BlockSpec((tm, C_pad), lambda m: (m, 0)),
                pl.BlockSpec((1, C_pad), lambda m: (0, 0)),
            ],
            out_specs=pl.BlockSpec((tm, C_pad), lambda m: (m, 0)),
        ),
        compiler_params=pltpu.CompilerParams(
            dimension_semantics=("parallel",),
            vmem_limit_bytes=_VMEM_LIMIT),
    )(x_p, bias_p)
    return out[:M, :C]


# ------------------------------- XLA glue ----------------------------------

def col2im_stride2_k5(z, N, H, W, Cout, kH=5, kW=5, stride=2, padding=2):
    """Scatter-add the per-input-pixel contributions into the transposed-conv
    output (k=5, s=2, p=2, output_padding=1).  z: (N*H*W, 25*Cout) f32.
    Returns (N, 2H, 2W, Cout) f32."""
    # TODO(synk): col2im stays in XLA (data-dependent overlap-add); small vs the matmul.
    Ho, Wo = stride * H, stride * W
    z = z.reshape(N, H, W, kH, kW, Cout)
    # Padded output laid out as (row_block, row_phase, col_block, col_phase) so
    # every kernel tap lands on a contiguous (non-strided) slice: padded row
    # index 2*ih + kh == 2*(ih + kh//2) + (kh % 2).
    acc = jnp.zeros((N, H + 2, stride, W + 2, stride, Cout), jnp.float32)
    for kh in range(kH):
        dh, rh = kh // stride, kh % stride
        for kw in range(kW):
            dw, rw = kw // stride, kw % stride
            acc = acc.at[:, dh:dh + H, rh, dw:dw + W, rw, :].add(
                z[:, :, :, kh, kw, :])
    y = acc.reshape(N, stride * (H + 2), stride * (W + 2), Cout)
    return y[:, padding:padding + Ho, padding:padding + Wo, :]


def init_params(key, dim=8, dim_Z=16):
    ks = jax.random.split(key, 8)

    def w(k, shape, fan_in):
        return jax.random.normal(k, shape, jnp.float32) / jnp.sqrt(fan_in)

    feat = dim * 8 * 2 * 2
    return {
        "w_l1": w(ks[0], (dim_Z, feat), dim_Z),              # Linear (in, out), no bias
        "bn1_g": jnp.ones((feat,), jnp.float32),
        "bn1_b": jnp.zeros((feat,), jnp.float32),
        # ConvTranspose2d weights in PyTorch layout (Cin, Cout, 5, 5)
        "w_d1": w(ks[1], (dim * 8, dim * 4, 5, 5), dim * 8 * 25),
        "bn_d1_g": jnp.ones((dim * 4,), jnp.float32),
        "bn_d1_b": jnp.zeros((dim * 4,), jnp.float32),
        "w_d2": w(ks[2], (dim * 4, dim * 2, 5, 5), dim * 4 * 25),
        "bn_d2_g": jnp.ones((dim * 2,), jnp.float32),
        "bn_d2_b": jnp.zeros((dim * 2,), jnp.float32),
        "w_d3": w(ks[3], (dim * 2, dim, 5, 5), dim * 2 * 25),
        "bn_d3_g": jnp.ones((dim,), jnp.float32),
        "bn_d3_b": jnp.zeros((dim,), jnp.float32),
        "w_d4": w(ks[4], (dim, 3, 5, 5), dim * 25),
        "b_d4": 0.01 * jax.random.normal(ks[5], (3,), jnp.float32),
    }


def prepare_decoder_params(params, dim):
    """One-time weight re-layout: (Cin, 25*Cout) deconv matrices (no spatial flip
    needed in this formulation), bf16 cast, MXU-friendly padding; BN/bias params
    padded to lane width.  Done once, outside the forward pass."""
    def pad2(x, rows, cols):
        return jnp.pad(x, ((0, rows - x.shape[0]), (0, cols - x.shape[1])))

    feat = dim * 8 * 2 * 2
    dim_Z = params["w_l1"].shape[0]
    prep = {"dim": dim, "feat": feat}

    Kp, Np = _round_up(dim_Z, 128), _round_up(feat, 128)
    prep["w_l1"] = pad2(params["w_l1"].astype(jnp.bfloat16), Kp, Np)
    prep["bn1_g"] = pad2(params["bn1_g"].reshape(1, -1).astype(jnp.float32), 1, Np)
    prep["bn1_b"] = pad2(params["bn1_b"].reshape(1, -1).astype(jnp.float32), 1, Np)

    layers = []
    for wk, gk, bk in (("w_d1", "bn_d1_g", "bn_d1_b"),
                       ("w_d2", "bn_d2_g", "bn_d2_b"),
                       ("w_d3", "bn_d3_g", "bn_d3_b")):
        wt = params[wk]                                      # (Cin, Cout, 5, 5)
        Cin, Cout = wt.shape[0], wt.shape[1]
        Bmat = jnp.transpose(wt, (0, 2, 3, 1)).reshape(Cin, 25 * Cout)
        layers.append({
            "kind": "bn_relu", "Cout": Cout, "n_cols": 25 * Cout,
            "Bmat": pad2(Bmat.astype(jnp.bfloat16),
                         _round_up(Cin, 128), _round_up(25 * Cout, 128)),
            "gamma": pad2(params[gk].reshape(1, -1).astype(jnp.float32),
                          1, _round_up(Cout, 128)),
            "beta": pad2(params[bk].reshape(1, -1).astype(jnp.float32),
                         1, _round_up(Cout, 128)),
        })
    wt = params["w_d4"]
    Cin, Cout = wt.shape[0], wt.shape[1]
    Bmat = jnp.transpose(wt, (0, 2, 3, 1)).reshape(Cin, 25 * Cout)
    layers.append({
        "kind": "bias_tanh", "Cout": Cout, "n_cols": 25 * Cout,
        "Bmat": pad2(Bmat.astype(jnp.bfloat16),
                     _round_up(Cin, 128), _round_up(25 * Cout, 128)),
        "bias": pad2(params["b_d4"].reshape(1, -1).astype(jnp.float32),
                     1, _round_up(Cout, 128)),
    })
    prep["deconvs"] = layers
    return prep


def decoder_forward(x, prep):
    """x: (B, dim_Z) -> (B, 3, 32, 32) NCHW, values in [0, 1]."""
    B = x.shape[0]
    dim, feat = prep["dim"], prep["feat"]

    # l1: Linear -> BatchNorm1d(batch stats) -> ReLU, fully fused in one kernel.
    y = pallas_linear_bn_relu(x, prep["w_l1"], prep["bn1_g"], prep["bn1_b"], feat)
    # view(B, dim*8, 2, 2) -> channels-last (B, 2, 2, dim*8)
    act = y.reshape(B, dim * 8, 2, 2).transpose(0, 2, 3, 1)
    H = W = 2

    for layer in prep["deconvs"]:
        Cin, Cout = act.shape[-1], layer["Cout"]
        X = act.reshape(B * H * W, Cin)
        # ConvTranspose2d as X @ W(Cin, 25*Cout): no zero-inserted rows, no im2col.
        Z = pallas_matmul(X, layer["Bmat"], layer["n_cols"])
        y_nhwc = col2im_stride2_k5(Z, B, H, W, Cout)
        H, W = 2 * H, 2 * W
        y2d = y_nhwc.reshape(B * H * W, Cout)
        if layer["kind"] == "bn_relu":
            y2d = pallas_bn_relu(y2d, layer["gamma"], layer["beta"], count=B * H * W)
        else:
            y2d = pallas_bias_tanh01(y2d, layer["bias"])     # Tanh then 0.5*y+0.5
        act = y2d.reshape(B, H, W, Cout)

    return act.transpose(0, 3, 1, 2).astype(jnp.float32)     # back to NCHW


if __name__ == "__main__":
    DIM, DIM_Z, BATCH = 8, 16, 2      # small shapes consistent with decoder(dim_Z, dim)
    key = jax.random.PRNGKey(0)
    k_p, k_x = jax.random.split(key)
    params = init_params(k_p, dim=DIM, dim_Z=DIM_Z)
    prep = prepare_decoder_params(params, dim=DIM)   # one-time weight re-layout
    x = jax.random.normal(k_x, (BATCH, DIM_Z), jnp.float32)

    fwd = jax.jit(lambda inp: decoder_forward(inp, prep))
    y = jax.block_until_ready(fwd(x))

    assert y.shape == (BATCH, 3, 32, 32), y.shape
    assert bool(jnp.all(jnp.isfinite(y)))
    assert bool(jnp.all((y >= 0.0) & (y <= 1.0)))
    print("KERNEL_OK")
</pallas_src>

<mosaic_0001>
module attributes {stable_mosaic.version = 11 : i64} {
  func.func @_linear_bn_relu_kernel(%arg0: i32, %arg1: memref<16x128xbf16, #tpu.memory_space<vmem>>, %arg2: memref<128x256xbf16, #tpu.memory_space<vmem>>, %arg3: memref<1x256xf32, #tpu.memory_space<vmem>>, %arg4: memref<1x256xf32, #tpu.memory_space<vmem>>, %arg5: memref<16x256xf32, #tpu.memory_space<vmem>>) attributes {dimension_semantics = [#tpu.dimension_semantics<arbitrary>], iteration_bounds = array<i64: 1>, scalar_prefetch = 0 : i64, scratch_operands = 0 : i64, tpu.core_type = #tpu.core_type<tc>, window_params = [{transform_indices = @transform_0, window_bounds = array<i64: 16, 128>}, {transform_indices = @transform_1, window_bounds = array<i64: 128, 256>}, {pipeline_mode = #tpu.pipeline_mode<synchronous>, transform_indices = @transform_2, window_bounds = array<i64: 1, 256>}, {pipeline_mode = #tpu.pipeline_mode<synchronous>, transform_indices = @transform_3, window_bounds = array<i64: 1, 256>}, {pipeline_mode = #tpu.pipeline_mode<synchronous>, transform_indices = @transform_4, window_bounds = array<i64: 16, 256>}]} {
    %c0_i32 = arith.constant 0 : i32
    %0 = arith.cmpi eq, %arg0, %c0_i32 : i32
    %1 = arith.extui %0 : i1 to i32
    %c0_i32_0 = arith.constant 0 : i32
    %2 = arith.cmpi ne, %1, %c0_i32_0 : i32
    scf.if %2 {
      %cst_10 = arith.constant 0.000000e+00 : f32
      %12 = vector.broadcast %cst_10 : f32 to vector<16x256xf32>
      %c0_11 = arith.constant 0 : index
      %c0_12 = arith.constant 0 : index
      %13 = vector.load %arg5[%c0_11, %c0_12] : memref<16x256xf32, #tpu.memory_space<vmem>>, vector<16x256xf32>
      tpu.vector_store %arg5[%c0_11, %c0_12], %12 {strides = array<i32>} : memref<16x256xf32, #tpu.memory_space<vmem>>, vector<16x256xf32>,
    } else {
    }
    %c0 = arith.constant 0 : index
    %c0_1 = arith.constant 0 : index
    %3 = vector.load %arg5[%c0, %c0_1] : memref<16x256xf32, #tpu.memory_space<vmem>>, vector<16x256xf32>
    %c0_2 = arith.constant 0 : index
    %c0_3 = arith.constant 0 : index
    %4 = vector.load %arg1[%c0_2, %c0_3] : memref<16x128xbf16, #tpu.memory_space<vmem>>, vector<16x128xbf16>
    %c0_4 = arith.constant 0 : index
    %c0_5 = arith.constant 0 : index
    %5 = vector.load %arg2[%c0_4, %c0_5] : memref<128x256xbf16, #tpu.memory_space<vmem>>, vector<128x256xbf16>
    %cst = arith.constant dense<0.000000e+00> : vector<16x256xf32>
    %6 = tpu.matmul %4, %5, %cst {dimension_numbers = #tpu.dot_dimension_numbers<[1], [0], [0], [1], [0, 0, 1, 1], [], []>} : vector<16x128xbf16>, vector<128x256xbf16>, vector<16x256xf32> -> vector<16x256xf32>
    %7 = arith.addf %3, %6 : vector<16x256xf32>
    %c0_6 = arith.constant 0 : index
    %c0_7 = arith.constant 0 : index
    %8 = vector.load %arg5[%c0_6, %c0_7] : memref<16x256xf32, #tpu.memory_space<vmem>>, vector<16x256xf32>
    tpu.vector_store %arg5[%c0_6, %c0_7], %7 {strides = array<i32>} : memref<16x256xf32, #tpu.memory_space<vmem>>, vector<16x256xf32>,
    %c0_i32_8 = arith.constant 0 : i32
    %9 = arith.cmpi eq, %arg0, %c0_i32_8 : i32
    %10 = arith.extui %9 : i1 to i32
    %c0_i32_9 = arith.constant 0 : i32
    %11 = arith.cmpi ne, %10, %c0_i32_9 : i32
    scf.if %11 {
      %c0_10 = arith.constant 0 : index
      %c0_11 = arith.constant 0 : index
      %12 = vector.load %arg5[%c0_10, %c0_11] : memref<16x256xf32, #tpu.memory_space<vmem>>, vector<16x256xf32>
      %cst_12 = arith.constant dense<0.000000e+00> : vector<256xf32>
      %13 = vector.multi_reduction <add>, %12, %cst_12 [0] : vector<16x256xf32> to vector<256xf32>
      %14 = vector.shape_cast %13 : vector<256xf32> to vector<1x256xf32>
      %cst_13 = arith.constant 5.000000e-01 : f32
      %15 = vector.broadcast %cst_13 : f32 to vector<1x256xf32>
      %16 = arith.mulf %14, %15 : vector<1x256xf32>
      %17 = arith.mulf %12, %12 : vector<16x256xf32>
      %cst_14 = arith.constant dense<0.000000e+00> : vector<256xf32>
      %18 = vector.multi_reduction <add>, %17, %cst_14 [0] : vector<16x256xf32> to vector<256xf32>
      %19 = vector.shape_cast %18 : vector<256xf32> to vector<1x256xf32>
      %cst_15 = arith.constant 5.000000e-01 : f32
      %20 = vector.broadcast %cst_15 : f32 to vector<1x256xf32>
      %21 = arith.mulf %19, %20 : vector<1x256xf32>
      %22 = arith.mulf %16, %16 : vector<1x256xf32>
      %23 = arith.subf %21, %22 : vector<1x256xf32>
      %c0_16 = arith.constant 0 : index
      %c0_17 = arith.constant 0 : index
      %24 = vector.load %arg3[%c0_16, %c0_17] : memref<1x256xf32, #tpu.memory_space<vmem>>, vector<1x256xf32>
      %cst_18 = arith.constant 9.99999974E-6 : f32
      %25 = vector.broadcast %cst_18 : f32 to vector<1x256xf32>
      %26 = arith.addf %23, %25 : vector<1x256xf32>
      %27 = math.rsqrt %26 : vector<1x256xf32>
      %28 = arith.mulf %24, %27 : vector<1x256xf32>
      %c0_19 = arith.constant 0 : index
      %c0_20 = arith.constant 0 : index
      %29 = vector.load %arg4[%c0_19, %c0_20] : memref<1x256xf32, #tpu.memory_space<vmem>>, vector<1x256xf32>
      %30 = arith.mulf %16, %28 : vector<1x256xf32>
      %31 = arith.subf %29, %30 : vector<1x256xf32>
      %32 = vector.broadcast %28 : vector<1x256xf32> to vector<16x256xf32>
      %33 = arith.mulf %12, %32 : vector<16x256xf32>
      %34 = vector.broadcast %31 : vector<1x256xf32> to vector<16x256xf32>
      %35 = arith.addf %33, %34 : vector<16x256xf32>
      %cst_21 = arith.constant 0.000000e+00 : f32
      %36 = vector.broadcast %cst_21 : f32 to vector<16x256xf32>
      %37 = arith.maximumf %35, %36 : vector<16x256xf32>
      %c0_22 = arith.constant 0 : index
      %c0_23 = arith.constant 0 : index
      %38 = vector.load %arg5[%c0_22, %c0_23] : memref<16x256xf32, #tpu.memory_space<vmem>>, vector<16x256xf32>
      tpu.vector_store %arg5[%c0_22, %c0_23], %37 {strides = array<i32>} : memref<16x256xf32, #tpu.memory_space<vmem>>, vector<16x256xf32>,
    } else {
    }
    return
  }
  func.func @transform_0(%arg0: i32) -> (i32, i32) {
    %c0_i32 = arith.constant 0 : i32
    %c0_i32_0 = arith.constant 0 : i32
    return %c0_i32, %arg0 : i32, i32
  }
  func.func @transform_1(%arg0: i32) -> (i32, i32) {
    %c0_i32 = arith.constant 0 : i32
    %c0_i32_0 = arith.constant 0 : i32
    return %arg0, %c0_i32 : i32, i32
  }
  func.func @transform_2(%arg0: i32) -> (i32, i32) {
    %c0_i32 = arith.constant 0 : i32
    %c0_i32_0 = arith.constant 0 : i32
    %c0_i32_1 = arith.constant 0 : i32
    return %c0_i32, %c0_i32_0 : i32, i32
  }
  func.func @transform_3(%arg0: i32) -> (i32, i32) {
    %c0_i32 = arith.constant 0 : i32
    %c0_i32_0 = arith.constant 0 : i32
    %c0_i32_1 = arith.constant 0 : i32
    return %c0_i32, %c0_i32_0 : i32, i32
  }
  func.func @transform_4(%arg0: i32) -> (i32, i32) {
    %c0_i32 = arith.constant 0 : i32
    %c0_i32_0 = arith.constant 0 : i32
    %c0_i32_1 = arith.constant 0 : i32
    return %c0_i32, %c0_i32_0 : i32, i32
  }
}

module attributes {stable_mosaic.version = 11 : i64} {
  func.func @_matmul_kernel(%arg0: i32, %arg1: i32, %arg2: memref<16x128xbf16, #tpu.memory_space<vmem>>, %arg3: memref<128x896xbf16, #tpu.memory_space<vmem>>, %arg4: memref<16x896xf32, #tpu.memory_space<vmem>>) attributes {dimension_semantics = [#tpu.dimension_semantics<parallel>, #tpu.dimension_semantics<arbitrary>], iteration_bounds = array<i64: 1, 1>, scalar_prefetch = 0 : i64, scratch_operands = 0 : i64, tpu.core_type = #tpu.core_type<tc>, window_params = [{transform_indices = @transform_0, window_bounds = array<i64: 16, 128>}, {transform_indices = @transform_1, window_bounds = array<i64: 128, 896>}, {transform_indices = @transform_2, window_bounds = array<i64: 16, 896>}]} {
    %c0_i32 = arith.constant 0 : i32
    %0 = arith.cmpi eq, %arg1, %c0_i32 : i32
    %1 = arith.extui %0 : i1 to i32
    %c0_i32_0 = arith.constant 0 : i32
    %2 = arith.cmpi ne, %1, %c0_i32_0 : i32
    scf.if %2 {
      %cst_8 = arith.constant 0.000000e+00 : f32
      %9 = vector.broadcast %cst_8 : f32 to vector<16x896xf32>
      %c0_9 = arith.constant 0 : index
      %c0_10 = arith.constant 0 : index
      %10 = vector.load %arg4[%c0_9, %c0_10] : memref<16x896xf32, #tpu.memory_space<vmem>>, vector<16x896xf32>
      tpu.vector_store %arg4[%c0_9, %c0_10], %9 {strides = array<i32>} : memref<16x896xf32, #tpu.memory_space<vmem>>, vector<16x896xf32>,
    } else {
    }
    %c0 = arith.constant 0 : index
    %c0_1 = arith.constant 0 : index
    %3 = vector.load %arg4[%c0, %c0_1] : memref<16x896xf32, #tpu.memory_space<vmem>>, vector<16x896xf32>
    %c0_2 = arith.constant 0 : index
    %c0_3 = arith.constant 0 : index
    %4 = vector.load %arg2[%c0_2, %c0_3] : memref<16x128xbf16, #tpu.memory_space<vmem>>, vector<16x128xbf16>
    %c0_4 = arith.constant 0 : index
    %c0_5 = arith.constant 0 : index
    %5 = vector.load %arg3[%c0_4, %c0_5] : memref<128x896xbf16, #tpu.memory_space<vmem>>, vector<128x896xbf16>
    %cst = arith.constant dense<0.000000e+00> : vector<16x896xf32>
    %6 = tpu.matmul %4, %5, %cst {dimension_numbers = #tpu.dot_dimension_numbers<[1], [0], [0], [1], [0, 0, 1, 1], [], []>} : vector<16x128xbf16>, vector<128x896xbf16>, vector<16x896xf32> -> vector<16x896xf32>
    %7 = arith.addf %3, %6 : vector<16x896xf32>
    %c0_6 = arith.constant 0 : index
    %c0_7 = arith.constant 0 : index
    %8 = vector.load %arg4[%c0_6, %c0_7] : memref<16x896xf32, #tpu.memory_space<vmem>>, vector<16x896xf32>
    tpu.vector_store %arg4[%c0_6, %c0_7], %7 {strides = array<i32>} : memref<16x896xf32, #tpu.memory_space<vmem>>, vector<16x896xf32>,
    return
  }
  func.func @transform_0(%arg0: i32, %arg1: i32) -> (i32, i32) {
    %c0_i32 = arith.constant 0 : i32
    return %arg0, %arg1 : i32, i32
  }
  func.func @transform_1(%arg0: i32, %arg1: i32) -> (i32, i32) {
    %c0_i32 = arith.constant 0 : i32
    %c0_i32_0 = arith.constant 0 : i32
    return %arg1, %c0_i32 : i32, i32
  }
  func.func @transform_2(%arg0: i32, %arg1: i32) -> (i32, i32) {
    %c0_i32 = arith.constant 0 : i32
    %c0_i32_0 = arith.constant 0 : i32
    return %arg0, %c0_i32 : i32, i32
  }
}

module attributes {stable_mosaic.version = 11 : i64} {
  func.func @_matmul_kernel(%arg0: i32, %arg1: i32, %arg2: memref<32x128xbf16, #tpu.memory_space<vmem>>, %arg3: memref<128x512xbf16, #tpu.memory_space<vmem>>, %arg4: memref<32x512xf32, #tpu.memory_space<vmem>>) attributes {dimension_semantics = [#tpu.dimension_semantics<parallel>, #tpu.dimension_semantics<arbitrary>], iteration_bounds = array<i64: 1, 1>, scalar_prefetch = 0 : i64, scratch_operands = 0 : i64, tpu.core_type = #tpu.core_type<tc>, window_params = [{transform_indices = @transform_0, window_bounds = array<i64: 32, 128>}, {transform_indices = @transform_1, window_bounds = array<i64: 128, 512>}, {transform_indices = @transform_2, window_bounds = array<i64: 32, 512>}]} {
    %c0_i32 = arith.constant 0 : i32
    %0 = arith.cmpi eq, %arg1, %c0_i32 : i32
    %1 = arith.extui %0 : i1 to i32
    %c0_i32_0 = arith.constant 0 : i32
    %2 = arith.cmpi ne, %1, %c0_i32_0 : i32
    scf.if %2 {
      %cst_8 = arith.constant 0.000000e+00 : f32
      %9 = vector.broadcast %cst_8 : f32 to vector<32x512xf32>
      %c0_9 = arith.constant 0 : index
      %c0_10 = arith.constant 0 : index
      %10 = vector.load %arg4[%c0_9, %c0_10] : memref<32x512xf32, #tpu.memory_space<vmem>>, vector<32x512xf32>
      tpu.vector_store %arg4[%c0_9, %c0_10], %9 {strides = array<i32>} : memref<32x512xf32, #tpu.memory_space<vmem>>, vector<32x512xf32>,
    } else {
    }
    %c0 = arith.constant 0 : index
    %c0_1 = arith.constant 0 : index
    %3 = vector.load %arg4[%c0, %c0_1] : memref<32x512xf32, #tpu.memory_space<vmem>>, vector<32x512xf32>
    %c0_2 = arith.constant 0 : index
    %c0_3 = arith.constant 0 : index
    %4 = vector.load %arg2[%c0_2, %c0_3] : memref<32x128xbf16, #tpu.memory_space<vmem>>, vector<32x128xbf16>
    %c0_4 = arith.constant 0 : index
    %c0_5 = arith.constant 0 : index
    %5 = vector.load %arg3[%c0_4, %c0_5] : memref<128x512xbf16, #tpu.memory_space<vmem>>, vector<128x512xbf16>
    %cst = arith.constant dense<0.000000e+00> : vector<32x512xf32>
    %6 = tpu.matmul %4, %5, %cst {dimension_numbers = #tpu.dot_dimension_numbers<[1], [0], [0], [1], [0, 0, 1, 1], [], []>} : vector<32x128xbf16>, vector<128x512xbf16>, vector<32x512xf32> -> vector<32x512xf32>
    %7 = arith.addf %3, %6 : vector<32x512xf32>
    %c0_6 = arith.constant 0 : index
    %c0_7 = arith.constant 0 : index
    %8 = vector.load %arg4[%c0_6, %c0_7] : memref<32x512xf32, #tpu.memory_space<vmem>>, vector<32x512xf32>
    tpu.vector_store %arg4[%c0_6, %c0_7], %7 {strides = array<i32>} : memref<32x512xf32, #tpu.memory_space<vmem>>, vector<32x512xf32>,
    return
  }
  func.func @transform_0(%arg0: i32, %arg1: i32) -> (i32, i32) {
    %c0_i32 = arith.constant 0 : i32
    return %arg0, %arg1 : i32, i32
  }
  func.func @transform_1(%arg0: i32, %arg1: i32) -> (i32, i32) {
    %c0_i32 = arith.constant 0 : i32
    %c0_i32_0 = arith.constant 0 : i32
    return %arg1, %c0_i32 : i32, i32
  }
  func.func @transform_2(%arg0: i32, %arg1: i32) -> (i32, i32) {
    %c0_i32 = arith.constant 0 : i32
    %c0_i32_0 = arith.constant 0 : i32
    return %arg0, %c0_i32 : i32, i32
  }
}

module attributes {stable_mosaic.version = 11 : i64} {
  func.func @_bn_relu_kernel(%arg0: i32, %arg1: i32, %arg2: memref<32x128xf32, #tpu.memory_space<vmem>>, %arg3: memref<1x128xf32, #tpu.memory_space<vmem>>, %arg4: memref<1x128xf32, #tpu.memory_space<vmem>>, %arg5: memref<32x128xbf16, #tpu.memory_space<vmem>>, %arg6: memref<1x128xf32, #tpu.memory_space<vmem>>, %arg7: memref<1x128xf32, #tpu.memory_space<vmem>>) attributes {dimension_semantics = [#tpu.dimension_semantics<arbitrary>, #tpu.dimension_semantics<arbitrary>], iteration_bounds = array<i64: 2, 1>, scalar_prefetch = 0 : i64, scratch_operands = 2 : i64, tpu.core_type = #tpu.core_type<tc>, window_params = [{transform_indices = @transform_0, window_bounds = array<i64: 32, 128>}, {pipeline_mode = #tpu.pipeline_mode<synchronous>, transform_indices = @transform_1, window_bounds = array<i64: 1, 128>}, {pipeline_mode = #tpu.pipeline_mode<synchronous>, transform_indices = @transform_2, window_bounds = array<i64: 1, 128>}, {transform_indices = @transform_3, window_bounds = array<i64: 32, 128>}]} {
    %c0_i32 = arith.constant 0 : i32
    %0 = arith.cmpi eq, %arg0, %c0_i32 : i32
    %c0_i32_0 = arith.constant 0 : i32
    %1 = arith.cmpi eq, %arg1, %c0_i32_0 : i32
    %2 = arith.andi %0, %1 : i1
    %3 = arith.extui %2 : i1 to i32
    %c0_i32_1 = arith.constant 0 : i32
    %4 = arith.cmpi ne, %3, %c0_i32_1 : i32
    scf.if %4 {
      %cst = arith.constant 0.000000e+00 : f32
      %16 = vector.broadcast %cst : f32 to vector<1x128xf32>
      %c0 = arith.constant 0 : index
      %c0_8 = arith.constant 0 : index
      %17 = vector.load %arg6[%c0, %c0_8] : memref<1x128xf32, #tpu.memory_space<vmem>>, vector<1x128xf32>
      tpu.vector_store %arg6[%c0, %c0_8], %16 {strides = array<i32>} : memref<1x128xf32, #tpu.memory_space<vmem>>, vector<1x128xf32>,
      %cst_9 = arith.constant 0.000000e+00 : f32
      %18 = vector.broadcast %cst_9 : f32 to vector<1x128xf32>
      %c0_10 = arith.constant 0 : index
      %c0_11 = arith.constant 0 : index
      %19 = vector.load %arg7[%c0_10, %c0_11] : memref<1x128xf32, #tpu.memory_space<vmem>>, vector<1x128xf32>
      tpu.vector_store %arg7[%c0_10, %c0_11], %18 {strides = array<i32>} : memref<1x128xf32, #tpu.memory_space<vmem>>, vector<1x128xf32>,
    } else {
    }
    %c0_i32_2 = arith.constant 0 : i32
    %5 = arith.cmpi eq, %arg0, %c0_i32_2 : i32
    %6 = arith.extui %5 : i1 to i32
    %c0_i32_3 = arith.constant 0 : i32
    %7 = arith.cmpi ne, %6, %c0_i32_3 : i32
    scf.if %7 {
      %c0 = arith.constant 0 : index
      %c0_8 = arith.constant 0 : index
      %16 = vector.load %arg2[%c0, %c0_8] : memref<32x128xf32, #tpu.memory_space<vmem>>, vector<32x128xf32>
      %c0_9 = arith.constant 0 : index
      %c0_10 = arith.constant 0 : index
      %17 = vector.load %arg6[%c0_9, %c0_10] : memref<1x128xf32, #tpu.memory_space<vmem>>, vector<1x128xf32>
      %cst = arith.constant dense<0.000000e+00> : vector<128xf32>
      %18 = vector.multi_reduction <add>, %16, %cst [0] : vector<32x128xf32> to vector<128xf32>
      %19 = vector.shape_cast %18 : vector<128xf32> to vector<1x128xf32>
      %20 = arith.addf %17, %19 : vector<1x128xf32>
      %c0_11 = arith.constant 0 : index
      %c0_12 = arith.constant 0 : index
      %21 = vector.load %arg6[%c0_11, %c0_12] : memref<1x128xf32, #tpu.memory_space<vmem>>, vector<1x128xf32>
      tpu.vector_store %arg6[%c0_11, %c0_12], %20 {strides = array<i32>} : memref<1x128xf32, #tpu.memory_space<vmem>>, vector<1x128xf32>,
      %c0_13 = arith.constant 0 : index
      %c0_14 = arith.constant 0 : index
      %22 = vector.load %arg7[%c0_13, %c0_14] : memref<1x128xf32, #tpu.memory_space<vmem>>, vector<1x128xf32>
      %23 = arith.mulf %16, %16 : vector<32x128xf32>
      %cst_15 = arith.constant dense<0.000000e+00> : vector<128xf32>
      %24 = vector.multi_reduction <add>, %23, %cst_15 [0] : vector<32x128xf32> to vector<128xf32>
      %25 = vector.shape_cast %24 : vector<128xf32> to vector<1x128xf32>
      %26 = arith.addf %22, %25 : vector<1x128xf32>
      %c0_16 = arith.constant 0 : index
      %c0_17 = arith.constant 0 : index
      %27 = vector.load %arg7[%c0_16, %c0_17] : memref<1x128xf32, #tpu.memory_space<vmem>>, vector<1x128xf32>
      tpu.vector_store %arg7[%c0_16, %c0_17], %26 {strides = array<i32>} : memref<1x128xf32, #tpu.memory_space<vmem>>, vector<1x128xf32>,
      %28 = arith.truncf %16 : vector<32x128xf32> to vector<32x128xbf16>
      %c0_18 = arith.constant 0 : index
      %c0_19 = arith.constant 0 : index
      %29 = vector.load %arg5[%c0_18, %c0_19] : memref<32x128xbf16, #tpu.memory_space<vmem>>, vector<32x128xbf16>
      tpu.vector_store %arg5[%c0_18, %c0_19], %28 {strides = array<i32>} : memref<32x128xbf16, #tpu.memory_space<vmem>>, vector<32x128xbf16>,
    } else {
    }
    %c1_i32 = arith.constant 1 : i32
    %8 = arith.cmpi eq, %arg0, %c1_i32 : i32
    %c0_i32_4 = arith.constant 0 : i32
    %9 = arith.cmpi eq, %arg1, %c0_i32_4 : i32
    %10 = arith.andi %8, %9 : i1
    %11 = arith.extui %10 : i1 to i32
    %c0_i32_5 = arith.constant 0 : i32
    %12 = arith.cmpi ne, %11, %c0_i32_5 : i32
    scf.if %12 {
      %c0 = arith.constant 0 : index
      %c0_8 = arith.constant 0 : index
      %16 = vector.load %arg6[%c0, %c0_8] : memref<1x128xf32, #tpu.memory_space<vmem>>, vector<1x128xf32>
      %cst = arith.constant 3.125000e-02 : f32
      %17 = vector.broadcast %cst : f32 to vector<1x128xf32>
      %18 = arith.mulf %16, %17 : vector<1x128xf32>
      %c0_9 = arith.constant 0 : index
      %c0_10 = arith.constant 0 : index
      %19 = vector.load %arg7[%c0_9, %c0_10] : memref<1x128xf32, #tpu.memory_space<vmem>>, vector<1x128xf32>
      %cst_11 = arith.constant 3.125000e-02 : f32
      %20 = vector.broadcast %cst_11 : f32 to vector<1x128xf32>
      %21 = arith.mulf %19, %20 : vector<1x128xf32>
      %22 = arith.mulf %18, %18 : vector<1x128xf32>
      %23 = arith.subf %21, %22 : vector<1x128xf32>
      %c0_12 = arith.constant 0 : index
      %c0_13 = arith.constant 0 : index
      %24 = vector.load %arg3[%c0_12, %c0_13] : memref<1x128xf32, #tpu.memory_space<vmem>>, vector<1x128xf32>
      %cst_14 = arith.constant 9.99999974E-6 : f32
      %25 = vector.broadcast %cst_14 : f32 to vector<1x128xf32>
      %26 = arith.addf %23, %25 : vector<1x128xf32>
      %27 = math.rsqrt %26 : vector<1x128xf32>
      %28 = arith.mulf %24, %27 : vector<1x128xf32>
      %c0_15 = arith.constant 0 : index
      %c0_16 = arith.constant 0 : index
      %29 = vector.load %arg6[%c0_15, %c0_16] : memref<1x128xf32, #tpu.memory_space<vmem>>, vector<1x128xf32>
      tpu.vector_store %arg6[%c0_15, %c0_16], %28 {strides = array<i32>} : memref<1x128xf32, #tpu.memory_space<vmem>>, vector<1x128xf32>,
      %c0_17 = arith.constant 0 : index
      %c0_18 = arith.constant 0 : index
      %30 = vector.load %arg4[%c0_17, %c0_18] : memref<1x128xf32, #tpu.memory_space<vmem>>, vector<1x128xf32>
      %31 = arith.mulf %18, %28 : vector<1x128xf32>
      %32 = arith.subf %30, %31 : vector<1x128xf32>
      %c0_19 = arith.constant 0 : index
      %c0_20 = arith.constant 0 : index
      %33 = vector.load %arg7[%c0_19, %c0_20] : memref<1x128xf32, #tpu.memory_space<vmem>>, vector<1x128xf32>
      tpu.vector_store %arg7[%c0_19, %c0_20], %32 {strides = array<i32>} : memref<1x128xf32, #tpu.memory_space<vmem>>, vector<1x128xf32>,
    } else {
    }
    %c1_i32_6 = arith.constant 1 : i32
    %13 = arith.cmpi eq, %arg0, %c1_i32_6 : i32
    %14 = arith.extui %13 : i1 to i32
    %c0_i32_7 = arith.constant 0 : i32
    %15 = arith.cmpi ne, %14, %c0_i32_7 : i32
    scf.if %15 {
      %c0 = arith.constant 0 : index
      %c0_8 = arith.constant 0 : index
      %16 = vector.load %arg2[%c0, %c0_8] : memref<32x128xf32, #tpu.memory_space<vmem>>, vector<32x128xf32>
      %c0_9 = arith.constant 0 : index
      %c0_10 = arith.constant 0 : index
      %17 = vector.load %arg6[%c0_9, %c0_10] : memref<1x128xf32, #tpu.memory_space<vmem>>, vector<1x128xf32>
      %18 = vector.broadcast %17 : vector<1x128xf32> to vector<32x128xf32>
      %19 = arith.mulf %16, %18 : vector<32x128xf32>
      %c0_11 = arith.constant 0 : index
      %c0_12 = arith.constant 0 : index
      %20 = vector.load %arg7[%c0_11, %c0_12] : memref<1x128xf32, #tpu.memory_space<vmem>>, vector<1x128xf32>
      %21 = vector.broadcast %20 : vector<1x128xf32> to vector<32x128xf32>
      %22 = arith.addf %19, %21 : vector<32x128xf32>
      %cst = arith.constant 0.000000e+00 : f32
      %23 = vector.broadcast %cst : f32 to vector<32x128xf32>
      %24 = arith.maximumf %22, %23 : vector<32x128xf32>
      %25 = arith.truncf %24 : vector<32x128xf32> to vector<32x128xbf16>
      %c0_13 = arith.constant 0 : index
      %c0_14 = arith.constant 0 : index
      %26 = vector.load %arg5[%c0_13, %c0_14] : memref<32x128xbf16, #tpu.memory_space<vmem>>, vector<32x128xbf16>
      tpu.vector_store %arg5[%c0_13, %c0_14], %25 {strides = array<i32>} : memref<32x128xbf16, #tpu.memory_space<vmem>>, vector<32x128xbf16>,
    } else {
    }
    return
  }
  func.func @transform_0(%arg0: i32, %arg1: i32) -> (i32, i32) {
    %c0_i32 = arith.constant 0 : i32
    %c0_i32_0 = arith.constant 0 : i32
    return %arg1, %c0_i32 : i32, i32
  }
  func.func @transform_1(%arg0: i32, %arg1: i32) -> (i32, i32) {
    %c0_i32 = arith.constant 0 : i32
    %c0_i32_0 = arith.constant 0 : i32
    %c0_i32_1 = arith.constant 0 : i32
    return %c0_i32, %c0_i32_0 : i32, i32
  }
  func.func @transform_2(%arg0: i32, %arg1: i32) -> (i32, i32) {
    %c0_i32 = arith.constant 0 : i32
    %c0_i32_0 = arith.constant 0 : i32
    %c0_i32_1 = arith.constant 0 : i32
    return %c0_i32, %c0_i32_0 : i32, i32
  }
  func.func @transform_3(%arg0: i32, %arg1: i32) -> (i32, i32) {
    %c0_i32 = arith.constant 0 : i32
    %c0_i32_0 = arith.constant 0 : i32
    return %arg1, %c0_i32 : i32, i32
  }
}

module attributes {stable_mosaic.version = 11 : i64} {
  func.func @_bn_relu_kernel(%arg0: i32, %arg1: i32, %arg2: memref<128x128xf32, #tpu.memory_space<vmem>>, %arg3: memref<1x128xf32, #tpu.memory_space<vmem>>, %arg4: memref<1x128xf32, #tpu.memory_space<vmem>>, %arg5: memref<128x128xbf16, #tpu.memory_space<vmem>>, %arg6: memref<1x128xf32, #tpu.memory_space<vmem>>, %arg7: memref<1x128xf32, #tpu.memory_space<vmem>>) attributes {dimension_semantics = [#tpu.dimension_semantics<arbitrary>, #tpu.dimension_semantics<arbitrary>], iteration_bounds = array<i64: 2, 1>, scalar_prefetch = 0 : i64, scratch_operands = 2 : i64, tpu.core_type = #tpu.core_type<tc>, window_params = [{transform_indices = @transform_0, window_bounds = array<i64: 128, 128>}, {pipeline_mode = #tpu.pipeline_mode<synchronous>, transform_indices = @transform_1, window_bounds = array<i64: 1, 128>}, {pipeline_mode = #tpu.pipeline_mode<synchronous>, transform_indices = @transform_2, window_bounds = array<i64: 1, 128>}, {transform_indices = @transform_3, window_bounds = array<i64: 128, 128>}]} {
    %c0_i32 = arith.constant 0 : i32
    %0 = arith.cmpi eq, %arg0, %c0_i32 : i32
    %c0_i32_0 = arith.constant 0 : i32
    %1 = arith.cmpi eq, %arg1, %c0_i32_0 : i32
    %2 = arith.andi %0, %1 : i1
    %3 = arith.extui %2 : i1 to i32
    %c0_i32_1 = arith.constant 0 : i32
    %4 = arith.cmpi ne, %3, %c0_i32_1 : i32
    scf.if %4 {
      %cst = arith.constant 0.000000e+00 : f32
      %16 = vector.broadcast %cst : f32 to vector<1x128xf32>
      %c0 = arith.constant 0 : index
      %c0_8 = arith.constant 0 : index
      %17 = vector.load %arg6[%c0, %c0_8] : memref<1x128xf32, #tpu.memory_space<vmem>>, vector<1x128xf32>
      tpu.vector_store %arg6[%c0, %c0_8], %16 {strides = array<i32>} : memref<1x128xf32, #tpu.memory_space<vmem>>, vector<1x128xf32>,
      %cst_9 = arith.constant 0.000000e+00 : f32
      %18 = vector.broadcast %cst_9 : f32 to vector<1x128xf32>
      %c0_10 = arith.constant 0 : index
      %c0_11 = arith.constant 0 : index
      %19 = vector.load %arg7[%c0_10, %c0_11] : memref<1x128xf32, #tpu.memory_space<vmem>>, vector<1x128xf32>
      tpu.vector_store %arg7[%c0_10, %c0_11], %18 {strides = array<i32>} : memref<1x128xf32, #tpu.memory_space<vmem>>, vector<1x128xf32>,
    } else {
    }
    %c0_i32_2 = arith.constant 0 : i32
    %5 = arith.cmpi eq, %arg0, %c0_i32_2 : i32
    %6 = arith.extui %5 : i1 to i32
    %c0_i32_3 = arith.constant 0 : i32
    %7 = arith.cmpi ne, %6, %c0_i32_3 : i32
    scf.if %7 {
      %c0 = arith.constant 0 : index
      %c0_8 = arith.constant 0 : index
      %16 = vector.load %arg2[%c0, %c0_8] : memref<128x128xf32, #tpu.memory_space<vmem>>, vector<128x128xf32>
      %c0_9 = arith.constant 0 : index
      %c0_10 = arith.constant 0 : index
      %17 = vector.load %arg6[%c0_9, %c0_10] : memref<1x128xf32, #tpu.memory_space<vmem>>, vector<1x128xf32>
      %cst = arith.constant dense<0.000000e+00> : vector<128xf32>
      %18 = vector.multi_reduction <add>, %16, %cst [0] : vector<128x128xf32> to vector<128xf32>
      %19 = vector.shape_cast %18 : vector<128xf32> to vector<1x128xf32>
      %20 = arith.addf %17, %19 : vector<1x128xf32>
      %c0_11 = arith.constant 0 : index
      %c0_12 = arith.constant 0 : index
      %21 = vector.load %arg6[%c0_11, %c0_12] : memref<1x128xf32, #tpu.memory_space<vmem>>, vector<1x128xf32>
      tpu.vector_store %arg6[%c0_11, %c0_12], %20 {strides = array<i32>} : memref<1x128xf32, #tpu.memory_space<vmem>>, vector<1x128xf32>,
      %c0_13 = arith.constant 0 : index
      %c0_14 = arith.constant 0 : index
      %22 = vector.load %arg7[%c0_13, %c0_14] : memref<1x128xf32, #tpu.memory_space<vmem>>, vector<1x128xf32>
      %23 = arith.mulf %16, %16 : vector<128x128xf32>
      %cst_15 = arith.constant dense<0.000000e+00> : vector<128xf32>
      %24 = vector.multi_reduction <add>, %23, %cst_15 [0] : vector<128x128xf32> to vector<128xf32>
      %25 = vector.shape_cast %24 : vector<128xf32> to vector<1x128xf32>
      %26 = arith.addf %22, %25 : vector<1x128xf32>
      %c0_16 = arith.constant 0 : index
      %c0_17 = arith.constant 0 : index
      %27 = vector.load %arg7[%c0_16, %c0_17] : memref<1x128xf32, #tpu.memory_space<vmem>>, vector<1x128xf32>
      tpu.vector_store %arg7[%c0_16, %c0_17], %26 {strides = array<i32>} : memref<1x128xf32, #tpu.memory_space<vmem>>, vector<1x128xf32>,
      %28 = arith.truncf %16 : vector<128x128xf32> to vector<128x128xbf16>
      %c0_18 = arith.constant 0 : index
      %c0_19 = arith.constant 0 : index
      %29 = vector.load %arg5[%c0_18, %c0_19] : memref<128x128xbf16, #tpu.memory_space<vmem>>, vector<128x128xbf16>
      tpu.vector_store %arg5[%c0_18, %c0_19], %28 {strides = array<i32>} : memref<128x128xbf16, #tpu.memory_space<vmem>>, vector<128x128xbf16>,
    } else {
    }
    %c1_i32 = arith.constant 1 : i32
    %8 = arith.cmpi eq, %arg0, %c1_i32 : i32
    %c0_i32_4 = arith.constant 0 : i32
    %9 = arith.cmpi eq, %arg1, %c0_i32_4 : i32
    %10 = arith.andi %8, %9 : i1
    %11 = arith.extui %10 : i1 to i32
    %c0_i32_5 = arith.constant 0 : i32
    %12 = arith.cmpi ne, %11, %c0_i32_5 : i32
    scf.if %12 {
      %c0 = arith.constant 0 : index
      %c0_8 = arith.constant 0 : index
      %16 = vector.load %arg6[%c0, %c0_8] : memref<1x128xf32, #tpu.memory_space<vmem>>, vector<1x128xf32>
      %cst = arith.constant 7.812500e-03 : f32
      %17 = vector.broadcast %cst : f32 to vector<1x128xf32>
      %18 = arith.mulf %16, %17 : vector<1x128xf32>
      %c0_9 = arith.constant 0 : index
      %c0_10 = arith.constant 0 : index
      %19 = vector.load %arg7[%c0_9, %c0_10] : memref<1x128xf32, #tpu.memory_space<vmem>>, vector<1x128xf32>
      %cst_11 = arith.constant 7.812500e-03 : f32
      %20 = vector.broadcast %cst_11 : f32 to vector<1x128xf32>
      %21 = arith.mulf %19, %20 : vector<1x128xf32>
      %22 = arith.mulf %18, %18 : vector<1x128xf32>
      %23 = arith.subf %21, %22 : vector<1x128xf32>
      %c0_12 = arith.constant 0 : index
      %c0_13 = arith.constant 0 : index
      %24 = vector.load %arg3[%c0_12, %c0_13] : memref<1x128xf32, #tpu.memory_space<vmem>>, vector<1x128xf32>
      %cst_14 = arith.constant 9.99999974E-6 : f32
      %25 = vector.broadcast %cst_14 : f32 to vector<1x128xf32>
      %26 = arith.addf %23, %25 : vector<1x128xf32>
      %27 = math.rsqrt %26 : vector<1x128xf32>
      %28 = arith.mulf %24, %27 : vector<1x128xf32>
      %c0_15 = arith.constant 0 : index
      %c0_16 = arith.constant 0 : index
      %29 = vector.load %arg6[%c0_15, %c0_16] : memref<1x128xf32, #tpu.memory_space<vmem>>, vector<1x128xf32>
      tpu.vector_store %arg6[%c0_15, %c0_16], %28 {strides = array<i32>} : memref<1x128xf32, #tpu.memory_space<vmem>>, vector<1x128xf32>,
      %c0_17 = arith.constant 0 : index
      %c0_18 = arith.constant 0 : index
      %30 = vector.load %arg4[%c0_17, %c0_18] : memref<1x128xf32, #tpu.memory_space<vmem>>, vector<1x128xf32>
      %31 = arith.mulf %18, %28 : vector<1x128xf32>
      %32 = arith.subf %30, %31 : vector<1x128xf32>
      %c0_19 = arith.constant 0 : index
      %c0_20 = arith.constant 0 : index
      %33 = vector.load %arg7[%c0_19, %c0_20] : memref<1x128xf32, #tpu.memory_space<vmem>>, vector<1x128xf32>
      tpu.vector_store %arg7[%c0_19, %c0_20], %32 {strides = array<i32>} : memref<1x128xf32, #tpu.memory_space<vmem>>, vector<1x128xf32>,
    } else {
    }
    %c1_i32_6 = arith.constant 1 : i32
    %13 = arith.cmpi eq, %arg0, %c1_i32_6 : i32
    %14 = arith.extui %13 : i1 to i32
    %c0_i32_7 = arith.constant 0 : i32
    %15 = arith.cmpi ne, %14, %c0_i32_7 : i32
    scf.if %15 {
      %c0 = arith.constant 0 : index
      %c0_8 = arith.constant 0 : index
      %16 = vector.load %arg2[%c0, %c0_8] : memref<128x128xf32, #tpu.memory_space<vmem>>, vector<128x128xf32>
      %c0_9 = arith.constant 0 : index
      %c0_10 = arith.constant 0 : index
      %17 = vector.load %arg6[%c0_9, %c0_10] : memref<1x128xf32, #tpu.memory_space<vmem>>, vector<1x128xf32>
      %18 = vector.broadcast %17 : vector<1x128xf32> to vector<128x128xf32>
      %19 = arith.mulf %16, %18 : vector<128x128xf32>
      %c0_11 = arith.constant 0 : index
      %c0_12 = arith.constant 0 : index
      %20 = vector.load %arg7[%c0_11, %c0_12] : memref<1x128xf32, #tpu.memory_space<vmem>>, vector<1x128xf32>
      %21 = vector.broadcast %20 : vector<1x128xf32> to vector<128x128xf32>
      %22 = arith.addf %19, %21 : vector<128x128xf32>
      %cst = arith.constant 0.000000e+00 : f32
      %23 = vector.broadcast %cst : f32 to vector<128x128xf32>
      %24 = arith.maximumf %22, %23 : vector<128x128xf32>
      %25 = arith.truncf %24 : vector<128x128xf32> to vector<128x128xbf16>
      %c0_13 = arith.constant 0 : index
      %c0_14 = arith.constant 0 : index
      %26 = vector.load %arg5[%c0_13, %c0_14] : memref<128x128xbf16, #tpu.memory_space<vmem>>, vector<128x128xbf16>
      tpu.vector_store %arg5[%c0_13, %c0_14], %25 {strides = array<i32>} : memref<128x128xbf16, #tpu.memory_space<vmem>>, vector<128x128xbf16>,
    } else {
    }
    return
  }
  func.func @transform_0(%arg0: i32, %arg1: i32) -> (i32, i32) {
    %c0_i32 = arith.constant 0 : i32
    %c0_i32_0 = arith.constant 0 : i32
    return %arg1, %c0_i32 : i32, i32
  }
  func.func @transform_1(%arg0: i32, %arg1: i32) -> (i32, i32) {
    %c0_i32 = arith.constant 0 : i32
    %c0_i32_0 = arith.constant 0 : i32
    %c0_i32_1 = arith.constant 0 : i32
    return %c0_i32, %c0_i32_0 : i32, i32
  }
  func.func @transform_2(%arg0: i32, %arg1: i32) -> (i32, i32) {
    %c0_i32 = arith.constant 0 : i32
    %c0_i32_0 = arith.constant 0 : i32
    %c0_i32_1 = arith.constant 0 : i32
    return %c0_i32, %c0_i32_0 : i32, i32
  }
  func.func @transform_3(%arg0: i32, %arg1: i32) -> (i32, i32) {
    %c0_i32 = arith.constant 0 : i32
    %c0_i32_0 = arith.constant 0 : i32
    return %arg1, %c0_i32 : i32, i32
  }
}

module attributes {stable_mosaic.version = 11 : i64} {
  func.func @_matmul_kernel(%arg0: i32, %arg1: i32, %arg2: memref<128x128xbf16, #tpu.memory_space<vmem>>, %arg3: memref<128x256xbf16, #tpu.memory_space<vmem>>, %arg4: memref<128x256xf32, #tpu.memory_space<vmem>>) attributes {dimension_semantics = [#tpu.dimension_semantics<parallel>, #tpu.dimension_semantics<arbitrary>], iteration_bounds = array<i64: 1, 1>, scalar_prefetch = 0 : i64, scratch_operands = 0 : i64, tpu.core_type = #tpu.core_type<tc>, window_params = [{transform_indices = @transform_0, window_bounds = array<i64: 128, 128>}, {transform_indices = @transform_1, window_bounds = array<i64: 128, 256>}, {transform_indices = @transform_2, window_bounds = array<i64: 128, 256>}]} {
    %c0_i32 = arith.constant 0 : i32
    %0 = arith.cmpi eq, %arg1, %c0_i32 : i32
    %1 = arith.extui %0 : i1 to i32
    %c0_i32_0 = arith.constant 0 : i32
    %2 = arith.cmpi ne, %1, %c0_i32_0 : i32
    scf.if %2 {
      %cst_8 = arith.constant 0.000000e+00 : f32
      %9 = vector.broadcast %cst_8 : f32 to vector<128x256xf32>
      %c0_9 = arith.constant 0 : index
      %c0_10 = arith.constant 0 : index
      %10 = vector.load %arg4[%c0_9, %c0_10] : memref<128x256xf32, #tpu.memory_space<vmem>>, vector<128x256xf32>
      tpu.vector_store %arg4[%c0_9, %c0_10], %9 {strides = array<i32>} : memref<128x256xf32, #tpu.memory_space<vmem>>, vector<128x256xf32>,
    } else {
    }
    %c0 = arith.constant 0 : index
    %c0_1 = arith.constant 0 : index
    %3 = vector.load %arg4[%c0, %c0_1] : memref<128x256xf32, #tpu.memory_space<vmem>>, vector<128x256xf32>
    %c0_2 = arith.constant 0 : index
    %c0_3 = arith.constant 0 : index
    %4 = vector.load %arg2[%c0_2, %c0_3] : memref<128x128xbf16, #tpu.memory_space<vmem>>, vector<128x128xbf16>
    %c0_4 = arith.constant 0 : index
    %c0_5 = arith.constant 0 : index
    %5 = vector.load %arg3[%c0_4, %c0_5] : memref<128x256xbf16, #tpu.memory_space<vmem>>, vector<128x256xbf16>
    %cst = arith.constant dense<0.000000e+00> : vector<128x256xf32>
    %6 = tpu.matmul %4, %5, %cst {dimension_numbers = #tpu.dot_dimension_numbers<[1], [0], [0], [1], [0, 0, 1, 1], [], []>} : vector<128x128xbf16>, vector<128x256xbf16>, vector<128x256xf32> -> vector<128x256xf32>
    %7 = arith.addf %3, %6 : vector<128x256xf32>
    %c0_6 = arith.constant 0 : index
    %c0_7 = arith.constant 0 : index
    %8 = vector.load %arg4[%c0_6, %c0_7] : memref<128x256xf32, #tpu.memory_space<vmem>>, vector<128x256xf32>
    tpu.vector_store %arg4[%c0_6, %c0_7], %7 {strides = array<i32>} : memref<128x256xf32, #tpu.memory_space<vmem>>, vector<128x256xf32>,
    return
  }
  func.func @transform_0(%arg0: i32, %arg1: i32) -> (i32, i32) {
    %c0_i32 = arith.constant 0 : i32
    return %arg0, %arg1 : i32, i32
  }
  func.func @transform_1(%arg0: i32, %arg1: i32) -> (i32, i32) {
    %c0_i32 = arith.constant 0 : i32
    %c0_i32_0 = arith.constant 0 : i32
    return %arg1, %c0_i32 : i32, i32
  }
  func.func @transform_2(%arg0: i32, %arg1: i32) -> (i32, i32) {
    %c0_i32 = arith.constant 0 : i32
    %c0_i32_0 = arith.constant 0 : i32
    return %arg0, %c0_i32 : i32, i32
  }
}

module attributes {stable_mosaic.version = 11 : i64} {
  func.func @_bn_relu_kernel(%arg0: i32, %arg1: i32, %arg2: memref<256x128xf32, #tpu.memory_space<vmem>>, %arg3: memref<1x128xf32, #tpu.memory_space<vmem>>, %arg4: memref<1x128xf32, #tpu.memory_space<vmem>>, %arg5: memref<256x128xbf16, #tpu.memory_space<vmem>>, %arg6: memref<1x128xf32, #tpu.memory_space<vmem>>, %arg7: memref<1x128xf32, #tpu.memory_space<vmem>>) attributes {dimension_semantics = [#tpu.dimension_semantics<arbitrary>, #tpu.dimension_semantics<arbitrary>], iteration_bounds = array<i64: 2, 2>, scalar_prefetch = 0 : i64, scratch_operands = 2 : i64, tpu.core_type = #tpu.core_type<tc>, window_params = [{transform_indices = @transform_0, window_bounds = array<i64: 256, 128>}, {pipeline_mode = #tpu.pipeline_mode<synchronous>, transform_indices = @transform_1, window_bounds = array<i64: 1, 128>}, {pipeline_mode = #tpu.pipeline_mode<synchronous>, transform_indices = @transform_2, window_bounds = array<i64: 1, 128>}, {transform_indices = @transform_3, window_bounds = array<i64: 256, 128>}]} {
    %c0_i32 = arith.constant 0 : i32
    %0 = arith.cmpi eq, %arg0, %c0_i32 : i32
    %c0_i32_0 = arith.constant 0 : i32
    %1 = arith.cmpi eq, %arg1, %c0_i32_0 : i32
    %2 = arith.andi %0, %1 : i1
    %3 = arith.extui %2 : i1 to i32
    %c0_i32_1 = arith.constant 0 : i32
    %4 = arith.cmpi ne, %3, %c0_i32_1 : i32
    scf.if %4 {
      %cst = arith.constant 0.000000e+00 : f32
      %16 = vector.broadcast %cst : f32 to vector<1x128xf32>
      %c0 = arith.constant 0 : index
      %c0_8 = arith.constant 0 : index
      %17 = vector.load %arg6[%c0, %c0_8] : memref<1x128xf32, #tpu.memory_space<vmem>>, vector<1x128xf32>
      tpu.vector_store %arg6[%c0, %c0_8], %16 {strides = array<i32>} : memref<1x128xf32, #tpu.memory_space<vmem>>, vector<1x128xf32>,
      %cst_9 = arith.constant 0.000000e+00 : f32
      %18 = vector.broadcast %cst_9 : f32 to vector<1x128xf32>
      %c0_10 = arith.constant 0 : index
      %c0_11 = arith.constant 0 : index
      %19 = vector.load %arg7[%c0_10, %c0_11] : memref<1x128xf32, #tpu.memory_space<vmem>>, vector<1x128xf32>
      tpu.vector_store %arg7[%c0_10, %c0_11], %18 {strides = array<i32>} : memref<1x128xf32, #tpu.memory_space<vmem>>, vector<1x128xf32>,
    } else {
    }
    %c0_i32_2 = arith.constant 0 : i32
    %5 = arith.cmpi eq, %arg0, %c0_i32_2 : i32
    %6 = arith.extui %5 : i1 to i32
    %c0_i32_3 = arith.constant 0 : i32
    %7 = arith.cmpi ne, %6, %c0_i32_3 : i32
    scf.if %7 {
      %c0 = arith.constant 0 : index
      %c0_8 = arith.constant 0 : index
      %16 = vector.load %arg2[%c0, %c0_8] : memref<256x128xf32, #tpu.memory_space<vmem>>, vector<256x128xf32>
      %c0_9 = arith.constant 0 : index
      %c0_10 = arith.constant 0 : index
      %17 = vector.load %arg6[%c0_9, %c0_10] : memref<1x128xf32, #tpu.memory_space<vmem>>, vector<1x128xf32>
      %cst = arith.constant dense<0.000000e+00> : vector<128xf32>
      %18 = vector.multi_reduction <add>, %16, %cst [0] : vector<256x128xf32> to vector<128xf32>
      %19 = vector.shape_cast %18 : vector<128xf32> to vector<1x128xf32>
      %20 = arith.addf %17, %19 : vector<1x128xf32>
      %c0_11 = arith.constant 0 : index
      %c0_12 = arith.constant 0 : index
      %21 = vector.load %arg6[%c0_11, %c0_12] : memref<1x128xf32, #tpu.memory_space<vmem>>, vector<1x128xf32>
      tpu.vector_store %arg6[%c0_11, %c0_12], %20 {strides = array<i32>} : memref<1x128xf32, #tpu.memory_space<vmem>>, vector<1x128xf32>,
      %c0_13 = arith.constant 0 : index
      %c0_14 = arith.constant 0 : index
      %22 = vector.load %arg7[%c0_13, %c0_14] : memref<1x128xf32, #tpu.memory_space<vmem>>, vector<1x128xf32>
      %23 = arith.mulf %16, %16 : vector<256x128xf32>
      %cst_15 = arith.constant dense<0.000000e+00> : vector<128xf32>
      %24 = vector.multi_reduction <add>, %23, %cst_15 [0] : vector<256x128xf32> to vector<128xf32>
      %25 = vector.shape_cast %24 : vector<128xf32> to vector<1x128xf32>
      %26 = arith.addf %22, %25 : vector<1x128xf32>
      %c0_16 = arith.constant 0 : index
      %c0_17 = arith.constant 0 : index
      %27 = vector.load %arg7[%c0_16, %c0_17] : memref<1x128xf32, #tpu.memory_space<vmem>>, vector<1x128xf32>
      tpu.vector_store %arg7[%c0_16, %c0_17], %26 {strides = array<i32>} : memref<1x128xf32, #tpu.memory_space<vmem>>, vector<1x128xf32>,
      %28 = arith.truncf %16 : vector<256x128xf32> to vector<256x128xbf16>
      %c0_18 = arith.constant 0 : index
      %c0_19 = arith.constant 0 : index
      %29 = vector.load %arg5[%c0_18, %c0_19] : memref<256x128xbf16, #tpu.memory_space<vmem>>, vector<256x128xbf16>
      tpu.vector_store %arg5[%c0_18, %c0_19], %28 {strides = array<i32>} : memref<256x128xbf16, #tpu.memory_space<vmem>>, vector<256x128xbf16>,
    } else {
    }
    %c1_i32 = arith.constant 1 : i32
    %8 = arith.cmpi eq, %arg0, %c1_i32 : i32
    %c0_i32_4 = arith.constant 0 : i32
    %9 = arith.cmpi eq, %arg1, %c0_i32_4 : i32
    %10 = arith.andi %8, %9 : i1
    %11 = arith.extui %10 : i1 to i32
    %c0_i32_5 = arith.constant 0 : i32
    %12 = arith.cmpi ne, %11, %c0_i32_5 : i32
    scf.if %12 {
      %c0 = arith.constant 0 : index
      %c0_8 = arith.constant 0 : index
      %16 = vector.load %arg6[%c0, %c0_8] : memref<1x128xf32, #tpu.memory_space<vmem>>, vector<1x128xf32>
      %cst = arith.constant 0.001953125 : f32
      %17 = vector.broadcast %cst : f32 to vector<1x128xf32>
      %18 = arith.mulf %16, %17 : vector<1x128xf32>
      %c0_9 = arith.constant 0 : index
      %c0_10 = arith.constant 0 : index
      %19 = vector.load %arg7[%c0_9, %c0_10] : memref<1x128xf32, #tpu.memory_space<vmem>>, vector<1x128xf32>
      %cst_11 = arith.constant 0.001953125 : f32
      %20 = vector.broadcast %cst_11 : f32 to vector<1x128xf32>
      %21 = arith.mulf %19, %20 : vector<1x128xf32>
      %22 = arith.mulf %18, %18 : vector<1x128xf32>
      %23 = arith.subf %21, %22 : vector<1x128xf32>
      %c0_12 = arith.constant 0 : index
      %c0_13 = arith.constant 0 : index
      %24 = vector.load %arg3[%c0_12, %c0_13] : memref<1x128xf32, #tpu.memory_space<vmem>>, vector<1x128xf32>
      %cst_14 = arith.constant 9.99999974E-6 : f32
      %25 = vector.broadcast %cst_14 : f32 to vector<1x128xf32>
      %26 = arith.addf %23, %25 : vector<1x128xf32>
      %27 = math.rsqrt %26 : vector<1x128xf32>
      %28 = arith.mulf %24, %27 : vector<1x128xf32>
      %c0_15 = arith.constant 0 : index
      %c0_16 = arith.constant 0 : index
      %29 = vector.load %arg6[%c0_15, %c0_16] : memref<1x128xf32, #tpu.memory_space<vmem>>, vector<1x128xf32>
      tpu.vector_store %arg6[%c0_15, %c0_16], %28 {strides = array<i32>} : memref<1x128xf32, #tpu.memory_space<vmem>>, vector<1x128xf32>,
      %c0_17 = arith.constant 0 : index
      %c0_18 = arith.constant 0 : index
      %30 = vector.load %arg4[%c0_17, %c0_18] : memref<1x128xf32, #tpu.memory_space<vmem>>, vector<1x128xf32>
      %31 = arith.mulf %18, %28 : vector<1x128xf32>
      %32 = arith.subf %30, %31 : vector<1x128xf32>
      %c0_19 = arith.constant 0 : index
      %c0_20 = arith.constant 0 : index
      %33 = vector.load %arg7[%c0_19, %c0_20] : memref<1x128xf32, #tpu.memory_space<vmem>>, vector<1x128xf32>
      tpu.vector_store %arg7[%c0_19, %c0_20], %32 {strides = array<i32>} : memref<1x128xf32, #tpu.memory_space<vmem>>, vector<1x128xf32>,
    } else {
    }
    %c1_i32_6 = arith.constant 1 : i32
    %13 = arith.cmpi eq, %arg0, %c1_i32_6 : i32
    %14 = arith.extui %13 : i1 to i32
    %c0_i32_7 = arith.constant 0 : i32
    %15 = arith.cmpi ne, %14, %c0_i32_7 : i32
    scf.if %15 {
      %c0 = arith.constant 0 : index
      %c0_8 = arith.constant 0 : index
      %16 = vector.load %arg2[%c0, %c0_8] : memref<256x128xf32, #tpu.memory_space<vmem>>, vector<256x128xf32>
      %c0_9 = arith.constant 0 : index
      %c0_10 = arith.constant 0 : index
      %17 = vector.load %arg6[%c0_9, %c0_10] : memref<1x128xf32, #tpu.memory_space<vmem>>, vector<1x128xf32>
      %18 = vector.broadcast %17 : vector<1x128xf32> to vector<256x128xf32>
      %19 = arith.mulf %16, %18 : vector<256x128xf32>
      %c0_11 = arith.constant 0 : index
      %c0_12 = arith.constant 0 : index
      %20 = vector.load %arg7[%c0_11, %c0_12] : memref<1x128xf32, #tpu.memory_space<vmem>>, vector<1x128xf32>
      %21 = vector.broadcast %20 : vector<1x128xf32> to vector<256x128xf32>
      %22 = arith.addf %19, %21 : vector<256x128xf32>
      %cst = arith.constant 0.000000e+00 : f32
      %23 = vector.broadcast %cst : f32 to vector<256x128xf32>
      %24 = arith.maximumf %22, %23 : vector<256x128xf32>
      %25 = arith.truncf %24 : vector<256x128xf32> to vector<256x128xbf16>
      %c0_13 = arith.constant 0 : index
      %c0_14 = arith.constant 0 : index
      %26 = vector.load %arg5[%c0_13, %c0_14] : memref<256x128xbf16, #tpu.memory_space<vmem>>, vector<256x128xbf16>
      tpu.vector_store %arg5[%c0_13, %c0_14], %25 {strides = array<i32>} : memref<256x128xbf16, #tpu.memory_space<vmem>>, vector<256x128xbf16>,
    } else {
    }
    return
  }
  func.func @transform_0(%arg0: i32, %arg1: i32) -> (i32, i32) {
    %c0_i32 = arith.constant 0 : i32
    %c0_i32_0 = arith.constant 0 : i32
    return %arg1, %c0_i32 : i32, i32
  }
  func.func @transform_1(%arg0: i32, %arg1: i32) -> (i32, i32) {
    %c0_i32 = arith.constant 0 : i32
    %c0_i32_0 = arith.constant 0 : i32
    %c0_i32_1 = arith.constant 0 : i32
    return %c0_i32, %c0_i32_0 : i32, i32
  }
  func.func @transform_2(%arg0: i32, %arg1: i32) -> (i32, i32) {
    %c0_i32 = arith.constant 0 : i32
    %c0_i32_0 = arith.constant 0 : i32
    %c0_i32_1 = arith.constant 0 : i32
    return %c0_i32, %c0_i32_0 : i32, i32
  }
  func.func @transform_3(%arg0: i32, %arg1: i32) -> (i32, i32) {
    %c0_i32 = arith.constant 0 : i32
    %c0_i32_0 = arith.constant 0 : i32
    return %arg1, %c0_i32 : i32, i32
  }
}

module attributes {stable_mosaic.version = 11 : i64} {
  func.func @_matmul_kernel(%arg0: i32, %arg1: i32, %arg2: memref<256x128xbf16, #tpu.memory_space<vmem>>, %arg3: memref<128x128xbf16, #tpu.memory_space<vmem>>, %arg4: memref<256x128xf32, #tpu.memory_space<vmem>>) attributes {dimension_semantics = [#tpu.dimension_semantics<parallel>, #tpu.dimension_semantics<arbitrary>], iteration_bounds = array<i64: 2, 1>, scalar_prefetch = 0 : i64, scratch_operands = 0 : i64, tpu.core_type = #tpu.core_type<tc>, window_params = [{transform_indices = @transform_0, window_bounds = array<i64: 256, 128>}, {transform_indices = @transform_1, window_bounds = array<i64: 128, 128>}, {transform_indices = @transform_2, window_bounds = array<i64: 256, 128>}]} {
    %c0_i32 = arith.constant 0 : i32
    %0 = arith.cmpi eq, %arg1, %c0_i32 : i32
    %1 = arith.extui %0 : i1 to i32
    %c0_i32_0 = arith.constant 0 : i32
    %2 = arith.cmpi ne, %1, %c0_i32_0 : i32
    scf.if %2 {
      %cst_8 = arith.constant 0.000000e+00 : f32
      %9 = vector.broadcast %cst_8 : f32 to vector<256x128xf32>
      %c0_9 = arith.constant 0 : index
      %c0_10 = arith.constant 0 : index
      %10 = vector.load %arg4[%c0_9, %c0_10] : memref<256x128xf32, #tpu.memory_space<vmem>>, vector<256x128xf32>
      tpu.vector_store %arg4[%c0_9, %c0_10], %9 {strides = array<i32>} : memref<256x128xf32, #tpu.memory_space<vmem>>, vector<256x128xf32>,
    } else {
    }
    %c0 = arith.constant 0 : index
    %c0_1 = arith.constant 0 : index
    %3 = vector.load %arg4[%c0, %c0_1] : memref<256x128xf32, #tpu.memory_space<vmem>>, vector<256x128xf32>
    %c0_2 = arith.constant 0 : index
    %c0_3 = arith.constant 0 : index
    %4 = vector.load %arg2[%c0_2, %c0_3] : memref<256x128xbf16, #tpu.memory_space<vmem>>, vector<256x128xbf16>
    %c0_4 = arith.constant 0 : index
    %c0_5 = arith.constant 0 : index
    %5 = vector.load %arg3[%c0_4, %c0_5] : memref<128x128xbf16, #tpu.memory_space<vmem>>, vector<128x128xbf16>
    %cst = arith.constant dense<0.000000e+00> : vector<256x128xf32>
    %6 = tpu.matmul %4, %5, %cst {dimension_numbers = #tpu.dot_dimension_numbers<[1], [0], [0], [1], [0, 0, 1, 1], [], []>} : vector<256x128xbf16>, vector<128x128xbf16>, vector<256x128xf32> -> vector<256x128xf32>
    %7 = arith.addf %3, %6 : vector<256x128xf32>
    %c0_6 = arith.constant 0 : index
    %c0_7 = arith.constant 0 : index
    %8 = vector.load %arg4[%c0_6, %c0_7] : memref<256x128xf32, #tpu.memory_space<vmem>>, vector<256x128xf32>
    tpu.vector_store %arg4[%c0_6, %c0_7], %7 {strides = array<i32>} : memref<256x128xf32, #tpu.memory_space<vmem>>, vector<256x128xf32>,
    return
  }
  func.func @transform_0(%arg0: i32, %arg1: i32) -> (i32, i32) {
    %c0_i32 = arith.constant 0 : i32
    return %arg0, %arg1 : i32, i32
  }
  func.func @transform_1(%arg0: i32, %arg1: i32) -> (i32, i32) {
    %c0_i32 = arith.constant 0 : i32
    %c0_i32_0 = arith.constant 0 : i32
    return %arg1, %c0_i32 : i32, i32
  }
  func.func @transform_2(%arg0: i32, %arg1: i32) -> (i32, i32) {
    %c0_i32 = arith.constant 0 : i32
    %c0_i32_0 = arith.constant 0 : i32
    return %arg0, %c0_i32 : i32, i32
  }
}

module attributes {stable_mosaic.version = 11 : i64} {
  func.func @_bias_tanh01_kernel(%arg0: i32, %arg1: memref<256x128xf32, #tpu.memory_space<vmem>>, %arg2: memref<1x128xf32, #tpu.memory_space<vmem>>, %arg3: memref<256x128xf32, #tpu.memory_space<vmem>>) attributes {dimension_semantics = [#tpu.dimension_semantics<parallel>], iteration_bounds = array<i64: 8>, scalar_prefetch = 0 : i64, scratch_operands = 0 : i64, tpu.core_type = #tpu.core_type<tc>, window_params = [{transform_indices = @transform_0, window_bounds = array<i64: 256, 128>}, {pipeline_mode = #tpu.pipeline_mode<synchronous>, transform_indices = @transform_1, window_bounds = array<i64: 1, 128>}, {transform_indices = @transform_2, window_bounds = array<i64: 256, 128>}]} {
    %c0 = arith.constant 0 : index
    %c0_0 = arith.constant 0 : index
    %0 = vector.load %arg1[%c0, %c0_0] : memref<256x128xf32, #tpu.memory_space<vmem>>, vector<256x128xf32>
    %c0_1 = arith.constant 0 : index
    %c0_2 = arith.constant 0 : index
    %1 = vector.load %arg2[%c0_1, %c0_2] : memref<1x128xf32, #tpu.memory_space<vmem>>, vector<1x128xf32>
    %2 = vector.broadcast %1 : vector<1x128xf32> to vector<256x128xf32>
    %3 = arith.addf %0, %2 : vector<256x128xf32>
    %4 = math.tanh %3 : vector<256x128xf32>
    %cst = arith.constant 5.000000e-01 : f32
    %5 = vector.broadcast %cst : f32 to vector<256x128xf32>
    %6 = arith.mulf %5, %4 : vector<256x128xf32>
    %cst_3 = arith.constant 5.000000e-01 : f32
    %7 = vector.broadcast %cst_3 : f32 to vector<256x128xf32>
    %8 = arith.addf %6, %7 : vector<256x128xf32>
    %c0_4 = arith.constant 0 : index
    %c0_5 = arith.constant 0 : index
    %9 = vector.load %arg3[%c0_4, %c0_5] : memref<256x128xf32, #tpu.memory_space<vmem>>, vector<256x128xf32>
    tpu.vector_store %arg3[%c0_4, %c0_5], %8 {strides = array<i32>} : memref<256x128xf32, #tpu.memory_space<vmem>>, vector<256x128xf32>,
    return
  }
  func.func @transform_0(%arg0: i32) -> (i32, i32) {
    %c0_i32 = arith.constant 0 : i32
    %c0_i32_0 = arith.constant 0 : i32
    return %arg0, %c0_i32 : i32, i32
  }
  func.func @transform_1(%arg0: i32) -> (i32, i32) {
    %c0_i32 = arith.constant 0 : i32
    %c0_i32_0 = arith.constant 0 : i32
    %c0_i32_1 = arith.constant 0 : i32
    return %c0_i32, %c0_i32_0 : i32, i32
  }
  func.func @transform_2(%arg0: i32) -> (i32, i32) {
    %c0_i32 = arith.constant 0 : i32
    %c0_i32_0 = arith.constant 0 : i32
    return %arg0, %c0_i32 : i32, i32
  }
}

</mosaic_0001>

<llo_original>
// kernel: _lambda_.9
$region0: #{_lambda_.9}
  #allocation0 [shape = 'u32[]', space=smem, size = 0x4, offset = 0x4, fixed_abs, tag = 'smem constant byte address 0x4 - core index']
  #allocation1 [shape = 'u32[72,128]{1,0:T(1,128)}', space=vmem, size = 0x9000, scoped, tag = 'internal scratch']
  %s0 = inlined_call_operand.vmem [shape: bf16[16,128], index: 0, kind: input, shape index: {}]
  %s1 = inlined_call_operand.hbm [shape: bf16[128,256], index: 1, kind: input, shape index: {}]
  %s2 = inlined_call_operand.vmem [shape: f32[1,256], index: 2, kind: input, shape index: {}]
  %s3 = inlined_call_operand.vmem [shape: f32[1,256], index: 3, kind: input, shape index: {}]
  %s4 = inlined_call_operand.vmem [shape: f32[16,256], index: 4, kind: output, shape index: {}]
  %s5 = sld [smem:[#allocation0]]
  $region38: #{_lambda_.9} parent=0
    _
  %s7 = ssub.s32 1, %s5
  %s8 = scalar_select 0, %s7, %s5
  $region1: #{_lambda_.9} parent=0
    #allocation2 [shape = 'u8[65536]{0}', space=vmem, size = 0x10000, scoped, tag = 'input window, operand 1, single buffered']
    #allocation3 [shape = 's32[1]{0}', space=sflag, size = 0x4, scoped, tag = 'scoped memory for _lambda_.9']
    %9 = vsyncpa [#allocation3], 0
    // Predicated region
    $region2: #{_lambda_.9} parent=1 // pred_check
      _
    $region3: #{_lambda_.9} parent=1 // pred_check_branch
      %11 = sbr.rel (0) target = $region5
    $region4: #{_lambda_.9} parent=1 // pred_region
      _
    $region5: #{_lambda_.9} parent=1 // pred_fallthru
      _
    // Predicated region
    $region6: #{_lambda_.9} parent=1 // pred_check
      _
    $region7: #{_lambda_.9} parent=1 // pred_check_branch
      %13 = sbr.rel (0) target = $region9
    $region8: #{_lambda_.9} parent=1 // pred_region
      %15 = vsyncadd [#allocation3], 0
      %s16 = sshll.u32 %s1, 4
      %s17 = int_to_ptr.hbm [resolvable:$true] %s16
      %s18 = sshll.u32 [#allocation2], 4
      %s19 = int_to_ptr.vmem [resolvable:$true] %s18
      %24 = dma.hbm_to_vmem [thread:$0]  %s17, 2048, %s19, [#allocation3], 128, 128, 8
    $region9: #{_lambda_.9} parent=1 // pred_fallthru
      _
    // Predicated region
    $region10: #{_lambda_.9} parent=1 // pred_check
      _
    $region11: #{_lambda_.9} parent=1 // pred_check_branch
      %26 = sbr.rel (0) target = $region13
    $region12: #{_lambda_.9} parent=1 // pred_region
      _
    $region13: #{_lambda_.9} parent=1 // pred_fallthru
      _
    // Predicated region
    $region14: #{_lambda_.9} parent=1 // pred_check
      _
    $region15: #{_lambda_.9} parent=1 // pred_check_branch
      %28 = sbr.rel (0) target = $region17
    $region16: #{_lambda_.9} parent=1 // pred_region
      _
    $region17: #{_lambda_.9} parent=1 // pred_fallthru
      _
    // Predicated region
    $region18: #{_lambda_.9} parent=1 // pred_check
      _
    $region19: #{_lambda_.9} parent=1 // pred_check_branch
      %30 = sbr.rel (0) target = $region21
    $region20: #{_lambda_.9} parent=1 // pred_region
      %32 = dma.done [#allocation3], 2048
    $region21: #{_lambda_.9} parent=1 // pred_fallthru
      _
    %p33 = scmp.eq.s32.totalorder 0, 0
    // Predicated region
    $region22: #{_lambda_.9} parent=1 // pred_check
      %p34 = pneg %p33
    $region23: #{_lambda_.9} parent=1 // pred_check_branch
      %36 = sbr.rel (%p34) target = $region25
    $region24: #{_lambda_.9} parent=1 // pred_region
      %37 = vst [vmem:[%s4] sm:$0xff] 0.0
      %38 = vst [vmem:[%s4 + $0x8] sm:$0xff] 0.0
      %39 = vst [vmem:[%s4 + $0x10] sm:$0xff] 0.0
      %40 = vst [vmem:[%s4 + $0x18] sm:$0xff] 0.0
    $region25: #{_lambda_.9} parent=1 // pred_fallthru
      _
    %v41 = vld [vmem:[%s4] sm:$0xff]
    %v42 = vld [vmem:[%s4 + $0x8] sm:$0xff]
    %v43 = vld [vmem:[%s4 + $0x10] sm:$0xff]
    %v44 = vld [vmem:[%s4 + $0x18] sm:$0xff]
    %v45 = vld [vmem:[%s0] sm:$0xf]
    %v46 = vld [vmem:[%s0 + $0x4] sm:$0xf]
    %v47 = vld [vmem:[#allocation2] sm:$0xff]
    %v48 = vld [vmem:[#allocation2 + $0x8] sm:$0xff]
    %v49 = vld [vmem:[#allocation2 + $0x10] sm:$0xff]
    %v50 = vld [vmem:[#allocation2 + $0x18] sm:$0xff]
    %v51 = vld [vmem:[#allocation2 + $0x20] sm:$0xff]
    %v52 = vld [vmem:[#allocation2 + $0x28] sm:$0xff]
    %v53 = vld [vmem:[#allocation2 + $0x30] sm:$0xff]
    %v54 = vld [vmem:[#allocation2 + $0x38] sm:$0xff]
    %v55 = vld [vmem:[#allocation2 + $0x40] sm:$0xff]
    %v56 = vld [vmem:[#allocation2 + $0x48] sm:$0xff]
    %v57 = vld [vmem:[#allocation2 + $0x50] sm:$0xff]
    %v58 = vld [vmem:[#allocation2 + $0x58] sm:$0xff]
    %v59 = vld [vmem:[#allocation2 + $0x60] sm:$0xff]
    %v60 = vld [vmem:[#allocation2 + $0x68] sm:$0xff]
    %v61 = vld [vmem:[#allocation2 + $0x70] sm:$0xff]
    %v62 = vld [vmem:[#allocation2 + $0x78] sm:$0xff]
    %v65 = vunpack.c.l.b16 %v45
    %v66 = vunpack.c.l.b16 %v46
    %v67 = vpack.c.b16 %v66, %v65
    %v85 = vunpack.c.l.b16 %v47
    %v86 = vunpack.c.h.b16 %v47
    %v87 = vunpack.c.l.b16 %v48
    %v88 = vunpack.c.h.b16 %v48
    %v89 = vunpack.c.l.b16 %v49
    %v90 = vunpack.c.h.b16 %v49
    %v91 = vunpack.c.l.b16 %v50
    %v92 = vunpack.c.h.b16 %v50
    %v93 = vunpack.c.l.b16 %v51
    %v94 = vunpack.c.h.b16 %v51
    %v95 = vunpack.c.l.b16 %v52
    %v96 = vunpack.c.h.b16 %v52
    %v97 = vunpack.c.l.b16 %v53
    %v98 = vunpack.c.h.b16 %v53
    %v99 = vunpack.c.l.b16 %v54
    %v100 = vunpack.c.h.b16 %v54
    %v101 = vunpack.c.l.b16 %v55
    %v102 = vunpack.c.h.b16 %v55
    %v103 = vunpack.c.l.b16 %v56
    %v104 = vunpack.c.h.b16 %v56
    %v105 = vunpack.c.l.b16 %v57
    %v106 = vunpack.c.h.b16 %v57
    %v107 = vunpack.c.l.b16 %v58
    %v108 = vunpack.c.h.b16 %v58
    %v109 = vunpack.c.l.b16 %v59
    %v110 = vunpack.c.h.b16 %v59
    %v111 = vunpack.c.l.b16 %v60
    %v112 = vunpack.c.h.b16 %v60
    %v113 = vunpack.c.l.b16 %v61
    %v114 = vunpack.c.h.b16 %v61
    %v115 = vunpack.c.l.b16 %v62
    %v116 = vunpack.c.h.b16 %v62
    %v117 = vpack.c.b16 %v87, %v85
    %v118 = vpack.c.b16 %v88, %v86
    %v119 = vpack.c.b16 %v91, %v89
    %v120 = vpack.c.b16 %v92, %v90
    %v121 = vpack.c.b16 %v95, %v93
    %v122 = vpack.c.b16 %v96, %v94
    %v123 = vpack.c.b16 %v99, %v97
    %v124 = vpack.c.b16 %v100, %v98
    %v125 = vpack.c.b16 %v103, %v101
    %v126 = vpack.c.b16 %v104, %v102
    %v127 = vpack.c.b16 %v107, %v105
    %v128 = vpack.c.b16 %v108, %v106
    %v129 = vpack.c.b16 %v111, %v109
    %v130 = vpack.c.b16 %v112, %v110
    %v131 = vpack.c.b16 %v115, %v113
    %v132 = vpack.c.b16 %v116, %v114
    %149 = vmatpush.bf16.msra.mxu0 %v131
    %150 = vmatpush.bf16.msra.mxu0 %v129
    %151 = vmatpush.bf16.msra.mxu0 %v127
    %152 = vmatpush.bf16.msra.mxu0 %v125
    %153 = vmatpush.bf16.msra.mxu0 %v123
    %154 = vmatpush.bf16.msra.mxu0 %v121
    %155 = vmatpush.bf16.msra.mxu0 %v119
    %156 = vmatpush.bf16.msra.mxu0 %v117
    %157 = vmatmul.bf16.gmra.mxu0 %v67
    %v158 = vpop.f32.mrf.mxu0
    %v159 = vadd.f32 0.0, %v158
    %v160 = vpop.f32.mrf.mxu0
    %v161 = vadd.f32 0.0, %v160
    %162 = vdwg.mxu0
    %163 = vmatpush.bf16.msra.mxu0 %v132
    %164 = vmatpush.bf16.msra.mxu0 %v130
    %165 = vmatpush.bf16.msra.mxu0 %v128
    %166 = vmatpush.bf16.msra.mxu0 %v126
    %167 = vmatpush.bf16.msra.mxu0 %v124
    %168 = vmatpush.bf16.msra.mxu0 %v122
    %169 = vmatpush.bf16.msra.mxu0 %v120
    %170 = vmatpush.bf16.msra.mxu0 %v118
    %171 = vmatmul.bf16.gmra.mxu0 %v67
    %v172 = vpop.f32.mrf.mxu0
    %v173 = vadd.f32 0.0, %v172
    %v174 = vpop.f32.mrf.mxu0
    %v175 = vadd.f32 0.0, %v174
    %176 = vdwg.mxu0
    %v177 = vadd.f32 %v41, %v159
    %v178 = vadd.f32 %v42, %v173
    %v179 = vadd.f32 %v43, %v161
    %v180 = vadd.f32 %v44, %v175
    %181 = vst [vmem:[%s4] sm:$0xff] %v177
    %182 = vst [vmem:[%s4 + $0x8] sm:$0xff] %v178
    %183 = vst [vmem:[%s4 + $0x10] sm:$0xff] %v179
    %184 = vst [vmem:[%s4 + $0x18] sm:$0xff] %v180
    // Predicated region
    $region26: #{_lambda_.9} parent=1 // pred_check
      %p185 = pneg %p33
    $region27: #{_lambda_.9} parent=1 // pred_check_branch
      %187 = sbr.rel (%p185) target = $region29
    $region28: #{_lambda_.9} parent=1 // pred_region
      %v188 = vld [vmem:[%s4] sm:$0xff]
      %v189 = vld [vmem:[%s4 + $0x8] sm:$0xff]
      %v190 = vld [vmem:[%s4 + $0x10] sm:$0xff]
      %v191 = vld [vmem:[%s4 + $0x18] sm:$0xff]
      %v192 = vadd.f32 %v188, %v190
      %v193 = vrot.slane %v192, 4
      %v194 = vadd.f32 %v192, %v193
      %v195 = vrot.slane %v194, 2
      %v196 = vadd.f32 %v194, %v195
      %v197 = vrot.slane %v196, 1
      %v198 = vadd.f32 %v196, %v197
      %v199 = vadd.f32 %v189, %v191
      %v200 = vrot.slane %v199, 4
      %v201 = vadd.f32 %v199, %v200
      %v202 = vrot.slane %v201, 2
      %v203 = vadd.f32 %v201, %v202
      %v204 = vrot.slane %v203, 1
      %v205 = vadd.f32 %v203, %v204
      %v206 = vmul.f32 %v198, 0.5
      %v207 = vmul.f32 %v205, 0.5
      %v208 = vmul.f32 %v188, %v188
      %v209 = vmul.f32 %v189, %v189
      %v210 = vmul.f32 %v190, %v190
      %v211 = vmul.f32 %v191, %v191
      %v212 = vadd.f32 %v208, %v210
      %v213 = vrot.slane %v212, 4
      %v214 = vadd.f32 %v212, %v213
      %v215 = vrot.slane %v214, 2
      %v216 = vadd.f32 %v214, %v215
      %v217 = vrot.slane %v216, 1
      %v218 = vadd.f32 %v216, %v217
      %v219 = vadd.f32 %v209, %v211
      %v220 = vrot.slane %v219, 4
      %v221 = vadd.f32 %v219, %v220
      %v222 = vrot.slane %v221, 2
      %v223 = vadd.f32 %v221, %v222
      %v224 = vrot.slane %v223, 1
      %v225 = vadd.f32 %v223, %v224
      %v226 = vmul.f32 %v218, 0.5
      %v227 = vmul.f32 %v225, 0.5
      %v228 = vmul.f32 %v206, %v206
      %v229 = vmul.f32 %v207, %v207
      %v230 = vsub.f32 %v226, %v228
      %v231 = vsub.f32 %v227, %v229
      %v232 = vld [vmem:[%s2] sm:$0x3]
      %v233 = vadd.f32 %v230, 1e-05
      %v234 = vadd.f32 %v231, 1e-05
      %v235 = vrsqrt.pop %v233
      %v236 = vmul.f32 %v235, %v233
      %v237 = vmul.f32 %v236, %v235
      %v238 = vmul.f32 0.5, %v237
      %v239 = vsub.f32 1.5, %v238
      %v240 = vmul.f32 %v235, %v239
      %vm241 = vweird.f32 %v233
      %vm242 = vweird.f32 %v235
      %vm243 = vmor %vm241, %vm242
      %v244 = vsel %vm243, %v235, %v240
      %v245 = vrsqrt.pop %v234
      %v246 = vmul.f32 %v245, %v234
      %v247 = vmul.f32 %v246, %v245
      %v248 = vmul.f32 0.5, %v247
      %v249 = vsub.f32 1.5, %v248
      %v250 = vmul.f32 %v245, %v249
      %vm251 = vweird.f32 %v234
      %vm252 = vweird.f32 %v245
      %vm253 = vmor %vm251, %vm252
      %v254 = vsel %vm253, %v245, %v250
      %v257 = vrot.slane %v254, 7
      %vm258 = vcmask 1040384
      %v259 = vsel %vm258, %v244, %v257
      %v261 = vmul.f32 %v232, %v259
      %v262 = vld [vmem:[%s3] sm:$0x3]
      %v264 = vperm.slane %v261, 0
      %v265 = vperm.slane %v261, 1
      %v268 = vmul.f32 %v206, %v264
      %v269 = vmul.f32 %v207, %v265
      %v272 = vrot.slane %v269, 7
      %v273 = vsel %vm258, %v268, %v272
      %v275 = vsub.f32 %v262, %v273
      %v276 = vmul.f32 %v188, %v264
      %v277 = vmul.f32 %v189, %v265
      %v278 = vmul.f32 %v190, %v264
      %v279 = vmul.f32 %v191, %v265
      %v281 = vperm.slane %v275, 0
      %v282 = vperm.slane %v275, 1
      %v285 = vadd.f32 %v276, %v281
      %v286 = vadd.f32 %v277, %v282
      %v287 = vadd.f32 %v278, %v281
      %v288 = vadd.f32 %v279, %v282
      %v289 = vmax.f32 %v285, 0.0
      %v290 = vmax.f32 %v286, 0.0
      %v291 = vmax.f32 %v287, 0.0
      %v292 = vmax.f32 %v288, 0.0
      %293 = vst [vmem:[%s4] sm:$0xff] %v289
      %294 = vst [vmem:[%s4 + $0x8] sm:$0xff] %v290
      %295 = vst [vmem:[%s4 + $0x10] sm:$0xff] %v291
      %296 = vst [vmem:[%s4 + $0x18] sm:$0xff] %v292
    $region29: #{_lambda_.9} parent=1 // pred_fallthru
      _
    // Predicated region
    $region30: #{_lambda_.9} parent=1 // pred_check
      _
    $region31: #{_lambda_.9} parent=1 // pred_check_branch
      %298 = sbr.rel (0) target = $region33
    $region32: #{_lambda_.9} parent=1 // pred_region
      _
    $region33: #{_lambda_.9} parent=1 // pred_fallthru
      _
    // Predicated region
    $region34: #{_lambda_.9} parent=1 // pred_check
      _
    $region35: #{_lambda_.9} parent=1 // pred_check_branch
      %300 = sbr.rel (0) target = $region37
    $region36: #{_lambda_.9} parent=1 // pred_region
      _
    $region37: #{_lambda_.9} parent=1 // pred_fallthru
      _
    %301 = vsyncpa [#allocation3], 1

// kernel: _lambda_.10
$region0: #{_lambda_.10}
  #allocation0 [shape = 'u32[]', space=smem, size = 0x4, offset = 0x4, fixed_abs, tag = 'smem constant byte address 0x4 - core index']
  #allocation1 [shape = 'u32[72,128]{1,0:T(1,128)}', space=vmem, size = 0x9000, scoped, tag = 'internal scratch']
  %s0 = inlined_call_operand.vmem [shape: bf16[16,128], index: 0, kind: input, shape index: {}]
  %s1 = inlined_call_operand.hbm [shape: bf16[128,896], index: 1, kind: input, shape index: {}]
  %s2 = inlined_call_operand.vmem [shape: f32[16,896], index: 2, kind: output, shape index: {}]
  %s3 = sld [smem:[#allocation0]]
  $region26: #{_lambda_.10} parent=0
    _
  %s5 = ssub.s32 1, %s3
  %s6 = scalar_select 0, %s5, %s3
  $region1: #{_lambda_.10} parent=0
    #allocation2 [shape = 'u8[229376]{0}', space=vmem, size = 0x38000, scoped, tag = 'input window, operand 1, single buffered']
    #allocation3 [shape = 's32[1]{0}', space=sflag, size = 0x4, scoped, tag = 'scoped memory for _lambda_.10']
    %7 = vsyncpa [#allocation3], 0
    // Predicated region
    $region2: #{_lambda_.10} parent=1 // pred_check
      _
    $region3: #{_lambda_.10} parent=1 // pred_check_branch
      %9 = sbr.rel (0) target = $region5
    $region4: #{_lambda_.10} parent=1 // pred_region
      _
    $region5: #{_lambda_.10} parent=1 // pred_fallthru
      _
    // Predicated region
    $region6: #{_lambda_.10} parent=1 // pred_check
      _
    $region7: #{_lambda_.10} parent=1 // pred_check_branch
      %11 = sbr.rel (0) target = $region9
    $region8: #{_lambda_.10} parent=1 // pred_region
      %13 = vsyncadd [#allocation3], 0
      %s14 = sshll.u32 %s1, 4
      %s15 = int_to_ptr.hbm [resolvable:$true] %s14
      %s16 = sshll.u32 [#allocation2], 4
      %s17 = int_to_ptr.vmem [resolvable:$true] %s16
      %22 = dma.hbm_to_vmem [thread:$0]  %s15, 7168, %s17, [#allocation3], 448, 448, 28
    $region9: #{_lambda_.10} parent=1 // pred_fallthru
      _
    // Predicated region
    $region10: #{_lambda_.10} parent=1 // pred_check
      _
    $region11: #{_lambda_.10} parent=1 // pred_check_branch
      %24 = sbr.rel (0) target = $region13
    $region12: #{_lambda_.10} parent=1 // pred_region
      %26 = dma.done [#allocation3], 7168
    $region13: #{_lambda_.10} parent=1 // pred_fallthru
      _
    %p27 = scmp.eq.s32.totalorder 0, 0
    // Predicated region
    $region14: #{_lambda_.10} parent=1 // pred_check
      %p28 = pneg %p27
    $region15: #{_lambda_.10} parent=1 // pred_check_branch
      %30 = sbr.rel (%p28) target = $region17
    $region16: #{_lambda_.10} parent=1 // pred_region
      %31 = vst [vmem:[%s2] sm:$0xff] 0.0
      %32 = vst [vmem:[%s2 + $0x8] sm:$0xff] 0.0
      %33 = vst [vmem:[%s2 + $0x10] sm:$0xff] 0.0
      %34 = vst [vmem:[%s2 + $0x18] sm:$0xff] 0.0
      %35 = vst [vmem:[%s2 + $0x20] sm:$0xff] 0.0
      %36 = vst [vmem:[%s2 + $0x28] sm:$0xff] 0.0
      %37 = vst [vmem:[%s2 + $0x30] sm:$0xff] 0.0
      %38 = vst [vmem:[%s2 + $0x38] sm:$0xff] 0.0
      %39 = vst [vmem:[%s2 + $0x40] sm:$0xff] 0.0
      %40 = vst [vmem:[%s2 + $0x48] sm:$0xff] 0.0
      %41 = vst [vmem:[%s2 + $0x50] sm:$0xff] 0.0
      %42 = vst [vmem:[%s2 + $0x58] sm:$0xff] 0.0
      %43 = vst [vmem:[%s2 + $0x60] sm:$0xff] 0.0
      %44 = vst [vmem:[%s2 + $0x68] sm:$0xff] 0.0
    $region17: #{_lambda_.10} parent=1 // pred_fallthru
      _
    %v45 = vld [vmem:[%s2] sm:$0xff]
    %v46 = vld [vmem:[%s2 + $0x8] sm:$0xff]
    %v47 = vld [vmem:[%s2 + $0x10] sm:$0xff]
    %v48 = vld [vmem:[%s2 + $0x18] sm:$0xff]
    %v49 = vld [vmem:[%s2 + $0x20] sm:$0xff]
    %v50 = vld [vmem:[%s2 + $0x28] sm:$0xff]
    %v51 = vld [vmem:[%s2 + $0x30] sm:$0xff]
    %v52 = vld [vmem:[%s2 + $0x38] sm:$0xff]
    %v53 = vld [vmem:[%s2 + $0x40] sm:$0xff]
    %v54 = vld [vmem:[%s2 + $0x48] sm:$0xff]
    %v55 = vld [vmem:[%s2 + $0x50] sm:$0xff]
    %v56 = vld [vmem:[%s2 + $0x58] sm:$0xff]
    %v57 = vld [vmem:[%s2 + $0x60] sm:$0xff]
    %v58 = vld [vmem:[%s2 + $0x68] sm:$0xff]
    %v59 = vld [vmem:[%s0] sm:$0xf]
    %v60 = vld [vmem:[%s0 + $0x4] sm:$0xf]
    %v61 = vld [vmem:[#allocation2] sm:$0xff]
    %v62 = vld [vmem:[#allocation2 + $0x8] sm:$0xff]
    %v63 = vld [vmem:[#allocation2 + $0x10] sm:$0xff]
    %v64 = vld [vmem:[#allocation2 + $0x18] sm:$0xf]
    %v65 = vld [vmem:[#allocation2 + $0x1c] sm:$0xff]
    %v66 = vld [vmem:[#allocation2 + $0x24] sm:$0xff]
    %v67 = vld [vmem:[#allocation2 + $0x2c] sm:$0xff]
    %v68 = vld [vmem:[#allocation2 + $0x34] sm:$0xf]
    %v69 = vld [vmem:[#allocation2 + $0x38] sm:$0xff]
    %v70 = vld [vmem:[#allocation2 + $0x40] sm:$0xff]
    %v71 = vld [vmem:[#allocation2 + $0x48] sm:$0xff]
    %v72 = vld [vmem:[#allocation2 + $0x50] sm:$0xf]
    %v73 = vld [vmem:[#allocation2 + $0x54] sm:$0xff]
    %v74 = vld [vmem:[#allocation2 + $0x5c] sm:$0xff]
    %v75 = vld [vmem:[#allocation2 + $0x64] sm:$0xff]
    %v76 = vld [vmem:[#allocation2 + $0x6c] sm:$0xf]
    %v77 = vld [vmem:[#allocation2 + $0x70] sm:$0xff]
    %v78 = vld [vmem:[#allocation2 + $0x78] sm:$0xff]
    %v79 = vld [vmem:[#allocation2 + $0x80] sm:$0xff]
    %v80 = vld [vmem:[#allocation2 + $0x88] sm:$0xf]
    %v81 = vld [vmem:[#allocation2 + $0x8c] sm:$0xff]
    %v82 = vld [vmem:[#allocation2 + $0x94] sm:$0xff]
    %v83 = vld [vmem:[#allocation2 + $0x9c] sm:$0xff]
    %v84 = vld [vmem:[#allocation2 + $0xa4] sm:$0xf]
    %v85 = vld [vmem:[#allocation2 + $0xa8] sm:$0xff]
    %v86 = vld [vmem:[#allocation2 + $0xb0] sm:$0xff]
    %v87 = vld [vmem:[#allocation2 + $0xb8] sm:$0xff]
    %v88 = vld [vmem:[#allocation2 + $0xc0] sm:$0xf]
    %v89 = vld [vmem:[#allocation2 + $0xc4] sm:$0xff]
    %v90 = vld [vmem:[#allocation2 + $0xcc] sm:$0xff]
    %v91 = vld [vmem:[#allocation2 + $0xd4] sm:$0xff]
    %v92 = vld [vmem:[#allocation2 + $0xdc] sm:$0xf]
    %v93 = vld [vmem:[#allocation2 + $0xe0] sm:$0xff]
    %v94 = vld [vmem:[#allocation2 + $0xe8] sm:$0xff]
    %v95 = vld [vmem:[#allocation2 + $0xf0] sm:$0xff]
    %v96 = vld [vmem:[#allocation2 + $0xf8] sm:$0xf]
    %v97 = vld [vmem:[#allocation2 + $0xfc] sm:$0xff]
    %v98 = vld [vmem:[#allocation2 + $0x104] sm:$0xff]
    %v99 = vld [vmem:[#allocation2 + $0x10c] sm:$0xff]
    %v100 = vld [vmem:[#allocation2 + $0x114] sm:$0xf]
    %v101 = vld [vmem:[#allocation2 + $0x118] sm:$0xff]
    %v102 = vld [vmem:[#allocation2 + $0x120] sm:$0xff]
    %v103 = vld [vmem:[#allocation2 + $0x128] sm:$0xff]
    %v104 = vld [vmem:[#allocation2 + $0x130] sm:$0xf]
    %v105 = vld [vmem:[#allocation2 + $0x134] sm:$0xff]
    %v106 = vld [vmem:[#allocation2 + $0x13c] sm:$0xff]
    %v107 = vld [vmem:[#allocation2 + $0x144] sm:$0xff]
    %v108 = vld [vmem:[#allocation2 + $0x14c] sm:$0xf]
    %v109 = vld [vmem:[#allocation2 + $0x150] sm:$0xff]
    %v110 = vld [vmem:[#allocation2 + $0x158] sm:$0xff]
    %v111 = vld [vmem:[#allocation2 + $0x160] sm:$0xff]
    %v112 = vld [vmem:[#allocation2 + $0x168] sm:$0xf]
    %v113 = vld [vmem:[#allocation2 + $0x16c] sm:$0xff]
    %v114 = vld [vmem:[#allocation2 + $0x174] sm:$0xff]
    %v115 = vld [vmem:[#allocation2 + $0x17c] sm:$0xff]
    %v116 = vld [vmem:[#allocation2 + $0x184] sm:$0xf]
    %v117 = vld [vmem:[#allocation2 + $0x188] sm:$0xff]
    %v118 = vld [vmem:[#allocation2 + $0x190] sm:$0xff]
    %v119 = vld [vmem:[#allocation2 + $0x198] sm:$0xff]
    %v120 = vld [vmem:[#allocation2 + $0x1a0] sm:$0xf]
    %v121 = vld [vmem:[#allocation2 + $0x1a4] sm:$0xff]
    %v122 = vld [vmem:[#allocation2 + $0x1ac] sm:$0xff]
    %v123 = vld [vmem:[#allocation2 + $0x1b4] sm:$0xff]
    %v124 = vld [vmem:[#allocation2 + $0x1bc] sm:$0xf]
    %v127 = vunpack.c.l.b16 %v59
    %v128 = vunpack.c.l.b16 %v60
    %v129 = vpack.c.b16 %v128, %v127
    %v195 = vunpack.c.l.b16 %v61
    %v196 = vunpack.c.h.b16 %v61
    %v197 = vunpack.c.l.b16 %v62
    %v198 = vunpack.c.h.b16 %v62
    %v199 = vunpack.c.l.b16 %v63
    %v200 = vunpack.c.h.b16 %v63
    %v201 = vunpack.c.l.b16 %v64
    %v202 = vunpack.c.l.b16 %v65
    %v203 = vunpack.c.h.b16 %v65
    %v204 = vunpack.c.l.b16 %v66
    %v205 = vunpack.c.h.b16 %v66
    %v206 = vunpack.c.l.b16 %v67
    %v207 = vunpack.c.h.b16 %v67
    %v208 = vunpack.c.l.b16 %v68
    %v209 = vunpack.c.l.b16 %v69
    %v210 = vunpack.c.h.b16 %v69
    %v211 = vunpack.c.l.b16 %v70
    %v212 = vunpack.c.h.b16 %v70
    %v213 = vunpack.c.l.b16 %v71
    %v214 = vunpack.c.h.b16 %v71
    %v215 = vunpack.c.l.b16 %v72
    %v216 = vunpack.c.l.b16 %v73
    %v217 = vunpack.c.h.b16 %v73
    %v218 = vunpack.c.l.b16 %v74
    %v219 = vunpack.c.h.b16 %v74
    %v220 = vunpack.c.l.b16 %v75
    %v221 = vunpack.c.h.b16 %v75
    %v222 = vunpack.c.l.b16 %v76
    %v223 = vunpack.c.l.b16 %v77
    %v224 = vunpack.c.h.b16 %v77
    %v225 = vunpack.c.l.b16 %v78
    %v226 = vunpack.c.h.b16 %v78
    %v227 = vunpack.c.l.b16 %v79
    %v228 = vunpack.c.h.b16 %v79
    %v229 = vunpack.c.l.b16 %v80
    %v230 = vunpack.c.l.b16 %v81
    %v231 = vunpack.c.h.b16 %v81
    %v232 = vunpack.c.l.b16 %v82
    %v233 = vunpack.c.h.b16 %v82
    %v234 = vunpack.c.l.b16 %v83
    %v235 = vunpack.c.h.b16 %v83
    %v236 = vunpack.c.l.b16 %v84
    %v237 = vunpack.c.l.b16 %v85
    %v238 = vunpack.c.h.b16 %v85
    %v239 = vunpack.c.l.b16 %v86
    %v240 = vunpack.c.h.b16 %v86
    %v241 = vunpack.c.l.b16 %v87
    %v242 = vunpack.c.h.b16 %v87
    %v243 = vunpack.c.l.b16 %v88
    %v244 = vunpack.c.l.b16 %v89
    %v245 = vunpack.c.h.b16 %v89
    %v246 = vunpack.c.l.b16 %v90
    %v247 = vunpack.c.h.b16 %v90
    %v248 = vunpack.c.l.b16 %v91
    %v249 = vunpack.c.h.b16 %v91
    %v250 = vunpack.c.l.b16 %v92
    %v251 = vunpack.c.l.b16 %v93
    %v252 = vunpack.c.h.b16 %v93
    %v253 = vunpack.c.l.b16 %v94
    %v254 = vunpack.c.h.b16 %v94
    %v255 = vunpack.c.l.b16 %v95
    %v256 = vunpack.c.h.b16 %v95
    %v257 = vunpack.c.l.b16 %v96
    %v258 = vunpack.c.l.b16 %v97
    %v259 = vunpack.c.h.b16 %v97
    %v260 = vunpack.c.l.b16 %v98
    %v261 = vunpack.c.h.b16 %v98
    %v262 = vunpack.c.l.b16 %v99
    %v263 = vunpack.c.h.b16 %v99
    %v264 = vunpack.c.l.b16 %v100
    %v265 = vunpack.c.l.b16 %v101
    %v266 = vunpack.c.h.b16 %v101
    %v267 = vunpack.c.l.b16 %v102
    %v268 = vunpack.c.h.b16 %v102
    %v269 = vunpack.c.l.b16 %v103
    %v270 = vunpack.c.h.b16 %v103
    %v271 = vunpack.c.l.b16 %v104
    %v272 = vunpack.c.l.b16 %v105
    %v273 = vunpack.c.h.b16 %v105
    %v274 = vunpack.c.l.b16 %v106
    %v275 = vunpack.c.h.b16 %v106
    %v276 = vunpack.c.l.b16 %v107
    %v277 = vunpack.c.h.b16 %v107
    %v278 = vunpack.c.l.b16 %v108
    %v279 = vunpack.c.l.b16 %v109
    %v280 = vunpack.c.h.b16 %v109
    %v281 = vunpack.c.l.b16 %v110
    %v282 = vunpack.c.h.b16 %v110
    %v283 = vunpack.c.l.b16 %v111
    %v284 = vunpack.c.h.b16 %v111
    %v285 = vunpack.c.l.b16 %v112
    %v286 = vunpack.c.l.b16 %v113
    %v287 = vunpack.c.h.b16 %v113
    %v288 = vunpack.c.l.b16 %v114
    %v289 = vunpack.c.h.b16 %v114
    %v290 = vunpack.c.l.b16 %v115
    %v291 = vunpack.c.h.b16 %v115
    %v292 = vunpack.c.l.b16 %v116
    %v293 = vunpack.c.l.b16 %v117
    %v294 = vunpack.c.h.b16 %v117
    %v295 = vunpack.c.l.b16 %v118
    %v296 = vunpack.c.h.b16 %v118
    %v297 = vunpack.c.l.b16 %v119
    %v298 = vunpack.c.h.b16 %v119
    %v299 = vunpack.c.l.b16 %v120
    %v300 = vunpack.c.l.b16 %v121
    %v301 = vunpack.c.h.b16 %v121
    %v302 = vunpack.c.l.b16 %v122
    %v303 = vunpack.c.h.b16 %v122
    %v304 = vunpack.c.l.b16 %v123
    %v305 = vunpack.c.h.b16 %v123
    %v306 = vunpack.c.l.b16 %v124
    %v307 = vpack.c.b16 %v202, %v195
    %v308 = vpack.c.b16 %v203, %v196
    %v309 = vpack.c.b16 %v204, %v197
    %v310 = vpack.c.b16 %v205, %v198
    %v311 = vpack.c.b16 %v206, %v199
    %v312 = vpack.c.b16 %v207, %v200
    %v313 = vpack.c.b16 %v208, %v201
    %v314 = vpack.c.b16 %v216, %v209
    %v315 = vpack.c.b16 %v217, %v210
    %v316 = vpack.c.b16 %v218, %v211
    %v317 = vpack.c.b16 %v219, %v212
    %v318 = vpack.c.b16 %v220, %v213
    %v319 = vpack.c.b16 %v221, %v214
    %v320 = vpack.c.b16 %v222, %v215
    %v321 = vpack.c.b16 %v230, %v223
    %v322 = vpack.c.b16 %v231, %v224
    %v323 = vpack.c.b16 %v232, %v225
    %v324 = vpack.c.b16 %v233, %v226
    %v325 = vpack.c.b16 %v234, %v227
    %v326 = vpack.c.b16 %v235, %v228
    %v327 = vpack.c.b16 %v236, %v229
    %v328 = vpack.c.b16 %v244, %v237
    %v329 = vpack.c.b16 %v245, %v238
    %v330 = vpack.c.b16 %v246, %v239
    %v331 = vpack.c.b16 %v247, %v240
    %v332 = vpack.c.b16 %v248, %v241
    %v333 = vpack.c.b16 %v249, %v242
    %v334 = vpack.c.b16 %v250, %v243
    %v335 = vpack.c.b16 %v258, %v251
    %v336 = vpack.c.b16 %v259, %v252
    %v337 = vpack.c.b16 %v260, %v253
    %v338 = vpack.c.b16 %v261, %v254
    %v339 = vpack.c.b16 %v262, %v255
    %v340 = vpack.c.b16 %v263, %v256
    %v341 = vpack.c.b16 %v264, %v257
    %v342 = vpack.c.b16 %v272, %v265
    %v343 = vpack.c.b16 %v273, %v266
    %v344 = vpack.c.b16 %v274, %v267
    %v345 = vpack.c.b16 %v275, %v268
    %v346 = vpack.c.b16 %v276, %v269
    %v347 = vpack.c.b16 %v277, %v270
    %v348 = vpack.c.b16 %v278, %v271
    %v349 = vpack.c.b16 %v286, %v279
    %v350 = vpack.c.b16 %v287, %v280
    %v351 = vpack.c.b16 %v288, %v281
    %v352 = vpack.c.b16 %v289, %v282
    %v353 = vpack.c.b16 %v290, %v283
    %v354 = vpack.c.b16 %v291, %v284
    %v355 = vpack.c.b16 %v292, %v285
    %v356 = vpack.c.b16 %v300, %v293
    %v357 = vpack.c.b16 %v301, %v294
    %v358 = vpack.c.b16 %v302, %v295
    %v359 = vpack.c.b16 %v303, %v296
    %v360 = vpack.c.b16 %v304, %v297
    %v361 = vpack.c.b16 %v305, %v298
    %v362 = vpack.c.b16 %v306, %v299
    %419 = vmatpush.bf16.msra.mxu0 %v356
    %420 = vmatpush.bf16.msra.mxu0 %v349
    %421 = vmatpush.bf16.msra.mxu0 %v342
    %422 = vmatpush.bf16.msra.mxu0 %v335
    %423 = vmatpush.bf16.msra.mxu0 %v328
    %424 = vmatpush.bf16.msra.mxu0 %v321
    %425 = vmatpush.bf16.msra.mxu0 %v314
    %426 = vmatpush.bf16.msra.mxu0 %v307
    %427 = vmatmul.bf16.gmra.mxu0 %v129
    %v428 = vpop.f32.mrf.mxu0
    %v429 = vadd.f32 0.0, %v428
    %v430 = vpop.f32.mrf.mxu0
    %v431 = vadd.f32 0.0, %v430
    %432 = vdwg.mxu0
    %433 = vmatpush.bf16.msra.mxu0 %v357
    %434 = vmatpush.bf16.msra.mxu0 %v350
    %435 = vmatpush.bf16.msra.mxu0 %v343
    %436 = vmatpush.bf16.msra.mxu0 %v336
    %437 = vmatpush.bf16.msra.mxu0 %v329
    %438 = vmatpush.bf16.msra.mxu0 %v322
    %439 = vmatpush.bf16.msra.mxu0 %v315
    %440 = vmatpush.bf16.msra.mxu0 %v308
    %441 = vmatmul.bf16.gmra.mxu0 %v129
    %v442 = vpop.f32.mrf.mxu0
    %v443 = vadd.f32 0.0, %v442
    %v444 = vpop.f32.mrf.mxu0
    %v445 = vadd.f32 0.0, %v444
    %446 = vdwg.mxu0
    %447 = vmatpush.bf16.msra.mxu0 %v358
    %448 = vmatpush.bf16.msra.mxu0 %v351
    %449 = vmatpush.bf16.msra.mxu0 %v344
    %450 = vmatpush.bf16.msra.mxu0 %v337
    %451 = vmatpush.bf16.msra.mxu0 %v330
    %452 = vmatpush.bf16.msra.mxu0 %v323
    %453 = vmatpush.bf16.msra.mxu0 %v316
    %454 = vmatpush.bf16.msra.mxu0 %v309
    %455 = vmatmul.bf16.gmra.mxu0 %v129
    %v456 = vpop.f32.mrf.mxu0
    %v457 = vadd.f32 0.0, %v456
    %v458 = vpop.f32.mrf.mxu0
    %v459 = vadd.f32 0.0, %v458
    %460 = vdwg.mxu0
    %461 = vmatpush.bf16.msra.mxu0 %v359
    %462 = vmatpush.bf16.msra.mxu0 %v352
    %463 = vmatpush.bf16.msra.mxu0 %v345
    %464 = vmatpush.bf16.msra.mxu0 %v338
    %465 = vmatpush.bf16.msra.mxu0 %v331
    %466 = vmatpush.bf16.msra.mxu0 %v324
    %467 = vmatpush.bf16.msra.mxu0 %v317
    %468 = vmatpush.bf16.msra.mxu0 %v310
    %469 = vmatmul.bf16.gmra.mxu0 %v129
    %v470 = vpop.f32.mrf.mxu0
    %v471 = vadd.f32 0.0, %v470
    %v472 = vpop.f32.mrf.mxu0
    %v473 = vadd.f32 0.0, %v472
    %474 = vdwg.mxu0
    %475 = vmatpush.bf16.msra.mxu0 %v360
    %476 = vmatpush.bf16.msra.mxu0 %v353
    %477 = vmatpush.bf16.msra.mxu0 %v346
    %478 = vmatpush.bf16.msra.mxu0 %v339
    %479 = vmatpush.bf16.msra.mxu0 %v332
    %480 = vmatpush.bf16.msra.mxu0 %v325
    %481 = vmatpush.bf16.msra.mxu0 %v318
    %482 = vmatpush.bf16.msra.mxu0 %v311
    %483 = vmatmul.bf16.gmra.mxu0 %v129
    %v484 = vpop.f32.mrf.mxu0
    %v485 = vadd.f32 0.0, %v484
    %v486 = vpop.f32.mrf.mxu0
    %v487 = vadd.f32 0.0, %v486
    %488 = vdwg.mxu0
    %489 = vmatpush.bf16.msra.mxu0 %v361
    %490 = vmatpush.bf16.msra.mxu0 %v354
    %491 = vmatpush.bf16.msra.mxu0 %v347
    %492 = vmatpush.bf16.msra.mxu0 %v340
    %493 = vmatpush.bf16.msra.mxu0 %v333
    %494 = vmatpush.bf16.msra.mxu0 %v326
    %495 = vmatpush.bf16.msra.mxu0 %v319
    %496 = vmatpush.bf16.msra.mxu0 %v312
    %497 = vmatmul.bf16.gmra.mxu0 %v129
    %v498 = vpop.f32.mrf.mxu0
    %v499 = vadd.f32 0.0, %v498
    %v500 = vpop.f32.mrf.mxu0
    %v501 = vadd.f32 0.0, %v500
    %502 = vdwg.mxu0
    %503 = vmatpush.bf16.msra.mxu0 %v362
    %504 = vmatpush.bf16.msra.mxu0 %v355
    %505 = vmatpush.bf16.msra.mxu0 %v348
    %506 = vmatpush.bf16.msra.mxu0 %v341
    %507 = vmatpush.bf16.msra.mxu0 %v334
    %508 = vmatpush.bf16.msra.mxu0 %v327
    %509 = vmatpush.bf16.msra.mxu0 %v320
    %510 = vmatpush.bf16.msra.mxu0 %v313
    %511 = vmatmul.bf16.gmra.mxu0 %v129
    %v512 = vpop.f32.mrf.mxu0
    %v513 = vadd.f32 0.0, %v512
    %v514 = vpop.f32.mrf.mxu0
    %v515 = vadd.f32 0.0, %v514
    %516 = vdwg.mxu0
    %v517 = vadd.f32 %v45, %v429
    %v518 = vadd.f32 %v46, %v443
    %v519 = vadd.f32 %v47, %v457
    %v520 = vadd.f32 %v48, %v471
    %v521 = vadd.f32 %v49, %v485
    %v522 = vadd.f32 %v50, %v499
    %v523 = vadd.f32 %v51, %v513
    %v524 = vadd.f32 %v52, %v431
    %v525 = vadd.f32 %v53, %v445
    %v526 = vadd.f32 %v54, %v459
    %v527 = vadd.f32 %v55, %v473
    %v528 = vadd.f32 %v56, %v487
    %v529 = vadd.f32 %v57, %v501
    %v530 = vadd.f32 %v58, %v515
    %531 = vst [vmem:[%s2] sm:$0xff] %v517
    %532 = vst [vmem:[%s2 + $0x8] sm:$0xff] %v518
    %533 = vst [vmem:[%s2 + $0x10] sm:$0xff] %v519
    %534 = vst [vmem:[%s2 + $0x18] sm:$0xff] %v520
    %535 = vst [vmem:[%s2 + $0x20] sm:$0xff] %v521
    %536 = vst [vmem:[%s2 + $0x28] sm:$0xff] %v522
    %537 = vst [vmem:[%s2 + $0x30] sm:$0xff] %v523
    %538 = vst [vmem:[%s2 + $0x38] sm:$0xff] %v524
    %539 = vst [vmem:[%s2 + $0x40] sm:$0xff] %v525
    %540 = vst [vmem:[%s2 + $0x48] sm:$0xff] %v526
    %541 = vst [vmem:[%s2 + $0x50] sm:$0xff] %v527
    %542 = vst [vmem:[%s2 + $0x58] sm:$0xff] %v528
    %543 = vst [vmem:[%s2 + $0x60] sm:$0xff] %v529
    %544 = vst [vmem:[%s2 + $0x68] sm:$0xff] %v530
    // Predicated region
    $region18: #{_lambda_.10} parent=1 // pred_check
      _
    $region19: #{_lambda_.10} parent=1 // pred_check_branch
      %546 = sbr.rel (0) target = $region21
    $region20: #{_lambda_.10} parent=1 // pred_region
      _
    $region21: #{_lambda_.10} parent=1 // pred_fallthru
      _
    // Predicated region
    $region22: #{_lambda_.10} parent=1 // pred_check
      _
    $region23: #{_lambda_.10} parent=1 // pred_check_branch
      %548 = sbr.rel (0) target = $region25
    $region24: #{_lambda_.10} parent=1 // pred_region
      _
    $region25: #{_lambda_.10} parent=1 // pred_fallthru
      _
    %549 = vsyncpa [#allocation3], 1

// kernel: _lambda_.11
$region0: #{_lambda_.11}
  #allocation0 [shape = 'u32[]', space=smem, size = 0x4, offset = 0x4, fixed_abs, tag = 'smem constant byte address 0x4 - core index']
  #allocation1 [shape = 'u32[72,128]{1,0:T(1,128)}', space=vmem, size = 0x9000, scoped, tag = 'internal scratch']
  #allocation2 [shape = 'f32[1,128]{1,0:T(1,128)}', space=vmem, size = 0x200, scoped, tag = 'scratch operand']
  #allocation3 [shape = 'f32[1,128]{1,0:T(1,128)}', space=vmem, size = 0x200, scoped, tag = 'scratch operand']
  %s0 = inlined_call_operand.vmem [shape: f32[32,128], index: 0, kind: input, shape index: {}]
  %s1 = inlined_call_operand.vmem [shape: f32[1,128], index: 1, kind: input, shape index: {}]
  %s2 = inlined_call_operand.vmem [shape: f32[1,128], index: 2, kind: input, shape index: {}]
  %s3 = inlined_call_operand.vmem [shape: bf16[32,128], index: 3, kind: output, shape index: {}]
  %s4 = sld [smem:[#allocation0]]
  $region61: #{_lambda_.11} parent=0
    _
  %s6 = ssub.s32 1, %s4
  %s7 = scalar_select 0, %s6, %s4
  loop: start=0, step=1, limit=4
  $region2: #{_lambda_.11} parent=0 // loop_pre_header
    _
  $region3: #{_lambda_.11} parent=0 // loop_header
    %s9 = sphi 0, %s13
    %p10 = scmp.ge.s32.totalorder %s9, 4
    %s16 = sphi 0, %s28
    %s17 = sphi 0, %s24
    %s18 = sphi 0, %s16
    %s19 = sphi 0, %s17
    %s20 = sphi 0, %s18
    %s21 = sphi 0, %s19
    %s31 = sphi 0, %s33
    %s34 = sphi 0, %s31
    %s35 = sphi 0, %s34
    %s51 = sphi 0, %s35
    %s55 = sphi 0, %s55
    %s57 = sphi 0, %s55
    %s58 = sphi 0, %s57
    %s72 = sphi 0, %s58
    %s76 = sphi 0, %s76
    %s78 = sphi 0, %s76
    %s79 = sphi 0, %s78
    %s93 = sphi 0, %s79
    %s99 = sphi 0, %s101
    %s102 = sphi 0, %s99
    %s103 = sphi 0, %s102
    %s119 = sphi 0, %s103
  $region4: #{_lambda_.11} parent=0 // loop_header_branch
    %12 = sbr.rel (%p10) target = $region8
  $region5: #{_lambda_.11} parent=0 // loop_body
    %s14 = ssub.s32 %s9, 1
    %s15 = ssub.s32 %s9, 2
    %s22 = sadd.s32 1, %s17
    %p23 = scmp.ge.s32.totalorder %s22, 1
    %s24 = scalar_select %p23, 0, %s22
    %s25 = sadd.s32 1, %s16
    %s26 = scalar_select %p23, %s25, %s16
    %p27 = scmp.ge.s32.totalorder %s26, 2
    %s28 = scalar_select %p27, 0, %s26
    %s29 = ssub.s32 %s17, %s24
    %p30 = scmp.eq.s32.totalorder %s29, 0
    %s32 = sadd.s32 %s31, 1
    %s33 = scalar_select %p30, %s31, %s32
    %p36 = pneg %p30
    %p37 = scmp.eq.s32.totalorder %s9, 1
    %p38 = por %p36, %p37
    %p39 = scmp.ne.s32.totalorder %s31, %s34
    %p40 = scmp.eq.s32.totalorder %s9, 0
    %p41 = por %p39, %p40
    %p42 = scmp.ne.s32.totalorder %s31, %s34
    %p43 = scmp.eq.s32.totalorder %s14, 1
    %p44 = por %p42, %p43
    %p45 = scmp.ne.s32.totalorder %s34, %s35
    %p46 = scmp.eq.s32.totalorder %s14, 0
    %p47 = por %p45, %p46
    %p48 = scmp.ne.s32.totalorder %s34, %s35
    %p49 = scmp.eq.s32.totalorder %s15, 1
    %p50 = por %p48, %p49
    %p52 = scmp.ne.s32.totalorder %s35, %s51
    %p53 = scmp.eq.s32.totalorder %s15, 0
    %p54 = por %p52, %p53
    %s56 = sadd.s32 %s55, 1
    %p59 = scmp.eq.s32.totalorder %s9, 1
    %p60 = scmp.ne.s32.totalorder %s55, %s57
    %p61 = scmp.eq.s32.totalorder %s9, 0
    %p62 = por %p60, %p61
    %p63 = scmp.ne.s32.totalorder %s55, %s57
    %p64 = scmp.eq.s32.totalorder %s14, 1
    %p65 = por %p63, %p64
    %p66 = scmp.ne.s32.totalorder %s57, %s58
    %p67 = scmp.eq.s32.totalorder %s14, 0
    %p68 = por %p66, %p67
    %p69 = scmp.ne.s32.totalorder %s57, %s58
    %p70 = scmp.eq.s32.totalorder %s15, 1
    %p71 = por %p69, %p70
    %p73 = scmp.ne.s32.totalorder %s58, %s72
    %p74 = scmp.eq.s32.totalorder %s15, 0
    %p75 = por %p73, %p74
    %s77 = sadd.s32 %s76, 1
    %p80 = scmp.eq.s32.totalorder %s9, 1
    %p81 = scmp.ne.s32.totalorder %s76, %s78
    %p82 = scmp.eq.s32.totalorder %s9, 0
    %p83 = por %p81, %p82
    %p84 = scmp.ne.s32.totalorder %s76, %s78
    %p85 = scmp.eq.s32.totalorder %s14, 1
    %p86 = por %p84, %p85
    %p87 = scmp.ne.s32.totalorder %s78, %s79
    %p88 = scmp.eq.s32.totalorder %s14, 0
    %p89 = por %p87, %p88
    %p90 = scmp.ne.s32.totalorder %s78, %s79
    %p91 = scmp.eq.s32.totalorder %s15, 1
    %p92 = por %p90, %p91
    %p94 = scmp.ne.s32.totalorder %s79, %s93
    %p95 = scmp.eq.s32.totalorder %s15, 0
    %p96 = por %p94, %p95
    %s97 = ssub.s32 %s17, %s24
    %p98 = scmp.eq.s32.totalorder %s97, 0
    %s100 = sadd.s32 %s99, 1
    %s101 = scalar_select %p98, %s99, %s100
    %p104 = pneg %p98
    %p105 = scmp.eq.s32.totalorder %s9, 1
    %p106 = por %p104, %p105
    %p107 = scmp.ne.s32.totalorder %s99, %s102
    %p108 = scmp.eq.s32.totalorder %s9, 0
    %p109 = por %p107, %p108
    %p110 = scmp.ne.s32.totalorder %s99, %s102
    %p111 = scmp.eq.s32.totalorder %s14, 1
    %p112 = por %p110, %p111
    %p113 = scmp.ne.s32.totalorder %s102, %s103
    %p114 = scmp.eq.s32.totalorder %s14, 0
    %p115 = por %p113, %p114
    %p116 = scmp.ne.s32.totalorder %s102, %s103
    %p117 = scmp.eq.s32.totalorder %s15, 1
    %p118 = por %p116, %p117
    %p120 = scmp.ne.s32.totalorder %s103, %s119
    %p121 = scmp.eq.s32.totalorder %s15, 0
    %p122 = por %p120, %p121
    %p123 = scmp.le.s32.totalorder 1, %s9
    %p124 = scmp.lt.s32.totalorder %s9, 3
    %p125 = pnand %p123, %p124
    %p126 = pneg %p125
    // Predicated region
    $region9: #{_lambda_.11} parent=5 // pred_check
      _
    $region10: #{_lambda_.11} parent=5 // pred_check_branch
      %128 = sbr.rel (%p125) target = $region12
    $region11: #{_lambda_.11} parent=5 // pred_region
      %s129 = ssub.s32 %s9, 1
      // Predicated region
      $region13: #{_lambda_.11} parent=11 // pred_check
        %p130 = pneg %p47
      $region14: #{_lambda_.11} parent=11 // pred_check_branch
        %132 = sbr.rel (%p130) target = $region16
      $region15: #{_lambda_.11} parent=11 // pred_region
        %s133 = smul.u32 4, %s19
        %p134 = scmp.lt.s32.totalorder %s133, 3
        %s135 = scalar_select %p134, %s133, 3
        %s136 = smul.addr %s135, 8
        %s137 = scalar_lea.vmem %s0, %s136
        %s138 = smul.u32 4, %s19
      $region16: #{_lambda_.11} parent=11 // pred_fallthru
        _
      // Predicated region
      $region17: #{_lambda_.11} parent=11 // pred_check
        %p139 = pneg %p68
      $region18: #{_lambda_.11} parent=11 // pred_check_branch
        %141 = sbr.rel (%p139) target = $region20
      $region19: #{_lambda_.11} parent=11 // pred_region
        _
      $region20: #{_lambda_.11} parent=11 // pred_fallthru
        _
      // Predicated region
      $region21: #{_lambda_.11} parent=11 // pred_check
        %p142 = pneg %p89
      $region22: #{_lambda_.11} parent=11 // pred_check_branch
        %144 = sbr.rel (%p142) target = $region24
      $region23: #{_lambda_.11} parent=11 // pred_region
        _
      $region24: #{_lambda_.11} parent=11 // pred_fallthru
        _
    $region12: #{_lambda_.11} parent=5 // pred_fallthru
      _
    %p145 = scmp.lt.s32.totalorder %s9, 2
    // Predicated region
    $region25: #{_lambda_.11} parent=5 // pred_check
      %p146 = pneg %p145
    $region26: #{_lambda_.11} parent=5 // pred_check_branch
      %148 = sbr.rel (%p146) target = $region28
    $region27: #{_lambda_.11} parent=5 // pred_region
      _
    $region28: #{_lambda_.11} parent=5 // pred_fallthru
      _
    %p149 = scmp.le.s32.totalorder 1, %s9
    %p150 = scmp.lt.s32.totalorder %s9, 3
    %p151 = pnand %p149, %p150
    %p152 = pneg %p151
    // Predicated region
    $region29: #{_lambda_.11} parent=5 // pred_check
      _
    $region30: #{_lambda_.11} parent=5 // pred_check_branch
      %154 = sbr.rel (%p151) target = $region32
    $region31: #{_lambda_.11} parent=5 // pred_region
      %s155 = ssub.s32 %s9, 1
      %s156 = smul.u32 4, %s19
      %p157 = scmp.lt.s32.totalorder %s156, 3
      %s158 = scalar_select %p157, %s156, 3
      %s159 = smul.addr %s158, 8
      %s160 = scalar_lea.vmem %s0, %s159
      %p161 = pneg %p47
      %p162 = pneg %p44
      %p163 = pneg %p68
      %p164 = pneg %p65
      %p165 = pneg %p89
      %p166 = pneg %p86
      %p167 = pneg %p115
      %p168 = pneg %p112
      %s169 = smul.u32 4, %s19
      %p170 = scmp.lt.s32.totalorder %s169, 3
      %s171 = scalar_select %p170, %s169, 3
      %s172 = smul.addr %s171, 4
      %s173 = scalar_lea.vmem %s3, %s172
      %s174 = smul.u32 4, %s19
      %p175 = scmp.lt.s32.totalorder %s174, 3
      %s176 = scalar_select %p175, %s174, 3
      %s177 = smul.addr %s176, 8
      %s178 = scalar_lea.vmem %s0, %s177
      %s179 = smul.u32 4, %s19
      %s180 = smul.u32 4, %s19
      %p181 = scmp.lt.s32.totalorder %s180, 3
      %s182 = scalar_select %p181, %s180, 3
      %s183 = smul.addr %s182, 4
      %s184 = scalar_lea.vmem %s3, %s183
      %s185 = smul.u32 4, %s19
      %p186 = scmp.eq.s32.totalorder %s18, 0
      %p187 = scmp.eq.s32.totalorder %s19, 0
      %p188 = pnand %p186, %p187
      %p189 = pneg %p188
      // Predicated region
      $region33: #{_lambda_.11} parent=31 // pred_check
        _
      $region34: #{_lambda_.11} parent=31 // pred_check_branch
        %191 = sbr.rel (%p188) target = $region36
      $region35: #{_lambda_.11} parent=31 // pred_region
        %192 = vst [vmem:[#allocation2] sm:$0x1] 0.0
        %193 = vst [vmem:[#allocation3] sm:$0x1] 0.0
      $region36: #{_lambda_.11} parent=31 // pred_fallthru
        _
      // Predicated region
      $region37: #{_lambda_.11} parent=31 // pred_check
        %p194 = pneg %p186
      $region38: #{_lambda_.11} parent=31 // pred_check_branch
        %196 = sbr.rel (%p194) target = $region40
      $region39: #{_lambda_.11} parent=31 // pred_region
        %v197 = vld [vmem:[%s178] sm:$0xff]
        %v198 = vld [vmem:[%s178 + $0x8] sm:$0xff]
        %v199 = vld [vmem:[%s178 + $0x10] sm:$0xff]
        %v200 = vld [vmem:[%s178 + $0x18] sm:$0xff]
        %v201 = vld [vmem:[#allocation2] sm:$0x1]
        %v202 = vadd.f32 %v197, %v198
        %v203 = vadd.f32 %v202, %v199
        %v204 = vadd.f32 %v203, %v200
        %v205 = vrot.slane %v204, 4
        %v206 = vadd.f32 %v204, %v205
        %v207 = vrot.slane %v206, 2
        %v208 = vadd.f32 %v206, %v207
        %v209 = vrot.slane %v208, 1
        %v210 = vadd.f32 %v208, %v209
        %v211 = vadd.f32 %v201, %v210
        %212 = vst [vmem:[#allocation2] sm:$0x1] %v211
        %v213 = vld [vmem:[#allocation3] sm:$0x1]
        %v214 = vmul.f32 %v197, %v197
        %v215 = vmul.f32 %v198, %v198
        %v216 = vmul.f32 %v199, %v199
        %v217 = vmul.f32 %v200, %v200
        %v218 = vadd.f32 %v214, %v215
        %v219 = vadd.f32 %v218, %v216
        %v220 = vadd.f32 %v219, %v217
        %v221 = vrot.slane %v220, 4
        %v222 = vadd.f32 %v220, %v221
        %v223 = vrot.slane %v222, 2
        %v224 = vadd.f32 %v222, %v223
        %v225 = vrot.slane %v224, 1
        %v226 = vadd.f32 %v224, %v225
        %v227 = vadd.f32 %v213, %v226
        %228 = vst [vmem:[#allocation3] sm:$0x1] %v227
        %v229 = vpack.c.bf16 %v197, %v197
        %v230 = vpack.c.bf16 %v198, %v198
        %v231 = vpack.c.bf16 %v199, %v199
        %v232 = vpack.c.bf16 %v200, %v200
        %233 = vst [vmem:[%s184] sm:$0xf] %v229
        %234 = vst [vmem:[%s184 + $0x4] sm:$0xf] %v230
        %235 = vst [vmem:[%s184 + $0x8] sm:$0xf] %v231
        %236 = vst [vmem:[%s184 + $0xc] sm:$0xf] %v232
      $region40: #{_lambda_.11} parent=31 // pred_fallthru
        _
      %p237 = scmp.eq.s32.totalorder %s18, 1
      %p238 = pnand %p237, %p187
      %p239 = pneg %p238
      // Predicated region
      $region41: #{_lambda_.11} parent=31 // pred_check
        _
      $region42: #{_lambda_.11} parent=31 // pred_check_branch
        %241 = sbr.rel (%p238) target = $region44
      $region43: #{_lambda_.11} parent=31 // pred_region
        %v242 = vld [vmem:[#allocation2] sm:$0x1]
        %v243 = vmul.f32 %v242, 0.03125
        %v244 = vld [vmem:[#allocation3] sm:$0x1]
        %v245 = vmul.f32 %v244, 0.03125
        %v246 = vmul.f32 %v243, %v243
        %v247 = vsub.f32 %v245, %v246
        %v248 = vld [vmem:[%s1] sm:$0x1]
        %v249 = vadd.f32 %v247, 1e-05
        %v250 = vrsqrt.pop %v249
        %v251 = vmul.f32 %v250, %v249
        %v252 = vmul.f32 %v251, %v250
        %v253 = vmul.f32 0.5, %v252
        %v254 = vsub.f32 1.5, %v253
        %v255 = vmul.f32 %v250, %v254
        %vm256 = vweird.f32 %v249
        %vm257 = vweird.f32 %v250
        %vm258 = vmor %vm256, %vm257
        %v259 = vsel %vm258, %v250, %v255
        %v260 = vmul.f32 %v248, %v259
        %261 = vst [vmem:[#allocation2] sm:$0x1] %v260
        %v262 = vld [vmem:[%s2] sm:$0x1]
        %v263 = vmul.f32 %v243, %v260
        %v264 = vsub.f32 %v262, %v263
        %265 = vst [vmem:[#allocation3] sm:$0x1] %v264
      $region44: #{_lambda_.11} parent=31 // pred_fallthru
        _
      // Predicated region
      $region45: #{_lambda_.11} parent=31 // pred_check
        %p266 = pneg %p237
      $region46: #{_lambda_.11} parent=31 // pred_check_branch
        %268 = sbr.rel (%p266) target = $region48
      $region47: #{_lambda_.11} parent=31 // pred_region
        %v269 = vld [vmem:[%s178] sm:$0xff]
        %v270 = vld [vmem:[%s178 + $0x8] sm:$0xff]
        %v271 = vld [vmem:[%s178 + $0x10] sm:$0xff]
        %v272 = vld [vmem:[%s178 + $0x18] sm:$0xff]
        %v273 = vld [vmem:[#allocation2] sm:$0x1]
        %v275 = vperm.slane %v273, 0
        %v277 = vmul.f32 %v269, %v275
        %v278 = vmul.f32 %v270, %v275
        %v279 = vmul.f32 %v271, %v275
        %v280 = vmul.f32 %v272, %v275
        %v281 = vld [vmem:[#allocation3] sm:$0x1]
        %v283 = vperm.slane %v281, 0
        %v285 = vadd.f32 %v277, %v283
        %v286 = vadd.f32 %v278, %v283
        %v287 = vadd.f32 %v279, %v283
        %v288 = vadd.f32 %v280, %v283
        %v289 = vmax.f32 %v285, 0.0
        %v290 = vmax.f32 %v286, 0.0
        %v291 = vmax.f32 %v287, 0.0
        %v292 = vmax.f32 %v288, 0.0
        %v293 = vpack.c.bf16 %v289, %v289
        %v294 = vpack.c.bf16 %v290, %v290
        %v295 = vpack.c.bf16 %v291, %v291
        %v296 = vpack.c.bf16 %v292, %v292
        %297 = vst [vmem:[%s184] sm:$0xf] %v293
        %298 = vst [vmem:[%s184 + $0x4] sm:$0xf] %v294
        %299 = vst [vmem:[%s184 + $0x8] sm:$0xf] %v295
        %300 = vst [vmem:[%s184 + $0xc] sm:$0xf] %v296
      $region48: #{_lambda_.11} parent=31 // pred_fallthru
        _
      %s301 = smul.u32 4, %s19
      %p302 = scmp.lt.s32.totalorder %s301, 3
      %s303 = scalar_select %p302, %s301, 3
      %s304 = smul.addr %s303, 4
      %s305 = scalar_lea.vmem %s3, %s304
      // Predicated region
      $region49: #{_lambda_.11} parent=31 // pred_check
        %p306 = pneg %p112
      $region50: #{_lambda_.11} parent=31 // pred_check_branch
        %308 = sbr.rel (%p306) target = $region52
      $region51: #{_lambda_.11} parent=31 // pred_region
        %s309 = smul.u32 4, %s19
      $region52: #{_lambda_.11} parent=31 // pred_fallthru
        _
      // Predicated region
      $region53: #{_lambda_.11} parent=31 // pred_check
        %p310 = pneg %p112
      $region54: #{_lambda_.11} parent=31 // pred_check_branch
        %312 = sbr.rel (%p310) target = $region56
      $region55: #{_lambda_.11} parent=31 // pred_region
        %s313 = smul.u32 4, %s19
        %p314 = scmp.lt.s32.totalorder %s313, 3
        %s315 = scalar_select %p314, %s313, 3
        %s316 = smul.addr %s315, 4
        %s317 = scalar_lea.vmem %s3, %s316
      $region56: #{_lambda_.11} parent=31 // pred_fallthru
        _
    $region32: #{_lambda_.11} parent=5 // pred_fallthru
      _
    %p318 = scmp.le.s32.totalorder 2, %s9
    // Predicated region
    $region57: #{_lambda_.11} parent=5 // pred_check
      %p319 = pneg %p318
    $region58: #{_lambda_.11} parent=5 // pred_check_branch
      %321 = sbr.rel (%p319) target = $region60
    $region59: #{_lambda_.11} parent=5 // pred_region
      %s322 = ssub.s32 %s9, 2
    $region60: #{_lambda_.11} parent=5 // pred_fallthru
      _
  $region6: #{_lambda_.11} parent=0 // loop_footer
    %s13 = sadd.s32 1, %s9
  $region7: #{_lambda_.11} parent=0 // loop_footer_branch
    %8 = sbr.rel target = $region3
  $region8: #{_lambda_.11} parent=0 // loop_exit
    _

// kernel: _lambda_.12
$region0: #{_lambda_.12}
  #allocation0 [shape = 'u32[]', space=smem, size = 0x4, offset = 0x4, fixed_abs, tag = 'smem constant byte address 0x4 - core index']
  #allocation1 [shape = 'u32[72,128]{1,0:T(1,128)}', space=vmem, size = 0x9000, scoped, tag = 'internal scratch']
  %s0 = inlined_call_operand.vmem [shape: bf16[32,128], index: 0, kind: input, shape index: {}]
  %s1 = inlined_call_operand.vmem [shape: bf16[128,512], index: 1, kind: input, shape index: {}]
  %s2 = inlined_call_operand.vmem [shape: f32[32,512], index: 2, kind: output, shape index: {}]
  %s3 = sld [smem:[#allocation0]]
  $region22: #{_lambda_.12} parent=0
    _
  %s5 = ssub.s32 1, %s3
  %s6 = scalar_select 0, %s5, %s3
  // Predicated region
  $region2: #{_lambda_.12} parent=0 // pred_check
    _
  $region3: #{_lambda_.12} parent=0 // pred_check_branch
    %8 = sbr.rel (0) target = $region5
  $region4: #{_lambda_.12} parent=0 // pred_region
    _
  $region5: #{_lambda_.12} parent=0 // pred_fallthru
    _
  // Predicated region
  $region6: #{_lambda_.12} parent=0 // pred_check
    _
  $region7: #{_lambda_.12} parent=0 // pred_check_branch
    %10 = sbr.rel (0) target = $region9
  $region8: #{_lambda_.12} parent=0 // pred_region
    _
  $region9: #{_lambda_.12} parent=0 // pred_fallthru
    _
  %p11 = scmp.eq.s32.totalorder 0, 0
  // Predicated region
  $region10: #{_lambda_.12} parent=0 // pred_check
    %p12 = pneg %p11
  $region11: #{_lambda_.12} parent=0 // pred_check_branch
    %14 = sbr.rel (%p12) target = $region13
  $region12: #{_lambda_.12} parent=0 // pred_region
    %15 = vst [vmem:[%s2] sm:$0xff] 0.0
    %16 = vst [vmem:[%s2 + $0x8] sm:$0xff] 0.0
    %17 = vst [vmem:[%s2 + $0x10] sm:$0xff] 0.0
    %18 = vst [vmem:[%s2 + $0x18] sm:$0xff] 0.0
    %19 = vst [vmem:[%s2 + $0x20] sm:$0xff] 0.0
    %20 = vst [vmem:[%s2 + $0x28] sm:$0xff] 0.0
    %21 = vst [vmem:[%s2 + $0x30] sm:$0xff] 0.0
    %22 = vst [vmem:[%s2 + $0x38] sm:$0xff] 0.0
    %23 = vst [vmem:[%s2 + $0x40] sm:$0xff] 0.0
    %24 = vst [vmem:[%s2 + $0x48] sm:$0xff] 0.0
    %25 = vst [vmem:[%s2 + $0x50] sm:$0xff] 0.0
    %26 = vst [vmem:[%s2 + $0x58] sm:$0xff] 0.0
    %27 = vst [vmem:[%s2 + $0x60] sm:$0xff] 0.0
    %28 = vst [vmem:[%s2 + $0x68] sm:$0xff] 0.0
    %29 = vst [vmem:[%s2 + $0x70] sm:$0xff] 0.0
    %30 = vst [vmem:[%s2 + $0x78] sm:$0xff] 0.0
  $region13: #{_lambda_.12} parent=0 // pred_fallthru
    _
  %v31 = vld [vmem:[%s2] sm:$0xff]
  %v32 = vld [vmem:[%s2 + $0x8] sm:$0xff]
  %v33 = vld [vmem:[%s2 + $0x10] sm:$0xff]
  %v34 = vld [vmem:[%s2 + $0x18] sm:$0xff]
  %v35 = vld [vmem:[%s2 + $0x20] sm:$0xff]
  %v36 = vld [vmem:[%s2 + $0x28] sm:$0xff]
  %v37 = vld [vmem:[%s2 + $0x30] sm:$0xff]
  %v38 = vld [vmem:[%s2 + $0x38] sm:$0xff]
  %v39 = vld [vmem:[%s2 + $0x40] sm:$0xff]
  %v40 = vld [vmem:[%s2 + $0x48] sm:$0xff]
  %v41 = vld [vmem:[%s2 + $0x50] sm:$0xff]
  %v42 = vld [vmem:[%s2 + $0x58] sm:$0xff]
  %v43 = vld [vmem:[%s2 + $0x60] sm:$0xff]
  %v44 = vld [vmem:[%s2 + $0x68] sm:$0xff]
  %v45 = vld [vmem:[%s2 + $0x70] sm:$0xff]
  %v46 = vld [vmem:[%s2 + $0x78] sm:$0xff]
  %v47 = vld [vmem:[%s0] sm:$0xf]
  %v48 = vld [vmem:[%s0 + $0x4] sm:$0xf]
  %v49 = vld [vmem:[%s0 + $0x8] sm:$0xf]
  %v50 = vld [vmem:[%s0 + $0xc] sm:$0xf]
  %v51 = vld [vmem:[%s1] sm:$0xff]
  %v52 = vld [vmem:[%s1 + $0x8] sm:$0xff]
  %v53 = vld [vmem:[%s1 + $0x10] sm:$0xff]
  %v54 = vld [vmem:[%s1 + $0x18] sm:$0xff]
  %v55 = vld [vmem:[%s1 + $0x20] sm:$0xff]
  %v56 = vld [vmem:[%s1 + $0x28] sm:$0xff]
  %v57 = vld [vmem:[%s1 + $0x30] sm:$0xff]
  %v58 = vld [vmem:[%s1 + $0x38] sm:$0xff]
  %v59 = vld [vmem:[%s1 + $0x40] sm:$0xff]
  %v60 = vld [vmem:[%s1 + $0x48] sm:$0xff]
  %v61 = vld [vmem:[%s1 + $0x50] sm:$0xff]
  %v62 = vld [vmem:[%s1 + $0x58] sm:$0xff]
  %v63 = vld [vmem:[%s1 + $0x60] sm:$0xff]
  %v64 = vld [vmem:[%s1 + $0x68] sm:$0xff]
  %v65 = vld [vmem:[%s1 + $0x70] sm:$0xff]
  %v66 = vld [vmem:[%s1 + $0x78] sm:$0xff]
  %v67 = vld [vmem:[%s1 + $0x80] sm:$0xff]
  %v68 = vld [vmem:[%s1 + $0x88] sm:$0xff]
  %v69 = vld [vmem:[%s1 + $0x90] sm:$0xff]
  %v70 = vld [vmem:[%s1 + $0x98] sm:$0xff]
  %v71 = vld [vmem:[%s1 + $0xa0] sm:$0xff]
  %v72 = vld [vmem:[%s1 + $0xa8] sm:$0xff]
  %v73 = vld [vmem:[%s1 + $0xb0] sm:$0xff]
  %v74 = vld [vmem:[%s1 + $0xb8] sm:$0xff]
  %v75 = vld [vmem:[%s1 + $0xc0] sm:$0xff]
  %v76 = vld [vmem:[%s1 + $0xc8] sm:$0xff]
  %v77 = vld [vmem:[%s1 + $0xd0] sm:$0xff]
  %v78 = vld [vmem:[%s1 + $0xd8] sm:$0xff]
  %v79 = vld [vmem:[%s1 + $0xe0] sm:$0xff]
  %v80 = vld [vmem:[%s1 + $0xe8] sm:$0xff]
  %v81 = vld [vmem:[%s1 + $0xf0] sm:$0xff]
  %v82 = vld [vmem:[%s1 + $0xf8] sm:$0xff]
  %v87 = vunpack.c.l.b16 %v47
  %v88 = vunpack.c.l.b16 %v48
  %v89 = vunpack.c.l.b16 %v49
  %v90 = vunpack.c.l.b16 %v50
  %v91 = vpack.c.b16 %v88, %v87
  %v92 = vpack.c.b16 %v90, %v89
  %v127 = vunpack.c.l.b16 %v51
  %v128 = vunpack.c.h.b16 %v51
  %v129 = vunpack.c.l.b16 %v52
  %v130 = vunpack.c.h.b16 %v52
  %v131 = vunpack.c.l.b16 %v53
  %v132 = vunpack.c.h.b16 %v53
  %v133 = vunpack.c.l.b16 %v54
  %v134 = vunpack.c.h.b16 %v54
  %v135 = vunpack.c.l.b16 %v55
  %v136 = vunpack.c.h.b16 %v55
  %v137 = vunpack.c.l.b16 %v56
  %v138 = vunpack.c.h.b16 %v56
  %v139 = vunpack.c.l.b16 %v57
  %v140 = vunpack.c.h.b16 %v57
  %v141 = vunpack.c.l.b16 %v58
  %v142 = vunpack.c.h.b16 %v58
  %v143 = vunpack.c.l.b16 %v59
  %v144 = vunpack.c.h.b16 %v59
  %v145 = vunpack.c.l.b16 %v60
  %v146 = vunpack.c.h.b16 %v60
  %v147 = vunpack.c.l.b16 %v61
  %v148 = vunpack.c.h.b16 %v61
  %v149 = vunpack.c.l.b16 %v62
  %v150 = vunpack.c.h.b16 %v62
  %v151 = vunpack.c.l.b16 %v63
  %v152 = vunpack.c.h.b16 %v63
  %v153 = vunpack.c.l.b16 %v64
  %v154 = vunpack.c.h.b16 %v64
  %v155 = vunpack.c.l.b16 %v65
  %v156 = vunpack.c.h.b16 %v65
  %v157 = vunpack.c.l.b16 %v66
  %v158 = vunpack.c.h.b16 %v66
  %v159 = vunpack.c.l.b16 %v67
  %v160 = vunpack.c.h.b16 %v67
  %v161 = vunpack.c.l.b16 %v68
  %v162 = vunpack.c.h.b16 %v68
  %v163 = vunpack.c.l.b16 %v69
  %v164 = vunpack.c.h.b16 %v69
  %v165 = vunpack.c.l.b16 %v70
  %v166 = vunpack.c.h.b16 %v70
  %v167 = vunpack.c.l.b16 %v71
  %v168 = vunpack.c.h.b16 %v71
  %v169 = vunpack.c.l.b16 %v72
  %v170 = vunpack.c.h.b16 %v72
  %v171 = vunpack.c.l.b16 %v73
  %v172 = vunpack.c.h.b16 %v73
  %v173 = vunpack.c.l.b16 %v74
  %v174 = vunpack.c.h.b16 %v74
  %v175 = vunpack.c.l.b16 %v75
  %v176 = vunpack.c.h.b16 %v75
  %v177 = vunpack.c.l.b16 %v76
  %v178 = vunpack.c.h.b16 %v76
  %v179 = vunpack.c.l.b16 %v77
  %v180 = vunpack.c.h.b16 %v77
  %v181 = vunpack.c.l.b16 %v78
  %v182 = vunpack.c.h.b16 %v78
  %v183 = vunpack.c.l.b16 %v79
  %v184 = vunpack.c.h.b16 %v79
  %v185 = vunpack.c.l.b16 %v80
  %v186 = vunpack.c.h.b16 %v80
  %v187 = vunpack.c.l.b16 %v81
  %v188 = vunpack.c.h.b16 %v81
  %v189 = vunpack.c.l.b16 %v82
  %v190 = vunpack.c.h.b16 %v82
  %v191 = vpack.c.b16 %v131, %v127
  %v192 = vpack.c.b16 %v132, %v128
  %v193 = vpack.c.b16 %v133, %v129
  %v194 = vpack.c.b16 %v134, %v130
  %v195 = vpack.c.b16 %v139, %v135
  %v196 = vpack.c.b16 %v140, %v136
  %v197 = vpack.c.b16 %v141, %v137
  %v198 = vpack.c.b16 %v142, %v138
  %v199 = vpack.c.b16 %v147, %v143
  %v200 = vpack.c.b16 %v148, %v144
  %v201 = vpack.c.b16 %v149, %v145
  %v202 = vpack.c.b16 %v150, %v146
  %v203 = vpack.c.b16 %v155, %v151
  %v204 = vpack.c.b16 %v156, %v152
  %v205 = vpack.c.b16 %v157, %v153
  %v206 = vpack.c.b16 %v158, %v154
  %v207 = vpack.c.b16 %v163, %v159
  %v208 = vpack.c.b16 %v164, %v160
  %v209 = vpack.c.b16 %v165, %v161
  %v210 = vpack.c.b16 %v166, %v162
  %v211 = vpack.c.b16 %v171, %v167
  %v212 = vpack.c.b16 %v172, %v168
  %v213 = vpack.c.b16 %v173, %v169
  %v214 = vpack.c.b16 %v174, %v170
  %v215 = vpack.c.b16 %v179, %v175
  %v216 = vpack.c.b16 %v180, %v176
  %v217 = vpack.c.b16 %v181, %v177
  %v218 = vpack.c.b16 %v182, %v178
  %v219 = vpack.c.b16 %v187, %v183
  %v220 = vpack.c.b16 %v188, %v184
  %v221 = vpack.c.b16 %v189, %v185
  %v222 = vpack.c.b16 %v190, %v186
  %255 = vmatpush.bf16.msra.mxu0 %v219
  %256 = vmatpush.bf16.msra.mxu0 %v215
  %257 = vmatpush.bf16.msra.mxu0 %v211
  %258 = vmatpush.bf16.msra.mxu0 %v207
  %259 = vmatpush.bf16.msra.mxu0 %v203
  %260 = vmatpush.bf16.msra.mxu0 %v199
  %261 = vmatpush.bf16.msra.mxu0 %v195
  %262 = vmatpush.bf16.msra.mxu0 %v191
  %263 = vmatmul.bf16.gmra.mxu0 %v91
  %v264 = vpop.f32.mrf.mxu0
  %v265 = vadd.f32 0.0, %v264
  %v266 = vpop.f32.mrf.mxu0
  %v267 = vadd.f32 0.0, %v266
  %268 = vmatmul.bf16.gmra.mxu0 %v92
  %v269 = vpop.f32.mrf.mxu0
  %v270 = vadd.f32 0.0, %v269
  %v271 = vpop.f32.mrf.mxu0
  %v272 = vadd.f32 0.0, %v271
  %273 = vdwg.mxu0
  %274 = vmatpush.bf16.msra.mxu0 %v220
  %275 = vmatpush.bf16.msra.mxu0 %v216
  %276 = vmatpush.bf16.msra.mxu0 %v212
  %277 = vmatpush.bf16.msra.mxu0 %v208
  %278 = vmatpush.bf16.msra.mxu0 %v204
  %279 = vmatpush.bf16.msra.mxu0 %v200
  %280 = vmatpush.bf16.msra.mxu0 %v196
  %281 = vmatpush.bf16.msra.mxu0 %v192
  %282 = vmatmul.bf16.gmra.mxu0 %v91
  %v283 = vpop.f32.mrf.mxu0
  %v284 = vadd.f32 0.0, %v283
  %v285 = vpop.f32.mrf.mxu0
  %v286 = vadd.f32 0.0, %v285
  %287 = vmatmul.bf16.gmra.mxu0 %v92
  %v288 = vpop.f32.mrf.mxu0
  %v289 = vadd.f32 0.0, %v288
  %v290 = vpop.f32.mrf.mxu0
  %v291 = vadd.f32 0.0, %v290
  %292 = vdwg.mxu0
  %293 = vmatpush.bf16.msra.mxu0 %v221
  %294 = vmatpush.bf16.msra.mxu0 %v217
  %295 = vmatpush.bf16.msra.mxu0 %v213
  %296 = vmatpush.bf16.msra.mxu0 %v209
  %297 = vmatpush.bf16.msra.mxu0 %v205
  %298 = vmatpush.bf16.msra.mxu0 %v201
  %299 = vmatpush.bf16.msra.mxu0 %v197
  %300 = vmatpush.bf16.msra.mxu0 %v193
  %301 = vmatmul.bf16.gmra.mxu0 %v91
  %v302 = vpop.f32.mrf.mxu0
  %v303 = vadd.f32 0.0, %v302
  %v304 = vpop.f32.mrf.mxu0
  %v305 = vadd.f32 0.0, %v304
  %306 = vmatmul.bf16.gmra.mxu0 %v92
  %v307 = vpop.f32.mrf.mxu0
  %v308 = vadd.f32 0.0, %v307
  %v309 = vpop.f32.mrf.mxu0
  %v310 = vadd.f32 0.0, %v309
  %311 = vdwg.mxu0
  %312 = vmatpush.bf16.msra.mxu0 %v222
  %313 = vmatpush.bf16.msra.mxu0 %v218
  %314 = vmatpush.bf16.msra.mxu0 %v214
  %315 = vmatpush.bf16.msra.mxu0 %v210
  %316 = vmatpush.bf16.msra.mxu0 %v206
  %317 = vmatpush.bf16.msra.mxu0 %v202
  %318 = vmatpush.bf16.msra.mxu0 %v198
  %319 = vmatpush.bf16.msra.mxu0 %v194
  %320 = vmatmul.bf16.gmra.mxu0 %v91
  %v321 = vpop.f32.mrf.mxu0
  %v322 = vadd.f32 0.0, %v321
  %v323 = vpop.f32.mrf.mxu0
  %v324 = vadd.f32 0.0, %v323
  %325 = vmatmul.bf16.gmra.mxu0 %v92
  %v326 = vpop.f32.mrf.mxu0
  %v327 = vadd.f32 0.0, %v326
  %v328 = vpop.f32.mrf.mxu0
  %v329 = vadd.f32 0.0, %v328
  %330 = vdwg.mxu0
  %v331 = vadd.f32 %v31, %v265
  %v332 = vadd.f32 %v32, %v284
  %v333 = vadd.f32 %v33, %v303
  %v334 = vadd.f32 %v34, %v322
  %v335 = vadd.f32 %v35, %v267
  %v336 = vadd.f32 %v36, %v286
  %v337 = vadd.f32 %v37, %v305
  %v338 = vadd.f32 %v38, %v324
  %v339 = vadd.f32 %v39, %v270
  %v340 = vadd.f32 %v40, %v289
  %v341 = vadd.f32 %v41, %v308
  %v342 = vadd.f32 %v42, %v327
  %v343 = vadd.f32 %v43, %v272
  %v344 = vadd.f32 %v44, %v291
  %v345 = vadd.f32 %v45, %v310
  %v346 = vadd.f32 %v46, %v329
  %347 = vst [vmem:[%s2] sm:$0xff] %v331
  %348 = vst [vmem:[%s2 + $0x8] sm:$0xff] %v332
  %349 = vst [vmem:[%s2 + $0x10] sm:$0xff] %v333
  %350 = vst [vmem:[%s2 + $0x18] sm:$0xff] %v334
  %351 = vst [vmem:[%s2 + $0x20] sm:$0xff] %v335
  %352 = vst [vmem:[%s2 + $0x28] sm:$0xff] %v336
  %353 = vst [vmem:[%s2 + $0x30] sm:$0xff] %v337
  %354 = vst [vmem:[%s2 + $0x38] sm:$0xff] %v338
  %355 = vst [vmem:[%s2 + $0x40] sm:$0xff] %v339
  %356 = vst [vmem:[%s2 + $0x48] sm:$0xff] %v340
  %357 = vst [vmem:[%s2 + $0x50] sm:$0xff] %v341
  %358 = vst [vmem:[%s2 + $0x58] sm:$0xff] %v342
  %359 = vst [vmem:[%s2 + $0x60] sm:$0xff] %v343
  %360 = vst [vmem:[%s2 + $0x68] sm:$0xff] %v344
  %361 = vst [vmem:[%s2 + $0x70] sm:$0xff] %v345
  %362 = vst [vmem:[%s2 + $0x78] sm:$0xff] %v346
  // Predicated region
  $region14: #{_lambda_.12} parent=0 // pred_check
    _
  $region15: #{_lambda_.12} parent=0 // pred_check_branch
    %364 = sbr.rel (0) target = $region17
  $region16: #{_lambda_.12} parent=0 // pred_region
    _
  $region17: #{_lambda_.12} parent=0 // pred_fallthru
    _
  // Predicated region
  $region18: #{_lambda_.12} parent=0 // pred_check
    _
  $region19: #{_lambda_.12} parent=0 // pred_check_branch
    %366 = sbr.rel (0) target = $region21
  $region20: #{_lambda_.12} parent=0 // pred_region
    _
  $region21: #{_lambda_.12} parent=0 // pred_fallthru
    _

// kernel: _lambda_.13
$region0: #{_lambda_.13}
  #allocation0 [shape = 'u32[]', space=smem, size = 0x4, offset = 0x4, fixed_abs, tag = 'smem constant byte address 0x4 - core index']
  #allocation1 [shape = 'u32[72,128]{1,0:T(1,128)}', space=vmem, size = 0x9000, scoped, tag = 'internal scratch']
  #allocation2 [shape = 'f32[1,128]{1,0:T(1,128)}', space=vmem, size = 0x200, scoped, tag = 'scratch operand']
  #allocation3 [shape = 'f32[1,128]{1,0:T(1,128)}', space=vmem, size = 0x200, scoped, tag = 'scratch operand']
  %s0 = inlined_call_operand.vmem [shape: f32[128,128], index: 0, kind: input, shape index: {}]
  %s1 = inlined_call_operand.vmem [shape: f32[1,128], index: 1, kind: input, shape index: {}]
  %s2 = inlined_call_operand.vmem [shape: f32[1,128], index: 2, kind: input, shape index: {}]
  %s3 = inlined_call_operand.vmem [shape: bf16[128,128], index: 3, kind: output, shape index: {}]
  %s4 = sld [smem:[#allocation0]]
  $region61: #{_lambda_.13} parent=0
    _
  %s6 = ssub.s32 1, %s4
  %s7 = scalar_select 0, %s6, %s4
  loop: start=0, step=1, limit=4
  $region2: #{_lambda_.13} parent=0 // loop_pre_header
    _
  $region3: #{_lambda_.13} parent=0 // loop_header
    %s9 = sphi 0, %s13
    %p10 = scmp.ge.s32.totalorder %s9, 4
    %s16 = sphi 0, %s28
    %s17 = sphi 0, %s24
    %s18 = sphi 0, %s16
    %s19 = sphi 0, %s17
    %s20 = sphi 0, %s18
    %s21 = sphi 0, %s19
    %s31 = sphi 0, %s33
    %s34 = sphi 0, %s31
    %s35 = sphi 0, %s34
    %s51 = sphi 0, %s35
    %s55 = sphi 0, %s55
    %s57 = sphi 0, %s55
    %s58 = sphi 0, %s57
    %s72 = sphi 0, %s58
    %s76 = sphi 0, %s76
    %s78 = sphi 0, %s76
    %s79 = sphi 0, %s78
    %s93 = sphi 0, %s79
    %s99 = sphi 0, %s101
    %s102 = sphi 0, %s99
    %s103 = sphi 0, %s102
    %s119 = sphi 0, %s103
  $region4: #{_lambda_.13} parent=0 // loop_header_branch
    %12 = sbr.rel (%p10) target = $region8
  $region5: #{_lambda_.13} parent=0 // loop_body
    %s14 = ssub.s32 %s9, 1
    %s15 = ssub.s32 %s9, 2
    %s22 = sadd.s32 1, %s17
    %p23 = scmp.ge.s32.totalorder %s22, 1
    %s24 = scalar_select %p23, 0, %s22
    %s25 = sadd.s32 1, %s16
    %s26 = scalar_select %p23, %s25, %s16
    %p27 = scmp.ge.s32.totalorder %s26, 2
    %s28 = scalar_select %p27, 0, %s26
    %s29 = ssub.s32 %s17, %s24
    %p30 = scmp.eq.s32.totalorder %s29, 0
    %s32 = sadd.s32 %s31, 1
    %s33 = scalar_select %p30, %s31, %s32
    %p36 = pneg %p30
    %p37 = scmp.eq.s32.totalorder %s9, 1
    %p38 = por %p36, %p37
    %p39 = scmp.ne.s32.totalorder %s31, %s34
    %p40 = scmp.eq.s32.totalorder %s9, 0
    %p41 = por %p39, %p40
    %p42 = scmp.ne.s32.totalorder %s31, %s34
    %p43 = scmp.eq.s32.totalorder %s14, 1
    %p44 = por %p42, %p43
    %p45 = scmp.ne.s32.totalorder %s34, %s35
    %p46 = scmp.eq.s32.totalorder %s14, 0
    %p47 = por %p45, %p46
    %p48 = scmp.ne.s32.totalorder %s34, %s35
    %p49 = scmp.eq.s32.totalorder %s15, 1
    %p50 = por %p48, %p49
    %p52 = scmp.ne.s32.totalorder %s35, %s51
    %p53 = scmp.eq.s32.totalorder %s15, 0
    %p54 = por %p52, %p53
    %s56 = sadd.s32 %s55, 1
    %p59 = scmp.eq.s32.totalorder %s9, 1
    %p60 = scmp.ne.s32.totalorder %s55, %s57
    %p61 = scmp.eq.s32.totalorder %s9, 0
    %p62 = por %p60, %p61
    %p63 = scmp.ne.s32.totalorder %s55, %s57
    %p64 = scmp.eq.s32.totalorder %s14, 1
    %p65 = por %p63, %p64
    %p66 = scmp.ne.s32.totalorder %s57, %s58
    %p67 = scmp.eq.s32.totalorder %s14, 0
    %p68 = por %p66, %p67
    %p69 = scmp.ne.s32.totalorder %s57, %s58
    %p70 = scmp.eq.s32.totalorder %s15, 1
    %p71 = por %p69, %p70
    %p73 = scmp.ne.s32.totalorder %s58, %s72
    %p74 = scmp.eq.s32.totalorder %s15, 0
    %p75 = por %p73, %p74
    %s77 = sadd.s32 %s76, 1
    %p80 = scmp.eq.s32.totalorder %s9, 1
    %p81 = scmp.ne.s32.totalorder %s76, %s78
    %p82 = scmp.eq.s32.totalorder %s9, 0
    %p83 = por %p81, %p82
    %p84 = scmp.ne.s32.totalorder %s76, %s78
    %p85 = scmp.eq.s32.totalorder %s14, 1
    %p86 = por %p84, %p85
    %p87 = scmp.ne.s32.totalorder %s78, %s79
    %p88 = scmp.eq.s32.totalorder %s14, 0
    %p89 = por %p87, %p88
    %p90 = scmp.ne.s32.totalorder %s78, %s79
    %p91 = scmp.eq.s32.totalorder %s15, 1
    %p92 = por %p90, %p91
    %p94 = scmp.ne.s32.totalorder %s79, %s93
    %p95 = scmp.eq.s32.totalorder %s15, 0
    %p96 = por %p94, %p95
    %s97 = ssub.s32 %s17, %s24
    %p98 = scmp.eq.s32.totalorder %s97, 0
    %s100 = sadd.s32 %s99, 1
    %s101 = scalar_select %p98, %s99, %s100
    %p104 = pneg %p98
    %p105 = scmp.eq.s32.totalorder %s9, 1
    %p106 = por %p104, %p105
    %p107 = scmp.ne.s32.totalorder %s99, %s102
    %p108 = scmp.eq.s32.totalorder %s9, 0
    %p109 = por %p107, %p108
    %p110 = scmp.ne.s32.totalorder %s99, %s102
    %p111 = scmp.eq.s32.totalorder %s14, 1
    %p112 = por %p110, %p111
    %p113 = scmp.ne.s32.totalorder %s102, %s103
    %p114 = scmp.eq.s32.totalorder %s14, 0
    %p115 = por %p113, %p114
    %p116 = scmp.ne.s32.totalorder %s102, %s103
    %p117 = scmp.eq.s32.totalorder %s15, 1
    %p118 = por %p116, %p117
    %p120 = scmp.ne.s32.totalorder %s103, %s119
    %p121 = scmp.eq.s32.totalorder %s15, 0
    %p122 = por %p120, %p121
    %p123 = scmp.le.s32.totalorder 1, %s9
    %p124 = scmp.lt.s32.totalorder %s9, 3
    %p125 = pnand %p123, %p124
    %p126 = pneg %p125
    // Predicated region
    $region9: #{_lambda_.13} parent=5 // pred_check
      _
    $region10: #{_lambda_.13} parent=5 // pred_check_branch
      %128 = sbr.rel (%p125) target = $region12
    $region11: #{_lambda_.13} parent=5 // pred_region
      %s129 = ssub.s32 %s9, 1
      // Predicated region
      $region13: #{_lambda_.13} parent=11 // pred_check
        %p130 = pneg %p47
      $region14: #{_lambda_.13} parent=11 // pred_check_branch
        %132 = sbr.rel (%p130) target = $region16
      $region15: #{_lambda_.13} parent=11 // pred_region
        %s133 = smul.u32 16, %s19
        %p134 = scmp.lt.s32.totalorder %s133, 15
        %s135 = scalar_select %p134, %s133, 15
        %s136 = smul.addr %s135, 8
        %s137 = scalar_lea.vmem %s0, %s136
        %s138 = smul.u32 16, %s19
      $region16: #{_lambda_.13} parent=11 // pred_fallthru
        _
      // Predicated region
      $region17: #{_lambda_.13} parent=11 // pred_check
        %p139 = pneg %p68
      $region18: #{_lambda_.13} parent=11 // pred_check_branch
        %141 = sbr.rel (%p139) target = $region20
      $region19: #{_lambda_.13} parent=11 // pred_region
        _
      $region20: #{_lambda_.13} parent=11 // pred_fallthru
        _
      // Predicated region
      $region21: #{_lambda_.13} parent=11 // pred_check
        %p142 = pneg %p89
      $region22: #{_lambda_.13} parent=11 // pred_check_branch
        %144 = sbr.rel (%p142) target = $region24
      $region23: #{_lambda_.13} parent=11 // pred_region
        _
      $region24: #{_lambda_.13} parent=11 // pred_fallthru
        _
    $region12: #{_lambda_.13} parent=5 // pred_fallthru
      _
    %p145 = scmp.lt.s32.totalorder %s9, 2
    // Predicated region
    $region25: #{_lambda_.13} parent=5 // pred_check
      %p146 = pneg %p145
    $region26: #{_lambda_.13} parent=5 // pred_check_branch
      %148 = sbr.rel (%p146) target = $region28
    $region27: #{_lambda_.13} parent=5 // pred_region
      _
    $region28: #{_lambda_.13} parent=5 // pred_fallthru
      _
    %p149 = scmp.le.s32.totalorder 1, %s9
    %p150 = scmp.lt.s32.totalorder %s9, 3
    %p151 = pnand %p149, %p150
    %p152 = pneg %p151
    // Predicated region
    $region29: #{_lambda_.13} parent=5 // pred_check
      _
    $region30: #{_lambda_.13} parent=5 // pred_check_branch
      %154 = sbr.rel (%p151) target = $region32
    $region31: #{_lambda_.13} parent=5 // pred_region
      %s155 = ssub.s32 %s9, 1
      %s156 = smul.u32 16, %s19
      %p157 = scmp.lt.s32.totalorder %s156, 15
      %s158 = scalar_select %p157, %s156, 15
      %s159 = smul.addr %s158, 8
      %s160 = scalar_lea.vmem %s0, %s159
      %p161 = pneg %p47
      %p162 = pneg %p44
      %p163 = pneg %p68
      %p164 = pneg %p65
      %p165 = pneg %p89
      %p166 = pneg %p86
      %p167 = pneg %p115
      %p168 = pneg %p112
      %s169 = smul.u32 16, %s19
      %p170 = scmp.lt.s32.totalorder %s169, 15
      %s171 = scalar_select %p170, %s169, 15
      %s172 = smul.addr %s171, 4
      %s173 = scalar_lea.vmem %s3, %s172
      %s174 = smul.u32 16, %s19
      %p175 = scmp.lt.s32.totalorder %s174, 15
      %s176 = scalar_select %p175, %s174, 15
      %s177 = smul.addr %s176, 8
      %s178 = scalar_lea.vmem %s0, %s177
      %s179 = smul.u32 16, %s19
      %s180 = smul.u32 16, %s19
      %p181 = scmp.lt.s32.totalorder %s180, 15
      %s182 = scalar_select %p181, %s180, 15
      %s183 = smul.addr %s182, 4
      %s184 = scalar_lea.vmem %s3, %s183
      %s185 = smul.u32 16, %s19
      %p186 = scmp.eq.s32.totalorder %s18, 0
      %p187 = scmp.eq.s32.totalorder %s19, 0
      %p188 = pnand %p186, %p187
      %p189 = pneg %p188
      // Predicated region
      $region33: #{_lambda_.13} parent=31 // pred_check
        _
      $region34: #{_lambda_.13} parent=31 // pred_check_branch
        %191 = sbr.rel (%p188) target = $region36
      $region35: #{_lambda_.13} parent=31 // pred_region
        %192 = vst [vmem:[#allocation2] sm:$0x1] 0.0
        %193 = vst [vmem:[#allocation3] sm:$0x1] 0.0
      $region36: #{_lambda_.13} parent=31 // pred_fallthru
        _
      // Predicated region
      $region37: #{_lambda_.13} parent=31 // pred_check
        %p194 = pneg %p186
      $region38: #{_lambda_.13} parent=31 // pred_check_branch
        %196 = sbr.rel (%p194) target = $region40
      $region39: #{_lambda_.13} parent=31 // pred_region
        %v197 = vld [vmem:[%s178] sm:$0xff]
        %v198 = vld [vmem:[%s178 + $0x8] sm:$0xff]
        %v199 = vld [vmem:[%s178 + $0x10] sm:$0xff]
        %v200 = vld [vmem:[%s178 + $0x18] sm:$0xff]
        %v201 = vld [vmem:[%s178 + $0x20] sm:$0xff]
        %v202 = vld [vmem:[%s178 + $0x28] sm:$0xff]
        %v203 = vld [vmem:[%s178 + $0x30] sm:$0xff]
        %v204 = vld [vmem:[%s178 + $0x38] sm:$0xff]
        %v205 = vld [vmem:[%s178 + $0x40] sm:$0xff]
        %v206 = vld [vmem:[%s178 + $0x48] sm:$0xff]
        %v207 = vld [vmem:[%s178 + $0x50] sm:$0xff]
        %v208 = vld [vmem:[%s178 + $0x58] sm:$0xff]
        %v209 = vld [vmem:[%s178 + $0x60] sm:$0xff]
        %v210 = vld [vmem:[%s178 + $0x68] sm:$0xff]
        %v211 = vld [vmem:[%s178 + $0x70] sm:$0xff]
        %v212 = vld [vmem:[%s178 + $0x78] sm:$0xff]
        %v213 = vld [vmem:[#allocation2] sm:$0x1]
        %v214 = vadd.f32 %v197, %v198
        %v215 = vadd.f32 %v214, %v199
        %v216 = vadd.f32 %v215, %v200
        %v217 = vadd.f32 %v216, %v201
        %v218 = vadd.f32 %v217, %v202
        %v219 = vadd.f32 %v218, %v203
        %v220 = vadd.f32 %v219, %v204
        %v221 = vadd.f32 %v220, %v205
        %v222 = vadd.f32 %v221, %v206
        %v223 = vadd.f32 %v222, %v207
        %v224 = vadd.f32 %v223, %v208
        %v225 = vadd.f32 %v224, %v209
        %v226 = vadd.f32 %v225, %v210
        %v227 = vadd.f32 %v226, %v211
        %v228 = vadd.f32 %v227, %v212
        %v229 = vrot.slane %v228, 4
        %v230 = vadd.f32 %v228, %v229
        %v231 = vrot.slane %v230, 2
        %v232 = vadd.f32 %v230, %v231
        %v233 = vrot.slane %v232, 1
        %v234 = vadd.f32 %v232, %v233
        %v235 = vadd.f32 %v213, %v234
        %236 = vst [vmem:[#allocation2] sm:$0x1] %v235
        %v237 = vld [vmem:[#allocation3] sm:$0x1]
        %v238 = vmul.f32 %v197, %v197
        %v239 = vmul.f32 %v198, %v198
        %v240 = vmul.f32 %v199, %v199
        %v241 = vmul.f32 %v200, %v200
        %v242 = vmul.f32 %v201, %v201
        %v243 = vmul.f32 %v202, %v202
        %v244 = vmul.f32 %v203, %v203
        %v245 = vmul.f32 %v204, %v204
        %v246 = vmul.f32 %v205, %v205
        %v247 = vmul.f32 %v206, %v206
        %v248 = vmul.f32 %v207, %v207
        %v249 = vmul.f32 %v208, %v208
        %v250 = vmul.f32 %v209, %v209
        %v251 = vmul.f32 %v210, %v210
        %v252 = vmul.f32 %v211, %v211
        %v253 = vmul.f32 %v212, %v212
        %v254 = vadd.f32 %v238, %v239
        %v255 = vadd.f32 %v254, %v240
        %v256 = vadd.f32 %v255, %v241
        %v257 = vadd.f32 %v256, %v242
        %v258 = vadd.f32 %v257, %v243
        %v259 = vadd.f32 %v258, %v244
        %v260 = vadd.f32 %v259, %v245
        %v261 = vadd.f32 %v260, %v246
        %v262 = vadd.f32 %v261, %v247
        %v263 = vadd.f32 %v262, %v248
        %v264 = vadd.f32 %v263, %v249
        %v265 = vadd.f32 %v264, %v250
        %v266 = vadd.f32 %v265, %v251
        %v267 = vadd.f32 %v266, %v252
        %v268 = vadd.f32 %v267, %v253
        %v269 = vrot.slane %v268, 4
        %v270 = vadd.f32 %v268, %v269
        %v271 = vrot.slane %v270, 2
        %v272 = vadd.f32 %v270, %v271
        %v273 = vrot.slane %v272, 1
        %v274 = vadd.f32 %v272, %v273
        %v275 = vadd.f32 %v237, %v274
        %276 = vst [vmem:[#allocation3] sm:$0x1] %v275
        %v277 = vpack.c.bf16 %v197, %v197
        %v278 = vpack.c.bf16 %v198, %v198
        %v279 = vpack.c.bf16 %v199, %v199
        %v280 = vpack.c.bf16 %v200, %v200
        %v281 = vpack.c.bf16 %v201, %v201
        %v282 = vpack.c.bf16 %v202, %v202
        %v283 = vpack.c.bf16 %v203, %v203
        %v284 = vpack.c.bf16 %v204, %v204
        %v285 = vpack.c.bf16 %v205, %v205
        %v286 = vpack.c.bf16 %v206, %v206
        %v287 = vpack.c.bf16 %v207, %v207
        %v288 = vpack.c.bf16 %v208, %v208
        %v289 = vpack.c.bf16 %v209, %v209
        %v290 = vpack.c.bf16 %v210, %v210
        %v291 = vpack.c.bf16 %v211, %v211
        %v292 = vpack.c.bf16 %v212, %v212
        %293 = vst [vmem:[%s184] sm:$0xf] %v277
        %294 = vst [vmem:[%s184 + $0x4] sm:$0xf] %v278
        %295 = vst [vmem:[%s184 + $0x8] sm:$0xf] %v279
        %296 = vst [vmem:[%s184 + $0xc] sm:$0xf] %v280
        %297 = vst [vmem:[%s184 + $0x10] sm:$0xf] %v281
        %298 = vst [vmem:[%s184 + $0x14] sm:$0xf] %v282
        %299 = vst [vmem:[%s184 + $0x18] sm:$0xf] %v283
        %300 = vst [vmem:[%s184 + $0x1c] sm:$0xf] %v284
        %301 = vst [vmem:[%s184 + $0x20] sm:$0xf] %v285
        %302 = vst [vmem:[%s184 + $0x24] sm:$0xf] %v286
        %303 = vst [vmem:[%s184 + $0x28] sm:$0xf] %v287
        %304 = vst [vmem:[%s184 + $0x2c] sm:$0xf] %v288
        %305 = vst [vmem:[%s184 + $0x30] sm:$0xf] %v289
        %306 = vst [vmem:[%s184 + $0x34] sm:$0xf] %v290
        %307 = vst [vmem:[%s184 + $0x38] sm:$0xf] %v291
        %308 = vst [vmem:[%s184 + $0x3c] sm:$0xf] %v292
      $region40: #{_lambda_.13} parent=31 // pred_fallthru
        _
      %p309 = scmp.eq.s32.totalorder %s18, 1
      %p310 = pnand %p309, %p187
      %p311 = pneg %p310
      // Predicated region
      $region41: #{_lambda_.13} parent=31 // pred_check
        _
      $region42: #{_lambda_.13} parent=31 // pred_check_branch
        %313 = sbr.rel (%p310) target = $region44
      $region43: #{_lambda_.13} parent=31 // pred_region
        %v314 = vld [vmem:[#allocation2] sm:$0x1]
        %v315 = vmul.f32 %v314, 0.0078125
        %v316 = vld [vmem:[#allocation3] sm:$0x1]
        %v317 = vmul.f32 %v316, 0.0078125
        %v318 = vmul.f32 %v315, %v315
        %v319 = vsub.f32 %v317, %v318
        %v320 = vld [vmem:[%s1] sm:$0x1]
        %v321 = vadd.f32 %v319, 1e-05
        %v322 = vrsqrt.pop %v321
        %v323 = vmul.f32 %v322, %v321
        %v324 = vmul.f32 %v323, %v322
        %v325 = vmul.f32 0.5, %v324
        %v326 = vsub.f32 1.5, %v325
        %v327 = vmul.f32 %v322, %v326
        %vm328 = vweird.f32 %v321
        %vm329 = vweird.f32 %v322
        %vm330 = vmor %vm328, %vm329
        %v331 = vsel %vm330, %v322, %v327
        %v332 = vmul.f32 %v320, %v331
        %333 = vst [vmem:[#allocation2] sm:$0x1] %v332
        %v334 = vld [vmem:[%s2] sm:$0x1]
        %v335 = vmul.f32 %v315, %v332
        %v336 = vsub.f32 %v334, %v335
        %337 = vst [vmem:[#allocation3] sm:$0x1] %v336
      $region44: #{_lambda_.13} parent=31 // pred_fallthru
        _
      // Predicated region
      $region45: #{_lambda_.13} parent=31 // pred_check
        %p338 = pneg %p309
      $region46: #{_lambda_.13} parent=31 // pred_check_branch
        %340 = sbr.rel (%p338) target = $region48
      $region47: #{_lambda_.13} parent=31 // pred_region
        %v341 = vld [vmem:[%s178] sm:$0xff]
        %v342 = vld [vmem:[%s178 + $0x8] sm:$0xff]
        %v343 = vld [vmem:[%s178 + $0x10] sm:$0xff]
        %v344 = vld [vmem:[%s178 + $0x18] sm:$0xff]
        %v345 = vld [vmem:[%s178 + $0x20] sm:$0xff]
        %v346 = vld [vmem:[%s178 + $0x28] sm:$0xff]
        %v347 = vld [vmem:[%s178 + $0x30] sm:$0xff]
        %v348 = vld [vmem:[%s178 + $0x38] sm:$0xff]
        %v349 = vld [vmem:[%s178 + $0x40] sm:$0xff]
        %v350 = vld [vmem:[%s178 + $0x48] sm:$0xff]
        %v351 = vld [vmem:[%s178 + $0x50] sm:$0xff]
        %v352 = vld [vmem:[%s178 + $0x58] sm:$0xff]
        %v353 = vld [vmem:[%s178 + $0x60] sm:$0xff]
        %v354 = vld [vmem:[%s178 + $0x68] sm:$0xff]
        %v355 = vld [vmem:[%s178 + $0x70] sm:$0xff]
        %v356 = vld [vmem:[%s178 + $0x78] sm:$0xff]
        %v357 = vld [vmem:[#allocation2] sm:$0x1]
        %v359 = vperm.slane %v357, 0
        %v361 = vmul.f32 %v341, %v359
        %v362 = vmul.f32 %v342, %v359
        %v363 = vmul.f32 %v343, %v359
        %v364 = vmul.f32 %v344, %v359
        %v365 = vmul.f32 %v345, %v359
        %v366 = vmul.f32 %v346, %v359
        %v367 = vmul.f32 %v347, %v359
        %v368 = vmul.f32 %v348, %v359
        %v369 = vmul.f32 %v349, %v359
        %v370 = vmul.f32 %v350, %v359
        %v371 = vmul.f32 %v351, %v359
        %v372 = vmul.f32 %v352, %v359
        %v373 = vmul.f32 %v353, %v359
        %v374 = vmul.f32 %v354, %v359
        %v375 = vmul.f32 %v355, %v359
        %v376 = vmul.f32 %v356, %v359
        %v377 = vld [vmem:[#allocation3] sm:$0x1]
        %v379 = vperm.slane %v377, 0
        %v381 = vadd.f32 %v361, %v379
        %v382 = vadd.f32 %v362, %v379
        %v383 = vadd.f32 %v363, %v379
        %v384 = vadd.f32 %v364, %v379
        %v385 = vadd.f32 %v365, %v379
        %v386 = vadd.f32 %v366, %v379
        %v387 = vadd.f32 %v367, %v379
        %v388 = vadd.f32 %v368, %v379
        %v389 = vadd.f32 %v369, %v379
        %v390 = vadd.f32 %v370, %v379
        %v391 = vadd.f32 %v371, %v379
        %v392 = vadd.f32 %v372, %v379
        %v393 = vadd.f32 %v373, %v379
        %v394 = vadd.f32 %v374, %v379
        %v395 = vadd.f32 %v375, %v379
        %v396 = vadd.f32 %v376, %v379
        %v397 = vmax.f32 %v381, 0.0
        %v398 = vmax.f32 %v382, 0.0
        %v399 = vmax.f32 %v383, 0.0
        %v400 = vmax.f32 %v384, 0.0
        %v401 = vmax.f32 %v385, 0.0
        %v402 = vmax.f32 %v386, 0.0
        %v403 = vmax.f32 %v387, 0.0
        %v404 = vmax.f32 %v388, 0.0
        %v405 = vmax.f32 %v389, 0.0
        %v406 = vmax.f32 %v390, 0.0
        %v407 = vmax.f32 %v391, 0.0
        %v408 = vmax.f32 %v392, 0.0
        %v409 = vmax.f32 %v393, 0.0
        %v410 = vmax.f32 %v394, 0.0
        %v411 = vmax.f32 %v395, 0.0
        %v412 = vmax.f32 %v396, 0.0
        %v413 = vpack.c.bf16 %v397, %v397
        %v414 = vpack.c.bf16 %v398, %v398
        %v415 = vpack.c.bf16 %v399, %v399
        %v416 = vpack.c.bf16 %v400, %v400
        %v417 = vpack.c.bf16 %v401, %v401
        %v418 = vpack.c.bf16 %v402, %v402
        %v419 = vpack.c.bf16 %v403, %v403
        %v420 = vpack.c.bf16 %v404, %v404
        %v421 = vpack.c.bf16 %v405, %v405
        %v422 = vpack.c.bf16 %v406, %v406
        %v423 = vpack.c.bf16 %v407, %v407
        %v424 = vpack.c.bf16 %v408, %v408
        %v425 = vpack.c.bf16 %v409, %v409
        %v426 = vpack.c.bf16 %v410, %v410
        %v427 = vpack.c.bf16 %v411, %v411
        %v428 = vpack.c.bf16 %v412, %v412
        %429 = vst [vmem:[%s184] sm:$0xf] %v413
        %430 = vst [vmem:[%s184 + $0x4] sm:$0xf] %v414
        %431 = vst [vmem:[%s184 + $0x8] sm:$0xf] %v415
        %432 = vst [vmem:[%s184 + $0xc] sm:$0xf] %v416
        %433 = vst [vmem:[%s184 + $0x10] sm:$0xf] %v417
        %434 = vst [vmem:[%s184 + $0x14] sm:$0xf] %v418
        %435 = vst [vmem:[%s184 + $0x18] sm:$0xf] %v419
        %436 = vst [vmem:[%s184 + $0x1c] sm:$0xf] %v420
        %437 = vst [vmem:[%s184 + $0x20] sm:$0xf] %v421
        %438 = vst [vmem:[%s184 + $0x24] sm:$0xf] %v422
        %439 = vst [vmem:[%s184 + $0x28] sm:$0xf] %v423
        %440 = vst [vmem:[%s184 + $0x2c] sm:$0xf] %v424
        %441 = vst [vmem:[%s184 + $0x30] sm:$0xf] %v425
        %442 = vst [vmem:[%s184 + $0x34] sm:$0xf] %v426
        %443 = vst [vmem:[%s184 + $0x38] sm:$0xf] %v427
        %444 = vst [vmem:[%s184 + $0x3c] sm:$0xf] %v428
      $region48: #{_lambda_.13} parent=31 // pred_fallthru
        _
      %s445 = smul.u32 16, %s19
      %p446 = scmp.lt.s32.totalorder %s445, 15
      %s447 = scalar_select %p446, %s445, 15
      %s448 = smul.addr %s447, 4
      %s449 = scalar_lea.vmem %s3, %s448
      // Predicated region
      $region49: #{_lambda_.13} parent=31 // pred_check
        %p450 = pneg %p112
      $region50: #{_lambda_.13} parent=31 // pred_check_branch
        %452 = sbr.rel (%p450) target = $region52
      $region51: #{_lambda_.13} parent=31 // pred_region
        %s453 = smul.u32 16, %s19
      $region52: #{_lambda_.13} parent=31 // pred_fallthru
        _
      // Predicated region
      $region53: #{_lambda_.13} parent=31 // pred_check
        %p454 = pneg %p112
      $region54: #{_lambda_.13} parent=31 // pred_check_branch
        %456 = sbr.rel (%p454) target = $region56
      $region55: #{_lambda_.13} parent=31 // pred_region
        %s457 = smul.u32 16, %s19
        %p458 = scmp.lt.s32.totalorder %s457, 15
        %s459 = scalar_select %p458, %s457, 15
        %s460 = smul.addr %s459, 4
        %s461 = scalar_lea.vmem %s3, %s460
      $region56: #{_lambda_.13} parent=31 // pred_fallthru
        _
    $region32: #{_lambda_.13} parent=5 // pred_fallthru
      _
    %p462 = scmp.le.s32.totalorder 2, %s9
    // Predicated region
    $region57: #{_lambda_.13} parent=5 // pred_check
      %p463 = pneg %p462
    $region58: #{_lambda_.13} parent=5 // pred_check_branch
      %465 = sbr.rel (%p463) target = $region60
    $region59: #{_lambda_.13} parent=5 // pred_region
      %s466 = ssub.s32 %s9, 2
    $region60: #{_lambda_.13} parent=5 // pred_fallthru
      _
  $region6: #{_lambda_.13} parent=0 // loop_footer
    %s13 = sadd.s32 1, %s9
  $region7: #{_lambda_.13} parent=0 // loop_footer_branch
    %8 = sbr.rel target = $region3
  $region8: #{_lambda_.13} parent=0 // loop_exit
    _

// kernel: _lambda_.14
$region0: #{_lambda_.14}
  #allocation0 [shape = 'u32[]', space=smem, size = 0x4, offset = 0x4, fixed_abs, tag = 'smem constant byte address 0x4 - core index']
  #allocation1 [shape = 'u32[72,128]{1,0:T(1,128)}', space=vmem, size = 0x9000, scoped, tag = 'internal scratch']
  %s0 = inlined_call_operand.vmem [shape: bf16[128,128], index: 0, kind: input, shape index: {}]
  %s1 = inlined_call_operand.vmem [shape: bf16[128,256], index: 1, kind: input, shape index: {}]
  %s2 = inlined_call_operand.vmem [shape: f32[128,256], index: 2, kind: output, shape index: {}]
  %s3 = sld [smem:[#allocation0]]
  $region22: #{_lambda_.14} parent=0
    _
  %s5 = ssub.s32 1, %s3
  %s6 = scalar_select 0, %s5, %s3
  // Predicated region
  $region2: #{_lambda_.14} parent=0 // pred_check
    _
  $region3: #{_lambda_.14} parent=0 // pred_check_branch
    %8 = sbr.rel (0) target = $region5
  $region4: #{_lambda_.14} parent=0 // pred_region
    _
  $region5: #{_lambda_.14} parent=0 // pred_fallthru
    _
  // Predicated region
  $region6: #{_lambda_.14} parent=0 // pred_check
    _
  $region7: #{_lambda_.14} parent=0 // pred_check_branch
    %10 = sbr.rel (0) target = $region9
  $region8: #{_lambda_.14} parent=0 // pred_region
    _
  $region9: #{_lambda_.14} parent=0 // pred_fallthru
    _
  %p11 = scmp.eq.s32.totalorder 0, 0
  // Predicated region
  $region10: #{_lambda_.14} parent=0 // pred_check
    %p12 = pneg %p11
  $region11: #{_lambda_.14} parent=0 // pred_check_branch
    %14 = sbr.rel (%p12) target = $region13
  $region12: #{_lambda_.14} parent=0 // pred_region
    %15 = vst [vmem:[%s2] sm:$0xff] 0.0
    %16 = vst [vmem:[%s2 + $0x8] sm:$0xff] 0.0
    %17 = vst [vmem:[%s2 + $0x10] sm:$0xff] 0.0
    %18 = vst [vmem:[%s2 + $0x18] sm:$0xff] 0.0
    %19 = vst [vmem:[%s2 + $0x20] sm:$0xff] 0.0
    %20 = vst [vmem:[%s2 + $0x28] sm:$0xff] 0.0
    %21 = vst [vmem:[%s2 + $0x30] sm:$0xff] 0.0
    %22 = vst [vmem:[%s2 + $0x38] sm:$0xff] 0.0
    %23 = vst [vmem:[%s2 + $0x40] sm:$0xff] 0.0
    %24 = vst [vmem:[%s2 + $0x48] sm:$0xff] 0.0
    %25 = vst [vmem:[%s2 + $0x50] sm:$0xff] 0.0
    %26 = vst [vmem:[%s2 + $0x58] sm:$0xff] 0.0
    %27 = vst [vmem:[%s2 + $0x60] sm:$0xff] 0.0
    %28 = vst [vmem:[%s2 + $0x68] sm:$0xff] 0.0
    %29 = vst [vmem:[%s2 + $0x70] sm:$0xff] 0.0
    %30 = vst [vmem:[%s2 + $0x78] sm:$0xff] 0.0
    %31 = vst [vmem:[%s2 + $0x80] sm:$0xff] 0.0
    %32 = vst [vmem:[%s2 + $0x88] sm:$0xff] 0.0
    %33 = vst [vmem:[%s2 + $0x90] sm:$0xff] 0.0
    %34 = vst [vmem:[%s2 + $0x98] sm:$0xff] 0.0
    %35 = vst [vmem:[%s2 + $0xa0] sm:$0xff] 0.0
    %36 = vst [vmem:[%s2 + $0xa8] sm:$0xff] 0.0
    %37 = vst [vmem:[%s2 + $0xb0] sm:$0xff] 0.0
    %38 = vst [vmem:[%s2 + $0xb8] sm:$0xff] 0.0
    %39 = vst [vmem:[%s2 + $0xc0] sm:$0xff] 0.0
    %40 = vst [vmem:[%s2 + $0xc8] sm:$0xff] 0.0
    %41 = vst [vmem:[%s2 + $0xd0] sm:$0xff] 0.0
    %42 = vst [vmem:[%s2 + $0xd8] sm:$0xff] 0.0
    %43 = vst [vmem:[%s2 + $0xe0] sm:$0xff] 0.0
    %44 = vst [vmem:[%s2 + $0xe8] sm:$0xff] 0.0
    %45 = vst [vmem:[%s2 + $0xf0] sm:$0xff] 0.0
    %46 = vst [vmem:[%s2 + $0xf8] sm:$0xff] 0.0
  $region13: #{_lambda_.14} parent=0 // pred_fallthru
    _
  %v47 = vld [vmem:[%s2] sm:$0xff]
  %v48 = vld [vmem:[%s2 + $0x8] sm:$0xff]
  %v49 = vld [vmem:[%s2 + $0x10] sm:$0xff]
  %v50 = vld [vmem:[%s2 + $0x18] sm:$0xff]
  %v51 = vld [vmem:[%s2 + $0x20] sm:$0xff]
  %v52 = vld [vmem:[%s2 + $0x28] sm:$0xff]
  %v53 = vld [vmem:[%s2 + $0x30] sm:$0xff]
  %v54 = vld [vmem:[%s2 + $0x38] sm:$0xff]
  %v55 = vld [vmem:[%s2 + $0x40] sm:$0xff]
  %v56 = vld [vmem:[%s2 + $0x48] sm:$0xff]
  %v57 = vld [vmem:[%s2 + $0x50] sm:$0xff]
  %v58 = vld [vmem:[%s2 + $0x58] sm:$0xff]
  %v59 = vld [vmem:[%s2 + $0x60] sm:$0xff]
  %v60 = vld [vmem:[%s2 + $0x68] sm:$0xff]
  %v61 = vld [vmem:[%s2 + $0x70] sm:$0xff]
  %v62 = vld [vmem:[%s2 + $0x78] sm:$0xff]
  %v63 = vld [vmem:[%s2 + $0x80] sm:$0xff]
  %v64 = vld [vmem:[%s2 + $0x88] sm:$0xff]
  %v65 = vld [vmem:[%s2 + $0x90] sm:$0xff]
  %v66 = vld [vmem:[%s2 + $0x98] sm:$0xff]
  %v67 = vld [vmem:[%s2 + $0xa0] sm:$0xff]
  %v68 = vld [vmem:[%s2 + $0xa8] sm:$0xff]
  %v69 = vld [vmem:[%s2 + $0xb0] sm:$0xff]
  %v70 = vld [vmem:[%s2 + $0xb8] sm:$0xff]
  %v71 = vld [vmem:[%s2 + $0xc0] sm:$0xff]
  %v72 = vld [vmem:[%s2 + $0xc8] sm:$0xff]
  %v73 = vld [vmem:[%s2 + $0xd0] sm:$0xff]
  %v74 = vld [vmem:[%s2 + $0xd8] sm:$0xff]
  %v75 = vld [vmem:[%s2 + $0xe0] sm:$0xff]
  %v76 = vld [vmem:[%s2 + $0xe8] sm:$0xff]
  %v77 = vld [vmem:[%s2 + $0xf0] sm:$0xff]
  %v78 = vld [vmem:[%s2 + $0xf8] sm:$0xff]
  %v79 = vld [vmem:[%s0] sm:$0xf]
  %v80 = vld [vmem:[%s0 + $0x4] sm:$0xf]
  %v81 = vld [vmem:[%s0 + $0x8] sm:$0xf]
  %v82 = vld [vmem:[%s0 + $0xc] sm:$0xf]
  %v83 = vld [vmem:[%s0 + $0x10] sm:$0xf]
  %v84 = vld [vmem:[%s0 + $0x14] sm:$0xf]
  %v85 = vld [vmem:[%s0 + $0x18] sm:$0xf]
  %v86 = vld [vmem:[%s0 + $0x1c] sm:$0xf]
  %v87 = vld [vmem:[%s0 + $0x20] sm:$0xf]
  %v88 = vld [vmem:[%s0 + $0x24] sm:$0xf]
  %v89 = vld [vmem:[%s0 + $0x28] sm:$0xf]
  %v90 = vld [vmem:[%s0 + $0x2c] sm:$0xf]
  %v91 = vld [vmem:[%s0 + $0x30] sm:$0xf]
  %v92 = vld [vmem:[%s0 + $0x34] sm:$0xf]
  %v93 = vld [vmem:[%s0 + $0x38] sm:$0xf]
  %v94 = vld [vmem:[%s0 + $0x3c] sm:$0xf]
  %v95 = vld [vmem:[%s1] sm:$0xff]
  %v96 = vld [vmem:[%s1 + $0x8] sm:$0xff]
  %v97 = vld [vmem:[%s1 + $0x10] sm:$0xff]
  %v98 = vld [vmem:[%s1 + $0x18] sm:$0xff]
  %v99 = vld [vmem:[%s1 + $0x20] sm:$0xff]
  %v100 = vld [vmem:[%s1 + $0x28] sm:$0xff]
  %v101 = vld [vmem:[%s1 + $0x30] sm:$0xff]
  %v102 = vld [vmem:[%s1 + $0x38] sm:$0xff]
  %v103 = vld [vmem:[%s1 + $0x40] sm:$0xff]
  %v104 = vld [vmem:[%s1 + $0x48] sm:$0xff]
  %v105 = vld [vmem:[%s1 + $0x50] sm:$0xff]
  %v106 = vld [vmem:[%s1 + $0x58] sm:$0xff]
  %v107 = vld [vmem:[%s1 + $0x60] sm:$0xff]
  %v108 = vld [vmem:[%s1 + $0x68] sm:$0xff]
  %v109 = vld [vmem:[%s1 + $0x70] sm:$0xff]
  %v110 = vld [vmem:[%s1 + $0x78] sm:$0xff]
  %v127 = vunpack.c.l.b16 %v79
  %v128 = vunpack.c.l.b16 %v80
  %v129 = vunpack.c.l.b16 %v81
  %v130 = vunpack.c.l.b16 %v82
  %v131 = vunpack.c.l.b16 %v83
  %v132 = vunpack.c.l.b16 %v84
  %v133 = vunpack.c.l.b16 %v85
  %v134 = vunpack.c.l.b16 %v86
  %v135 = vunpack.c.l.b16 %v87
  %v136 = vunpack.c.l.b16 %v88
  %v137 = vunpack.c.l.b16 %v89
  %v138 = vunpack.c.l.b16 %v90
  %v139 = vunpack.c.l.b16 %v91
  %v140 = vunpack.c.l.b16 %v92
  %v141 = vunpack.c.l.b16 %v93
  %v142 = vunpack.c.l.b16 %v94
  %v143 = vpack.c.b16 %v128, %v127
  %v144 = vpack.c.b16 %v130, %v129
  %v145 = vpack.c.b16 %v132, %v131
  %v146 = vpack.c.b16 %v134, %v133
  %v147 = vpack.c.b16 %v136, %v135
  %v148 = vpack.c.b16 %v138, %v137
  %v149 = vpack.c.b16 %v140, %v139
  %v150 = vpack.c.b16 %v142, %v141
  %v175 = vunpack.c.l.b16 %v95
  %v176 = vunpack.c.h.b16 %v95
  %v177 = vunpack.c.l.b16 %v96
  %v178 = vunpack.c.h.b16 %v96
  %v179 = vunpack.c.l.b16 %v97
  %v180 = vunpack.c.h.b16 %v97
  %v181 = vunpack.c.l.b16 %v98
  %v182 = vunpack.c.h.b16 %v98
  %v183 = vunpack.c.l.b16 %v99
  %v184 = vunpack.c.h.b16 %v99
  %v185 = vunpack.c.l.b16 %v100
  %v186 = vunpack.c.h.b16 %v100
  %v187 = vunpack.c.l.b16 %v101
  %v188 = vunpack.c.h.b16 %v101
  %v189 = vunpack.c.l.b16 %v102
  %v190 = vunpack.c.h.b16 %v102
  %v191 = vunpack.c.l.b16 %v103
  %v192 = vunpack.c.h.b16 %v103
  %v193 = vunpack.c.l.b16 %v104
  %v194 = vunpack.c.h.b16 %v104
  %v195 = vunpack.c.l.b16 %v105
  %v196 = vunpack.c.h.b16 %v105
  %v197 = vunpack.c.l.b16 %v106
  %v198 = vunpack.c.h.b16 %v106
  %v199 = vunpack.c.l.b16 %v107
  %v200 = vunpack.c.h.b16 %v107
  %v201 = vunpack.c.l.b16 %v108
  %v202 = vunpack.c.h.b16 %v108
  %v203 = vunpack.c.l.b16 %v109
  %v204 = vunpack.c.h.b16 %v109
  %v205 = vunpack.c.l.b16 %v110
  %v206 = vunpack.c.h.b16 %v110
  %v207 = vpack.c.b16 %v177, %v175
  %v208 = vpack.c.b16 %v178, %v176
  %v209 = vpack.c.b16 %v181, %v179
  %v210 = vpack.c.b16 %v182, %v180
  %v211 = vpack.c.b16 %v185, %v183
  %v212 = vpack.c.b16 %v186, %v184
  %v213 = vpack.c.b16 %v189, %v187
  %v214 = vpack.c.b16 %v190, %v188
  %v215 = vpack.c.b16 %v193, %v191
  %v216 = vpack.c.b16 %v194, %v192
  %v217 = vpack.c.b16 %v197, %v195
  %v218 = vpack.c.b16 %v198, %v196
  %v219 = vpack.c.b16 %v201, %v199
  %v220 = vpack.c.b16 %v202, %v200
  %v221 = vpack.c.b16 %v205, %v203
  %v222 = vpack.c.b16 %v206, %v204
  %239 = vmatpush.bf16.msra.mxu0 %v221
  %240 = vmatpush.bf16.msra.mxu0 %v219
  %241 = vmatpush.bf16.msra.mxu0 %v217
  %242 = vmatpush.bf16.msra.mxu0 %v215
  %243 = vmatpush.bf16.msra.mxu0 %v213
  %244 = vmatpush.bf16.msra.mxu0 %v211
  %245 = vmatpush.bf16.msra.mxu0 %v209
  %246 = vmatpush.bf16.msra.mxu0 %v207
  %247 = vmatmul.bf16.gmra.mxu0 %v143
  %v248 = vpop.f32.mrf.mxu0
  %v249 = vadd.f32 0.0, %v248
  %v250 = vpop.f32.mrf.mxu0
  %v251 = vadd.f32 0.0, %v250
  %252 = vmatmul.bf16.gmra.mxu0 %v144
  %v253 = vpop.f32.mrf.mxu0
  %v254 = vadd.f32 0.0, %v253
  %v255 = vpop.f32.mrf.mxu0
  %v256 = vadd.f32 0.0, %v255
  %257 = vmatmul.bf16.gmra.mxu0 %v145
  %v258 = vpop.f32.mrf.mxu0
  %v259 = vadd.f32 0.0, %v258
  %v260 = vpop.f32.mrf.mxu0
  %v261 = vadd.f32 0.0, %v260
  %262 = vmatmul.bf16.gmra.mxu0 %v146
  %v263 = vpop.f32.mrf.mxu0
  %v264 = vadd.f32 0.0, %v263
  %v265 = vpop.f32.mrf.mxu0
  %v266 = vadd.f32 0.0, %v265
  %267 = vmatmul.bf16.gmra.mxu0 %v147
  %v268 = vpop.f32.mrf.mxu0
  %v269 = vadd.f32 0.0, %v268
  %v270 = vpop.f32.mrf.mxu0
  %v271 = vadd.f32 0.0, %v270
  %272 = vmatmul.bf16.gmra.mxu0 %v148
  %v273 = vpop.f32.mrf.mxu0
  %v274 = vadd.f32 0.0, %v273
  %v275 = vpop.f32.mrf.mxu0
  %v276 = vadd.f32 0.0, %v275
  %277 = vmatmul.bf16.gmra.mxu0 %v149
  %v278 = vpop.f32.mrf.mxu0
  %v279 = vadd.f32 0.0, %v278
  %v280 = vpop.f32.mrf.mxu0
  %v281 = vadd.f32 0.0, %v280
  %282 = vmatmul.bf16.gmra.mxu0 %v150
  %v283 = vpop.f32.mrf.mxu0
  %v284 = vadd.f32 0.0, %v283
  %v285 = vpop.f32.mrf.mxu0
  %v286 = vadd.f32 0.0, %v285
  %287 = vdwg.mxu0
  %288 = vmatpush.bf16.msra.mxu0 %v222
  %289 = vmatpush.bf16.msra.mxu0 %v220
  %290 = vmatpush.bf16.msra.mxu0 %v218
  %291 = vmatpush.bf16.msra.mxu0 %v216
  %292 = vmatpush.bf16.msra.mxu0 %v214
  %293 = vmatpush.bf16.msra.mxu0 %v212
  %294 = vmatpush.bf16.msra.mxu0 %v210
  %295 = vmatpush.bf16.msra.mxu0 %v208
  %296 = vmatmul.bf16.gmra.mxu0 %v143
  %v297 = vpop.f32.mrf.mxu0
  %v298 = vadd.f32 0.0, %v297
  %v299 = vpop.f32.mrf.mxu0
  %v300 = vadd.f32 0.0, %v299
  %301 = vmatmul.bf16.gmra.mxu0 %v144
  %v302 = vpop.f32.mrf.mxu0
  %v303 = vadd.f32 0.0, %v302
  %v304 = vpop.f32.mrf.mxu0
  %v305 = vadd.f32 0.0, %v304
  %306 = vmatmul.bf16.gmra.mxu0 %v145
  %v307 = vpop.f32.mrf.mxu0
  %v308 = vadd.f32 0.0, %v307
  %v309 = vpop.f32.mrf.mxu0
  %v310 = vadd.f32 0.0, %v309
  %311 = vmatmul.bf16.gmra.mxu0 %v146
  %v312 = vpop.f32.mrf.mxu0
  %v313 = vadd.f32 0.0, %v312
  %v314 = vpop.f32.mrf.mxu0
  %v315 = vadd.f32 0.0, %v314
  %316 = vmatmul.bf16.gmra.mxu0 %v147
  %v317 = vpop.f32.mrf.mxu0
  %v318 = vadd.f32 0.0, %v317
  %v319 = vpop.f32.mrf.mxu0
  %v320 = vadd.f32 0.0, %v319
  %321 = vmatmul.bf16.gmra.mxu0 %v148
  %v322 = vpop.f32.mrf.mxu0
  %v323 = vadd.f32 0.0, %v322
  %v324 = vpop.f32.mrf.mxu0
  %v325 = vadd.f32 0.0, %v324
  %326 = vmatmul.bf16.gmra.mxu0 %v149
  %v327 = vpop.f32.mrf.mxu0
  %v328 = vadd.f32 0.0, %v327
  %v329 = vpop.f32.mrf.mxu0
  %v330 = vadd.f32 0.0, %v329
  %331 = vmatmul.bf16.gmra.mxu0 %v150
  %v332 = vpop.f32.mrf.mxu0
  %v333 = vadd.f32 0.0, %v332
  %v334 = vpop.f32.mrf.mxu0
  %v335 = vadd.f32 0.0, %v334
  %336 = vdwg.mxu0
  %v337 = vadd.f32 %v47, %v249
  %v338 = vadd.f32 %v48, %v298
  %v339 = vadd.f32 %v49, %v251
  %v340 = vadd.f32 %v50, %v300
  %v341 = vadd.f32 %v51, %v254
  %v342 = vadd.f32 %v52, %v303
  %v343 = vadd.f32 %v53, %v256
  %v344 = vadd.f32 %v54, %v305
  %v345 = vadd.f32 %v55, %v259
  %v346 = vadd.f32 %v56, %v308
  %v347 = vadd.f32 %v57, %v261
  %v348 = vadd.f32 %v58, %v310
  %v349 = vadd.f32 %v59, %v264
  %v350 = vadd.f32 %v60, %v313
  %v351 = vadd.f32 %v61, %v266
  %v352 = vadd.f32 %v62, %v315
  %v353 = vadd.f32 %v63, %v269
  %v354 = vadd.f32 %v64, %v318
  %v355 = vadd.f32 %v65, %v271
  %v356 = vadd.f32 %v66, %v320
  %v357 = vadd.f32 %v67, %v274
  %v358 = vadd.f32 %v68, %v323
  %v359 = vadd.f32 %v69, %v276
  %v360 = vadd.f32 %v70, %v325
  %v361 = vadd.f32 %v71, %v279
  %v362 = vadd.f32 %v72, %v328
  %v363 = vadd.f32 %v73, %v281
  %v364 = vadd.f32 %v74, %v330
  %v365 = vadd.f32 %v75, %v284
  %v366 = vadd.f32 %v76, %v333
  %v367 = vadd.f32 %v77, %v286
  %v368 = vadd.f32 %v78, %v335
  %369 = vst [vmem:[%s2] sm:$0xff] %v337
  %370 = vst [vmem:[%s2 + $0x8] sm:$0xff] %v338
  %371 = vst [vmem:[%s2 + $0x10] sm:$0xff] %v339
  %372 = vst [vmem:[%s2 + $0x18] sm:$0xff] %v340
  %373 = vst [vmem:[%s2 + $0x20] sm:$0xff] %v341
  %374 = vst [vmem:[%s2 + $0x28] sm:$0xff] %v342
  %375 = vst [vmem:[%s2 + $0x30] sm:$0xff] %v343
  %376 = vst [vmem:[%s2 + $0x38] sm:$0xff] %v344
  %377 = vst [vmem:[%s2 + $0x40] sm:$0xff] %v345
  %378 = vst [vmem:[%s2 + $0x48] sm:$0xff] %v346
  %379 = vst [vmem:[%s2 + $0x50] sm:$0xff] %v347
  %380 = vst [vmem:[%s2 + $0x58] sm:$0xff] %v348
  %381 = vst [vmem:[%s2 + $0x60] sm:$0xff] %v349
  %382 = vst [vmem:[%s2 + $0x68] sm:$0xff] %v350
  %383 = vst [vmem:[%s2 + $0x70] sm:$0xff] %v351
  %384 = vst [vmem:[%s2 + $0x78] sm:$0xff] %v352
  %385 = vst [vmem:[%s2 + $0x80] sm:$0xff] %v353
  %386 = vst [vmem:[%s2 + $0x88] sm:$0xff] %v354
  %387 = vst [vmem:[%s2 + $0x90] sm:$0xff] %v355
  %388 = vst [vmem:[%s2 + $0x98] sm:$0xff] %v356
  %389 = vst [vmem:[%s2 + $0xa0] sm:$0xff] %v357
  %390 = vst [vmem:[%s2 + $0xa8] sm:$0xff] %v358
  %391 = vst [vmem:[%s2 + $0xb0] sm:$0xff] %v359
  %392 = vst [vmem:[%s2 + $0xb8] sm:$0xff] %v360
  %393 = vst [vmem:[%s2 + $0xc0] sm:$0xff] %v361
  %394 = vst [vmem:[%s2 + $0xc8] sm:$0xff] %v362
  %395 = vst [vmem:[%s2 + $0xd0] sm:$0xff] %v363
  %396 = vst [vmem:[%s2 + $0xd8] sm:$0xff] %v364
  %397 = vst [vmem:[%s2 + $0xe0] sm:$0xff] %v365
  %398 = vst [vmem:[%s2 + $0xe8] sm:$0xff] %v366
  %399 = vst [vmem:[%s2 + $0xf0] sm:$0xff] %v367
  %400 = vst [vmem:[%s2 + $0xf8] sm:$0xff] %v368
  // Predicated region
  $region14: #{_lambda_.14} parent=0 // pred_check
    _
  $region15: #{_lambda_.14} parent=0 // pred_check_branch
    %402 = sbr.rel (0) target = $region17
  $region16: #{_lambda_.14} parent=0 // pred_region
    _
  $region17: #{_lambda_.14} parent=0 // pred_fallthru
    _
  // Predicated region
  $region18: #{_lambda_.14} parent=0 // pred_check
    _
  $region19: #{_lambda_.14} parent=0 // pred_check_branch
    %404 = sbr.rel (0) target = $region21
  $region20: #{_lambda_.14} parent=0 // pred_region
    _
  $region21: #{_lambda_.14} parent=0 // pred_fallthru
    _

// kernel: _lambda_.15
$region0: #{_lambda_.15}
  #allocation0 [shape = 'u32[]', space=smem, size = 0x4, offset = 0x4, fixed_abs, tag = 'smem constant byte address 0x4 - core index']
  #allocation1 [shape = 'u32[72,128]{1,0:T(1,128)}', space=vmem, size = 0x9000, scoped, tag = 'internal scratch']
  #allocation2 [shape = 'f32[1,128]{1,0:T(1,128)}', space=vmem, size = 0x200, scoped, tag = 'scratch operand']
  #allocation3 [shape = 'f32[1,128]{1,0:T(1,128)}', space=vmem, size = 0x200, scoped, tag = 'scratch operand']
  %s0 = inlined_call_operand.vmem [shape: f32[512,128], index: 0, kind: input, shape index: {}]
  %s1 = inlined_call_operand.vmem [shape: f32[1,128], index: 1, kind: input, shape index: {}]
  %s2 = inlined_call_operand.vmem [shape: f32[1,128], index: 2, kind: input, shape index: {}]
  %s3 = inlined_call_operand.vmem [shape: bf16[512,128], index: 3, kind: output, shape index: {}]
  %s4 = sld [smem:[#allocation0]]
  $region61: #{_lambda_.15} parent=0
    _
  %s6 = ssub.s32 1, %s4
  %s7 = scalar_select 0, %s6, %s4
  loop: start=0, step=1, limit=6
  $region2: #{_lambda_.15} parent=0 // loop_pre_header
    _
  $region3: #{_lambda_.15} parent=0 // loop_header
    %s9 = sphi 0, %s13
    %p10 = scmp.ge.s32.totalorder %s9, 6
    %s16 = sphi 0, %s28
    %s17 = sphi 0, %s24
    %s18 = sphi 0, %s16
    %s19 = sphi 0, %s17
    %s20 = sphi 0, %s18
    %s21 = sphi 0, %s19
    %s31 = sphi 0, %s33
    %s34 = sphi 0, %s31
    %s35 = sphi 0, %s34
    %s51 = sphi 0, %s35
    %s55 = sphi 0, %s55
    %s57 = sphi 0, %s55
    %s58 = sphi 0, %s57
    %s72 = sphi 0, %s58
    %s76 = sphi 0, %s76
    %s78 = sphi 0, %s76
    %s79 = sphi 0, %s78
    %s93 = sphi 0, %s79
    %s99 = sphi 0, %s101
    %s102 = sphi 0, %s99
    %s103 = sphi 0, %s102
    %s119 = sphi 0, %s103
  $region4: #{_lambda_.15} parent=0 // loop_header_branch
    %12 = sbr.rel (%p10) target = $region8
  $region5: #{_lambda_.15} parent=0 // loop_body
    %s14 = ssub.s32 %s9, 1
    %s15 = ssub.s32 %s9, 2
    %s22 = sadd.s32 1, %s17
    %p23 = scmp.ge.s32.totalorder %s22, 2
    %s24 = scalar_select %p23, 0, %s22
    %s25 = sadd.s32 1, %s16
    %s26 = scalar_select %p23, %s25, %s16
    %p27 = scmp.ge.s32.totalorder %s26, 2
    %s28 = scalar_select %p27, 0, %s26
    %s29 = ssub.s32 %s17, %s24
    %p30 = scmp.eq.s32.totalorder %s29, 0
    %s32 = sadd.s32 %s31, 1
    %s33 = scalar_select %p30, %s31, %s32
    %p36 = pneg %p30
    %p37 = scmp.eq.s32.totalorder %s9, 3
    %p38 = por %p36, %p37
    %p39 = scmp.ne.s32.totalorder %s31, %s34
    %p40 = scmp.eq.s32.totalorder %s9, 0
    %p41 = por %p39, %p40
    %p42 = scmp.ne.s32.totalorder %s31, %s34
    %p43 = scmp.eq.s32.totalorder %s14, 3
    %p44 = por %p42, %p43
    %p45 = scmp.ne.s32.totalorder %s34, %s35
    %p46 = scmp.eq.s32.totalorder %s14, 0
    %p47 = por %p45, %p46
    %p48 = scmp.ne.s32.totalorder %s34, %s35
    %p49 = scmp.eq.s32.totalorder %s15, 3
    %p50 = por %p48, %p49
    %p52 = scmp.ne.s32.totalorder %s35, %s51
    %p53 = scmp.eq.s32.totalorder %s15, 0
    %p54 = por %p52, %p53
    %s56 = sadd.s32 %s55, 1
    %p59 = scmp.eq.s32.totalorder %s9, 3
    %p60 = scmp.ne.s32.totalorder %s55, %s57
    %p61 = scmp.eq.s32.totalorder %s9, 0
    %p62 = por %p60, %p61
    %p63 = scmp.ne.s32.totalorder %s55, %s57
    %p64 = scmp.eq.s32.totalorder %s14, 3
    %p65 = por %p63, %p64
    %p66 = scmp.ne.s32.totalorder %s57, %s58
    %p67 = scmp.eq.s32.totalorder %s14, 0
    %p68 = por %p66, %p67
    %p69 = scmp.ne.s32.totalorder %s57, %s58
    %p70 = scmp.eq.s32.totalorder %s15, 3
    %p71 = por %p69, %p70
    %p73 = scmp.ne.s32.totalorder %s58, %s72
    %p74 = scmp.eq.s32.totalorder %s15, 0
    %p75 = por %p73, %p74
    %s77 = sadd.s32 %s76, 1
    %p80 = scmp.eq.s32.totalorder %s9, 3
    %p81 = scmp.ne.s32.totalorder %s76, %s78
    %p82 = scmp.eq.s32.totalorder %s9, 0
    %p83 = por %p81, %p82
    %p84 = scmp.ne.s32.totalorder %s76, %s78
    %p85 = scmp.eq.s32.totalorder %s14, 3
    %p86 = por %p84, %p85
    %p87 = scmp.ne.s32.totalorder %s78, %s79
    %p88 = scmp.eq.s32.totalorder %s14, 0
    %p89 = por %p87, %p88
    %p90 = scmp.ne.s32.totalorder %s78, %s79
    %p91 = scmp.eq.s32.totalorder %s15, 3
    %p92 = por %p90, %p91
    %p94 = scmp.ne.s32.totalorder %s79, %s93
    %p95 = scmp.eq.s32.totalorder %s15, 0
    %p96 = por %p94, %p95
    %s97 = ssub.s32 %s17, %s24
    %p98 = scmp.eq.s32.totalorder %s97, 0
    %s100 = sadd.s32 %s99, 1
    %s101 = scalar_select %p98, %s99, %s100
    %p104 = pneg %p98
    %p105 = scmp.eq.s32.totalorder %s9, 3
    %p106 = por %p104, %p105
    %p107 = scmp.ne.s32.totalorder %s99, %s102
    %p108 = scmp.eq.s32.totalorder %s9, 0
    %p109 = por %p107, %p108
    %p110 = scmp.ne.s32.totalorder %s99, %s102
    %p111 = scmp.eq.s32.totalorder %s14, 3
    %p112 = por %p110, %p111
    %p113 = scmp.ne.s32.totalorder %s102, %s103
    %p114 = scmp.eq.s32.totalorder %s14, 0
    %p115 = por %p113, %p114
    %p116 = scmp.ne.s32.totalorder %s102, %s103
    %p117 = scmp.eq.s32.totalorder %s15, 3
    %p118 = por %p116, %p117
    %p120 = scmp.ne.s32.totalorder %s103, %s119
    %p121 = scmp.eq.s32.totalorder %s15, 0
    %p122 = por %p120, %p121
    %p123 = scmp.le.s32.totalorder 1, %s9
    %p124 = scmp.lt.s32.totalorder %s9, 5
    %p125 = pnand %p123, %p124
    %p126 = pneg %p125
    // Predicated region
    $region9: #{_lambda_.15} parent=5 // pred_check
      _
    $region10: #{_lambda_.15} parent=5 // pred_check_branch
      %128 = sbr.rel (%p125) target = $region12
    $region11: #{_lambda_.15} parent=5 // pred_region
      %s129 = ssub.s32 %s9, 1
      // Predicated region
      $region13: #{_lambda_.15} parent=11 // pred_check
        %p130 = pneg %p68
      $region14: #{_lambda_.15} parent=11 // pred_check_branch
        %132 = sbr.rel (%p130) target = $region16
      $region15: #{_lambda_.15} parent=11 // pred_region
        _
      $region16: #{_lambda_.15} parent=11 // pred_fallthru
        _
      // Predicated region
      $region17: #{_lambda_.15} parent=11 // pred_check
        %p133 = pneg %p89
      $region18: #{_lambda_.15} parent=11 // pred_check_branch
        %135 = sbr.rel (%p133) target = $region20
      $region19: #{_lambda_.15} parent=11 // pred_region
        _
      $region20: #{_lambda_.15} parent=11 // pred_fallthru
        _
    $region12: #{_lambda_.15} parent=5 // pred_fallthru
      _
    %p136 = scmp.lt.s32.totalorder %s9, 4
    // Predicated region
    $region21: #{_lambda_.15} parent=5 // pred_check
      %p137 = pneg %p136
    $region22: #{_lambda_.15} parent=5 // pred_check_branch
      %139 = sbr.rel (%p137) target = $region24
    $region23: #{_lambda_.15} parent=5 // pred_region
      // Predicated region
      $region25: #{_lambda_.15} parent=23 // pred_check
        %p140 = pneg %p41
      $region26: #{_lambda_.15} parent=23 // pred_check_branch
        %142 = sbr.rel (%p140) target = $region28
      $region27: #{_lambda_.15} parent=23 // pred_region
        %s143 = smul.u32 32, %s17
        %p144 = scmp.lt.s32.totalorder %s143, 63
        %s145 = scalar_select %p144, %s143, 63
        %s146 = smul.addr %s145, 8
        %s147 = scalar_lea.vmem %s0, %s146
        %s148 = smul.u32 32, %s17
      $region28: #{_lambda_.15} parent=23 // pred_fallthru
        _
    $region24: #{_lambda_.15} parent=5 // pred_fallthru
      _
    %p149 = scmp.le.s32.totalorder 1, %s9
    %p150 = scmp.lt.s32.totalorder %s9, 5
    %p151 = pnand %p149, %p150
    %p152 = pneg %p151
    // Predicated region
    $region29: #{_lambda_.15} parent=5 // pred_check
      _
    $region30: #{_lambda_.15} parent=5 // pred_check_branch
      %154 = sbr.rel (%p151) target = $region32
    $region31: #{_lambda_.15} parent=5 // pred_region
      %s155 = ssub.s32 %s9, 1
      %s156 = smul.u32 32, %s19
      %p157 = scmp.lt.s32.totalorder %s156, 63
      %s158 = scalar_select %p157, %s156, 63
      %s159 = smul.addr %s158, 8
      %s160 = scalar_lea.vmem %s0, %s159
      %p161 = pneg %p47
      %p162 = pneg %p44
      %p163 = pneg %p68
      %p164 = pneg %p65
      %p165 = pneg %p89
      %p166 = pneg %p86
      %p167 = pneg %p115
      %p168 = pneg %p112
      %s169 = smul.u32 32, %s19
      %p170 = scmp.lt.s32.totalorder %s169, 63
      %s171 = scalar_select %p170, %s169, 63
      %s172 = smul.addr %s171, 4
      %s173 = scalar_lea.vmem %s3, %s172
      %s174 = smul.u32 32, %s19
      %p175 = scmp.lt.s32.totalorder %s174, 63
      %s176 = scalar_select %p175, %s174, 63
      %s177 = smul.addr %s176, 8
      %s178 = scalar_lea.vmem %s0, %s177
      %s179 = smul.u32 32, %s19
      %s180 = smul.u32 32, %s19
      %p181 = scmp.lt.s32.totalorder %s180, 63
      %s182 = scalar_select %p181, %s180, 63
      %s183 = smul.addr %s182, 4
      %s184 = scalar_lea.vmem %s3, %s183
      %s185 = smul.u32 32, %s19
      %p186 = scmp.eq.s32.totalorder %s18, 0
      %p187 = scmp.eq.s32.totalorder %s19, 0
      %p188 = pnand %p186, %p187
      %p189 = pneg %p188
      // Predicated region
      $region33: #{_lambda_.15} parent=31 // pred_check
        _
      $region34: #{_lambda_.15} parent=31 // pred_check_branch
        %191 = sbr.rel (%p188) target = $region36
      $region35: #{_lambda_.15} parent=31 // pred_region
        %192 = vst [vmem:[#allocation2] sm:$0x1] 0.0
        %193 = vst [vmem:[#allocation3] sm:$0x1] 0.0
      $region36: #{_lambda_.15} parent=31 // pred_fallthru
        _
      // Predicated region
      $region37: #{_lambda_.15} parent=31 // pred_check
        %p194 = pneg %p186
      $region38: #{_lambda_.15} parent=31 // pred_check_branch
        %196 = sbr.rel (%p194) target = $region40
      $region39: #{_lambda_.15} parent=31 // pred_region
        %v197 = vld [vmem:[%s178] sm:$0xff]
        %v198 = vld [vmem:[%s178 + $0x8] sm:$0xff]
        %v199 = vld [vmem:[%s178 + $0x10] sm:$0xff]
        %v200 = vld [vmem:[%s178 + $0x18] sm:$0xff]
        %v201 = vld [vmem:[%s178 + $0x20] sm:$0xff]
        %v202 = vld [vmem:[%s178 + $0x28] sm:$0xff]
        %v203 = vld [vmem:[%s178 + $0x30] sm:$0xff]
        %v204 = vld [vmem:[%s178 + $0x38] sm:$0xff]
        %v205 = vld [vmem:[%s178 + $0x40] sm:$0xff]
        %v206 = vld [vmem:[%s178 + $0x48] sm:$0xff]
        %v207 = vld [vmem:[%s178 + $0x50] sm:$0xff]
        %v208 = vld [vmem:[%s178 + $0x58] sm:$0xff]
        %v209 = vld [vmem:[%s178 + $0x60] sm:$0xff]
        %v210 = vld [vmem:[%s178 + $0x68] sm:$0xff]
        %v211 = vld [vmem:[%s178 + $0x70] sm:$0xff]
        %v212 = vld [vmem:[%s178 + $0x78] sm:$0xff]
        %v213 = vld [vmem:[%s178 + $0x80] sm:$0xff]
        %v214 = vld [vmem:[%s178 + $0x88] sm:$0xff]
        %v215 = vld [vmem:[%s178 + $0x90] sm:$0xff]
        %v216 = vld [vmem:[%s178 + $0x98] sm:$0xff]
        %v217 = vld [vmem:[%s178 + $0xa0] sm:$0xff]
        %v218 = vld [vmem:[%s178 + $0xa8] sm:$0xff]
        %v219 = vld [vmem:[%s178 + $0xb0] sm:$0xff]
        %v220 = vld [vmem:[%s178 + $0xb8] sm:$0xff]
        %v221 = vld [vmem:[%s178 + $0xc0] sm:$0xff]
        %v222 = vld [vmem:[%s178 + $0xc8] sm:$0xff]
        %v223 = vld [vmem:[%s178 + $0xd0] sm:$0xff]
        %v224 = vld [vmem:[%s178 + $0xd8] sm:$0xff]
        %v225 = vld [vmem:[%s178 + $0xe0] sm:$0xff]
        %v226 = vld [vmem:[%s178 + $0xe8] sm:$0xff]
        %v227 = vld [vmem:[%s178 + $0xf0] sm:$0xff]
        %v228 = vld [vmem:[%s178 + $0xf8] sm:$0xff]
        %v229 = vld [vmem:[#allocation2] sm:$0x1]
        %v230 = vadd.f32 %v197, %v198
        %v231 = vadd.f32 %v230, %v199
        %v232 = vadd.f32 %v231, %v200
        %v233 = vadd.f32 %v232, %v201
        %v234 = vadd.f32 %v233, %v202
        %v235 = vadd.f32 %v234, %v203
        %v236 = vadd.f32 %v235, %v204
        %v237 = vadd.f32 %v236, %v205
        %v238 = vadd.f32 %v237, %v206
        %v239 = vadd.f32 %v238, %v207
        %v240 = vadd.f32 %v239, %v208
        %v241 = vadd.f32 %v240, %v209
        %v242 = vadd.f32 %v241, %v210
        %v243 = vadd.f32 %v242, %v211
        %v244 = vadd.f32 %v243, %v212
        %v245 = vadd.f32 %v244, %v213
        %v246 = vadd.f32 %v245, %v214
        %v247 = vadd.f32 %v246, %v215
        %v248 = vadd.f32 %v247, %v216
        %v249 = vadd.f32 %v248, %v217
        %v250 = vadd.f32 %v249, %v218
        %v251 = vadd.f32 %v250, %v219
        %v252 = vadd.f32 %v251, %v220
        %v253 = vadd.f32 %v252, %v221
        %v254 = vadd.f32 %v253, %v222
        %v255 = vadd.f32 %v254, %v223
        %v256 = vadd.f32 %v255, %v224
        %v257 = vadd.f32 %v256, %v225
        %v258 = vadd.f32 %v257, %v226
        %v259 = vadd.f32 %v258, %v227
        %v260 = vadd.f32 %v259, %v228
        %v261 = vrot.slane %v260, 4
        %v262 = vadd.f32 %v260, %v261
        %v263 = vrot.slane %v262, 2
        %v264 = vadd.f32 %v262, %v263
        %v265 = vrot.slane %v264, 1
        %v266 = vadd.f32 %v264, %v265
        %v267 = vadd.f32 %v229, %v266
        %268 = vst [vmem:[#allocation2] sm:$0x1] %v267
        %v269 = vld [vmem:[#allocation3] sm:$0x1]
        %v270 = vmul.f32 %v197, %v197
        %v271 = vmul.f32 %v198, %v198
        %v272 = vmul.f32 %v199, %v199
        %v273 = vmul.f32 %v200, %v200
        %v274 = vmul.f32 %v201, %v201
        %v275 = vmul.f32 %v202, %v202
        %v276 = vmul.f32 %v203, %v203
        %v277 = vmul.f32 %v204, %v204
        %v278 = vmul.f32 %v205, %v205
        %v279 = vmul.f32 %v206, %v206
        %v280 = vmul.f32 %v207, %v207
        %v281 = vmul.f32 %v208, %v208
        %v282 = vmul.f32 %v209, %v209
        %v283 = vmul.f32 %v210, %v210
        %v284 = vmul.f32 %v211, %v211
        %v285 = vmul.f32 %v212, %v212
        %v286 = vmul.f32 %v213, %v213
        %v287 = vmul.f32 %v214, %v214
        %v288 = vmul.f32 %v215, %v215
        %v289 = vmul.f32 %v216, %v216
        %v290 = vmul.f32 %v217, %v217
        %v291 = vmul.f32 %v218, %v218
        %v292 = vmul.f32 %v219, %v219
        %v293 = vmul.f32 %v220, %v220
        %v294 = vmul.f32 %v221, %v221
        %v295 = vmul.f32 %v222, %v222
        %v296 = vmul.f32 %v223, %v223
        %v297 = vmul.f32 %v224, %v224
        %v298 = vmul.f32 %v225, %v225
        %v299 = vmul.f32 %v226, %v226
        %v300 = vmul.f32 %v227, %v227
        %v301 = vmul.f32 %v228, %v228
        %v302 = vadd.f32 %v270, %v271
        %v303 = vadd.f32 %v302, %v272
        %v304 = vadd.f32 %v303, %v273
        %v305 = vadd.f32 %v304, %v274
        %v306 = vadd.f32 %v305, %v275
        %v307 = vadd.f32 %v306, %v276
        %v308 = vadd.f32 %v307, %v277
        %v309 = vadd.f32 %v308, %v278
        %v310 = vadd.f32 %v309, %v279
        %v311 = vadd.f32 %v310, %v280
        %v312 = vadd.f32 %v311, %v281
        %v313 = vadd.f32 %v312, %v282
        %v314 = vadd.f32 %v313, %v283
        %v315 = vadd.f32 %v314, %v284
        %v316 = vadd.f32 %v315, %v285
        %v317 = vadd.f32 %v316, %v286
        %v318 = vadd.f32 %v317, %v287
        %v319 = vadd.f32 %v318, %v288
        %v320 = vadd.f32 %v319, %v289
        %v321 = vadd.f32 %v320, %v290
        %v322 = vadd.f32 %v321, %v291
        %v323 = vadd.f32 %v322, %v292
        %v324 = vadd.f32 %v323, %v293
        %v325 = vadd.f32 %v324, %v294
        %v326 = vadd.f32 %v325, %v295
        %v327 = vadd.f32 %v326, %v296
        %v328 = vadd.f32 %v327, %v297
        %v329 = vadd.f32 %v328, %v298
        %v330 = vadd.f32 %v329, %v299
        %v331 = vadd.f32 %v330, %v300
        %v332 = vadd.f32 %v331, %v301
        %v333 = vrot.slane %v332, 4
        %v334 = vadd.f32 %v332, %v333
        %v335 = vrot.slane %v334, 2
        %v336 = vadd.f32 %v334, %v335
        %v337 = vrot.slane %v336, 1
        %v338 = vadd.f32 %v336, %v337
        %v339 = vadd.f32 %v269, %v338
        %340 = vst [vmem:[#allocation3] sm:$0x1] %v339
        %v341 = vpack.c.bf16 %v197, %v197
        %v342 = vpack.c.bf16 %v198, %v198
        %v343 = vpack.c.bf16 %v199, %v199
        %v344 = vpack.c.bf16 %v200, %v200
        %v345 = vpack.c.bf16 %v201, %v201
        %v346 = vpack.c.bf16 %v202, %v202
        %v347 = vpack.c.bf16 %v203, %v203
        %v348 = vpack.c.bf16 %v204, %v204
        %v349 = vpack.c.bf16 %v205, %v205
        %v350 = vpack.c.bf16 %v206, %v206
        %v351 = vpack.c.bf16 %v207, %v207
        %v352 = vpack.c.bf16 %v208, %v208
        %v353 = vpack.c.bf16 %v209, %v209
        %v354 = vpack.c.bf16 %v210, %v210
        %v355 = vpack.c.bf16 %v211, %v211
        %v356 = vpack.c.bf16 %v212, %v212
        %v357 = vpack.c.bf16 %v213, %v213
        %v358 = vpack.c.bf16 %v214, %v214
        %v359 = vpack.c.bf16 %v215, %v215
        %v360 = vpack.c.bf16 %v216, %v216
        %v361 = vpack.c.bf16 %v217, %v217
        %v362 = vpack.c.bf16 %v218, %v218
        %v363 = vpack.c.bf16 %v219, %v219
        %v364 = vpack.c.bf16 %v220, %v220
        %v365 = vpack.c.bf16 %v221, %v221
        %v366 = vpack.c.bf16 %v222, %v222
        %v367 = vpack.c.bf16 %v223, %v223
        %v368 = vpack.c.bf16 %v224, %v224
        %v369 = vpack.c.bf16 %v225, %v225
        %v370 = vpack.c.bf16 %v226, %v226
        %v371 = vpack.c.bf16 %v227, %v227
        %v372 = vpack.c.bf16 %v228, %v228
        %373 = vst [vmem:[%s184] sm:$0xf] %v341
        %374 = vst [vmem:[%s184 + $0x4] sm:$0xf] %v342
        %375 = vst [vmem:[%s184 + $0x8] sm:$0xf] %v343
        %376 = vst [vmem:[%s184 + $0xc] sm:$0xf] %v344
        %377 = vst [vmem:[%s184 + $0x10] sm:$0xf] %v345
        %378 = vst [vmem:[%s184 + $0x14] sm:$0xf] %v346
        %379 = vst [vmem:[%s184 + $0x18] sm:$0xf] %v347
        %380 = vst [vmem:[%s184 + $0x1c] sm:$0xf] %v348
        %381 = vst [vmem:[%s184 + $0x20] sm:$0xf] %v349
        %382 = vst [vmem:[%s184 + $0x24] sm:$0xf] %v350
        %383 = vst [vmem:[%s184 + $0x28] sm:$0xf] %v351
        %384 = vst [vmem:[%s184 + $0x2c] sm:$0xf] %v352
        %385 = vst [vmem:[%s184 + $0x30] sm:$0xf] %v353
        %386 = vst [vmem:[%s184 + $0x34] sm:$0xf] %v354
        %387 = vst [vmem:[%s184 + $0x38] sm:$0xf] %v355
        %388 = vst [vmem:[%s184 + $0x3c] sm:$0xf] %v356
        %389 = vst [vmem:[%s184 + $0x40] sm:$0xf] %v357
        %390 = vst [vmem:[%s184 + $0x44] sm:$0xf] %v358
        %391 = vst [vmem:[%s184 + $0x48] sm:$0xf] %v359
        %392 = vst [vmem:[%s184 + $0x4c] sm:$0xf] %v360
        %393 = vst [vmem:[%s184 + $0x50] sm:$0xf] %v361
        %394 = vst [vmem:[%s184 + $0x54] sm:$0xf] %v362
        %395 = vst [vmem:[%s184 + $0x58] sm:$0xf] %v363
        %396 = vst [vmem:[%s184 + $0x5c] sm:$0xf] %v364
        %397 = vst [vmem:[%s184 + $0x60] sm:$0xf] %v365
        %398 = vst [vmem:[%s184 + $0x64] sm:$0xf] %v366
        %399 = vst [vmem:[%s184 + $0x68] sm:$0xf] %v367
        %400 = vst [vmem:[%s184 + $0x6c] sm:$0xf] %v368
        %401 = vst [vmem:[%s184 + $0x70] sm:$0xf] %v369
        %402 = vst [vmem:[%s184 + $0x74] sm:$0xf] %v370
        %403 = vst [vmem:[%s184 + $0x78] sm:$0xf] %v371
        %404 = vst [vmem:[%s184 + $0x7c] sm:$0xf] %v372
      $region40: #{_lambda_.15} parent=31 // pred_fallthru
        _
      %p405 = scmp.eq.s32.totalorder %s18, 1
      %p406 = pnand %p405, %p187
      %p407 = pneg %p406
      // Predicated region
      $region41: #{_lambda_.15} parent=31 // pred_check
        _
      $region42: #{_lambda_.15} parent=31 // pred_check_branch
        %409 = sbr.rel (%p406) target = $region44
      $region43: #{_lambda_.15} parent=31 // pred_region
        %v410 = vld [vmem:[#allocation2] sm:$0x1]
        %v411 = vmul.f32 %v410, 0.001953125
        %v412 = vld [vmem:[#allocation3] sm:$0x1]
        %v413 = vmul.f32 %v412, 0.001953125
        %v414 = vmul.f32 %v411, %v411
        %v415 = vsub.f32 %v413, %v414
        %v416 = vld [vmem:[%s1] sm:$0x1]
        %v417 = vadd.f32 %v415, 1e-05
        %v418 = vrsqrt.pop %v417
        %v419 = vmul.f32 %v418, %v417
        %v420 = vmul.f32 %v419, %v418
        %v421 = vmul.f32 0.5, %v420
        %v422 = vsub.f32 1.5, %v421
        %v423 = vmul.f32 %v418, %v422
        %vm424 = vweird.f32 %v417
        %vm425 = vweird.f32 %v418
        %vm426 = vmor %vm424, %vm425
        %v427 = vsel %vm426, %v418, %v423
        %v428 = vmul.f32 %v416, %v427
        %429 = vst [vmem:[#allocation2] sm:$0x1] %v428
        %v430 = vld [vmem:[%s2] sm:$0x1]
        %v431 = vmul.f32 %v411, %v428
        %v432 = vsub.f32 %v430, %v431
        %433 = vst [vmem:[#allocation3] sm:$0x1] %v432
      $region44: #{_lambda_.15} parent=31 // pred_fallthru
        _
      // Predicated region
      $region45: #{_lambda_.15} parent=31 // pred_check
        %p434 = pneg %p405
      $region46: #{_lambda_.15} parent=31 // pred_check_branch
        %436 = sbr.rel (%p434) target = $region48
      $region47: #{_lambda_.15} parent=31 // pred_region
        %v437 = vld [vmem:[%s178] sm:$0xff]
        %v438 = vld [vmem:[%s178 + $0x8] sm:$0xff]
        %v439 = vld [vmem:[%s178 + $0x10] sm:$0xff]
        %v440 = vld [vmem:[%s178 + $0x18] sm:$0xff]
        %v441 = vld [vmem:[%s178 + $0x20] sm:$0xff]
        %v442 = vld [vmem:[%s178 + $0x28] sm:$0xff]
        %v443 = vld [vmem:[%s178 + $0x30] sm:$0xff]
        %v444 = vld [vmem:[%s178 + $0x38] sm:$0xff]
        %v445 = vld [vmem:[%s178 + $0x40] sm:$0xff]
        %v446 = vld [vmem:[%s178 + $0x48] sm:$0xff]
        %v447 = vld [vmem:[%s178 + $0x50] sm:$0xff]
        %v448 = vld [vmem:[%s178 + $0x58] sm:$0xff]
        %v449 = vld [vmem:[%s178 + $0x60] sm:$0xff]
        %v450 = vld [vmem:[%s178 + $0x68] sm:$0xff]
        %v451 = vld [vmem:[%s178 + $0x70] sm:$0xff]
        %v452 = vld [vmem:[%s178 + $0x78] sm:$0xff]
        %v453 = vld [vmem:[%s178 + $0x80] sm:$0xff]
        %v454 = vld [vmem:[%s178 + $0x88] sm:$0xff]
        %v455 = vld [vmem:[%s178 + $0x90] sm:$0xff]
        %v456 = vld [vmem:[%s178 + $0x98] sm:$0xff]
        %v457 = vld [vmem:[%s178 + $0xa0] sm:$0xff]
        %v458 = vld [vmem:[%s178 + $0xa8] sm:$0xff]
        %v459 = vld [vmem:[%s178 + $0xb0] sm:$0xff]
        %v460 = vld [vmem:[%s178 + $0xb8] sm:$0xff]
        %v461 = vld [vmem:[%s178 + $0xc0] sm:$0xff]
        %v462 = vld [vmem:[%s178 + $0xc8] sm:$0xff]
        %v463 = vld [vmem:[%s178 + $0xd0] sm:$0xff]
        %v464 = vld [vmem:[%s178 + $0xd8] sm:$0xff]
        %v465 = vld [vmem:[%s178 + $0xe0] sm:$0xff]
        %v466 = vld [vmem:[%s178 + $0xe8] sm:$0xff]
        %v467 = vld [vmem:[%s178 + $0xf0] sm:$0xff]
        %v468 = vld [vmem:[%s178 + $0xf8] sm:$0xff]
        %v469 = vld [vmem:[#allocation2] sm:$0x1]
        %v471 = vperm.slane %v469, 0
        %v473 = vmul.f32 %v437, %v471
        %v474 = vmul.f32 %v438, %v471
        %v475 = vmul.f32 %v439, %v471
        %v476 = vmul.f32 %v440, %v471
        %v477 = vmul.f32 %v441, %v471
        %v478 = vmul.f32 %v442, %v471
        %v479 = vmul.f32 %v443, %v471
        %v480 = vmul.f32 %v444, %v471
        %v481 = vmul.f32 %v445, %v471
        %v482 = vmul.f32 %v446, %v471
        %v483 = vmul.f32 %v447, %v471
        %v484 = vmul.f32 %v448, %v471
        %v485 = vmul.f32 %v449, %v471
        %v486 = vmul.f32 %v450, %v471
        %v487 = vmul.f32 %v451, %v471
        %v488 = vmul.f32 %v452, %v471
        %v489 = vmul.f32 %v453, %v471
        %v490 = vmul.f32 %v454, %v471
        %v491 = vmul.f32 %v455, %v471
        %v492 = vmul.f32 %v456, %v471
        %v493 = vmul.f32 %v457, %v471
        %v494 = vmul.f32 %v458, %v471
        %v495 = vmul.f32 %v459, %v471
        %v496 = vmul.f32 %v460, %v471
        %v497 = vmul.f32 %v461, %v471
        %v498 = vmul.f32 %v462, %v471
        %v499 = vmul.f32 %v463, %v471
        %v500 = vmul.f32 %v464, %v471
        %v501 = vmul.f32 %v465, %v471
        %v502 = vmul.f32 %v466, %v471
        %v503 = vmul.f32 %v467, %v471
        %v504 = vmul.f32 %v468, %v471
        %v505 = vld [vmem:[#allocation3] sm:$0x1]
        %v507 = vperm.slane %v505, 0
        %v509 = vadd.f32 %v473, %v507
        %v510 = vadd.f32 %v474, %v507
        %v511 = vadd.f32 %v475, %v507
        %v512 = vadd.f32 %v476, %v507
        %v513 = vadd.f32 %v477, %v507
        %v514 = vadd.f32 %v478, %v507
        %v515 = vadd.f32 %v479, %v507
        %v516 = vadd.f32 %v480, %v507
        %v517 = vadd.f32 %v481, %v507
        %v518 = vadd.f32 %v482, %v507
        %v519 = vadd.f32 %v483, %v507
        %v520 = vadd.f32 %v484, %v507
        %v521 = vadd.f32 %v485, %v507
        %v522 = vadd.f32 %v486, %v507
        %v523 = vadd.f32 %v487, %v507
        %v524 = vadd.f32 %v488, %v507
        %v525 = vadd.f32 %v489, %v507
        %v526 = vadd.f32 %v490, %v507
        %v527 = vadd.f32 %v491, %v507
        %v528 = vadd.f32 %v492, %v507
        %v529 = vadd.f32 %v493, %v507
        %v530 = vadd.f32 %v494, %v507
        %v531 = vadd.f32 %v495, %v507
        %v532 = vadd.f32 %v496, %v507
        %v533 = vadd.f32 %v497, %v507
        %v534 = vadd.f32 %v498, %v507
        %v535 = vadd.f32 %v499, %v507
        %v536 = vadd.f32 %v500, %v507
        %v537 = vadd.f32 %v501, %v507
        %v538 = vadd.f32 %v502, %v507
        %v539 = vadd.f32 %v503, %v507
        %v540 = vadd.f32 %v504, %v507
        %v541 = vmax.f32 %v509, 0.0
        %v542 = vmax.f32 %v510, 0.0
        %v543 = vmax.f32 %v511, 0.0
        %v544 = vmax.f32 %v512, 0.0
        %v545 = vmax.f32 %v513, 0.0
        %v546 = vmax.f32 %v514, 0.0
        %v547 = vmax.f32 %v515, 0.0
        %v548 = vmax.f32 %v516, 0.0
        %v549 = vmax.f32 %v517, 0.0
        %v550 = vmax.f32 %v518, 0.0
        %v551 = vmax.f32 %v519, 0.0
        %v552 = vmax.f32 %v520, 0.0
        %v553 = vmax.f32 %v521, 0.0
        %v554 = vmax.f32 %v522, 0.0
        %v555 = vmax.f32 %v523, 0.0
        %v556 = vmax.f32 %v524, 0.0
        %v557 = vmax.f32 %v525, 0.0
        %v558 = vmax.f32 %v526, 0.0
        %v559 = vmax.f32 %v527, 0.0
        %v560 = vmax.f32 %v528, 0.0
        %v561 = vmax.f32 %v529, 0.0
        %v562 = vmax.f32 %v530, 0.0
        %v563 = vmax.f32 %v531, 0.0
        %v564 = vmax.f32 %v532, 0.0
        %v565 = vmax.f32 %v533, 0.0
        %v566 = vmax.f32 %v534, 0.0
        %v567 = vmax.f32 %v535, 0.0
        %v568 = vmax.f32 %v536, 0.0
        %v569 = vmax.f32 %v537, 0.0
        %v570 = vmax.f32 %v538, 0.0
        %v571 = vmax.f32 %v539, 0.0
        %v572 = vmax.f32 %v540, 0.0
        %v573 = vpack.c.bf16 %v541, %v541
        %v574 = vpack.c.bf16 %v542, %v542
        %v575 = vpack.c.bf16 %v543, %v543
        %v576 = vpack.c.bf16 %v544, %v544
        %v577 = vpack.c.bf16 %v545, %v545
        %v578 = vpack.c.bf16 %v546, %v546
        %v579 = vpack.c.bf16 %v547, %v547
        %v580 = vpack.c.bf16 %v548, %v548
        %v581 = vpack.c.bf16 %v549, %v549
        %v582 = vpack.c.bf16 %v550, %v550
        %v583 = vpack.c.bf16 %v551, %v551
        %v584 = vpack.c.bf16 %v552, %v552
        %v585 = vpack.c.bf16 %v553, %v553
        %v586 = vpack.c.bf16 %v554, %v554
        %v587 = vpack.c.bf16 %v555, %v555
        %v588 = vpack.c.bf16 %v556, %v556
        %v589 = vpack.c.bf16 %v557, %v557
        %v590 = vpack.c.bf16 %v558, %v558
        %v591 = vpack.c.bf16 %v559, %v559
        %v592 = vpack.c.bf16 %v560, %v560
        %v593 = vpack.c.bf16 %v561, %v561
        %v594 = vpack.c.bf16 %v562, %v562
        %v595 = vpack.c.bf16 %v563, %v563
        %v596 = vpack.c.bf16 %v564, %v564
        %v597 = vpack.c.bf16 %v565, %v565
        %v598 = vpack.c.bf16 %v566, %v566
        %v599 = vpack.c.bf16 %v567, %v567
        %v600 = vpack.c.bf16 %v568, %v568
        %v601 = vpack.c.bf16 %v569, %v569
        %v602 = vpack.c.bf16 %v570, %v570
        %v603 = vpack.c.bf16 %v571, %v571
        %v604 = vpack.c.bf16 %v572, %v572
        %605 = vst [vmem:[%s184] sm:$0xf] %v573
        %606 = vst [vmem:[%s184 + $0x4] sm:$0xf] %v574
        %607 = vst [vmem:[%s184 + $0x8] sm:$0xf] %v575
        %608 = vst [vmem:[%s184 + $0xc] sm:$0xf] %v576
        %609 = vst [vmem:[%s184 + $0x10] sm:$0xf] %v577
        %610 = vst [vmem:[%s184 + $0x14] sm:$0xf] %v578
        %611 = vst [vmem:[%s184 + $0x18] sm:$0xf] %v579
        %612 = vst [vmem:[%s184 + $0x1c] sm:$0xf] %v580
        %613 = vst [vmem:[%s184 + $0x20] sm:$0xf] %v581
        %614 = vst [vmem:[%s184 + $0x24] sm:$0xf] %v582
        %615 = vst [vmem:[%s184 + $0x28] sm:$0xf] %v583
        %616 = vst [vmem:[%s184 + $0x2c] sm:$0xf] %v584
        %617 = vst [vmem:[%s184 + $0x30] sm:$0xf] %v585
        %618 = vst [vmem:[%s184 + $0x34] sm:$0xf] %v586
        %619 = vst [vmem:[%s184 + $0x38] sm:$0xf] %v587
        %620 = vst [vmem:[%s184 + $0x3c] sm:$0xf] %v588
        %621 = vst [vmem:[%s184 + $0x40] sm:$0xf] %v589
        %622 = vst [vmem:[%s184 + $0x44] sm:$0xf] %v590
        %623 = vst [vmem:[%s184 + $0x48] sm:$0xf] %v591
        %624 = vst [vmem:[%s184 + $0x4c] sm:$0xf] %v592
        %625 = vst [vmem:[%s184 + $0x50] sm:$0xf] %v593
        %626 = vst [vmem:[%s184 + $0x54] sm:$0xf] %v594
        %627 = vst [vmem:[%s184 + $0x58] sm:$0xf] %v595
        %628 = vst [vmem:[%s184 + $0x5c] sm:$0xf] %v596
        %629 = vst [vmem:[%s184 + $0x60] sm:$0xf] %v597
        %630 = vst [vmem:[%s184 + $0x64] sm:$0xf] %v598
        %631 = vst [vmem:[%s184 + $0x68] sm:$0xf] %v599
        %632 = vst [vmem:[%s184 + $0x6c] sm:$0xf] %v600
        %633 = vst [vmem:[%s184 + $0x70] sm:$0xf] %v601
        %634 = vst [vmem:[%s184 + $0x74] sm:$0xf] %v602
        %635 = vst [vmem:[%s184 + $0x78] sm:$0xf] %v603
        %636 = vst [vmem:[%s184 + $0x7c] sm:$0xf] %v604
      $region48: #{_lambda_.15} parent=31 // pred_fallthru
        _
      %s637 = smul.u32 32, %s19
      %p638 = scmp.lt.s32.totalorder %s637, 63
      %s639 = scalar_select %p638, %s637, 63
      %s640 = smul.addr %s639, 4
      %s641 = scalar_lea.vmem %s3, %s640
      // Predicated region
      $region49: #{_lambda_.15} parent=31 // pred_check
        %p642 = pneg %p112
      $region50: #{_lambda_.15} parent=31 // pred_check_branch
        %644 = sbr.rel (%p642) target = $region52
      $region51: #{_lambda_.15} parent=31 // pred_region
        %s645 = smul.u32 32, %s19
      $region52: #{_lambda_.15} parent=31 // pred_fallthru
        _
    $region32: #{_lambda_.15} parent=5 // pred_fallthru
      _
    %p646 = scmp.le.s32.totalorder 2, %s9
    // Predicated region
    $region53: #{_lambda_.15} parent=5 // pred_check
      %p647 = pneg %p646
    $region54: #{_lambda_.15} parent=5 // pred_check_branch
      %649 = sbr.rel (%p647) target = $region56
    $region55: #{_lambda_.15} parent=5 // pred_region
      %s650 = ssub.s32 %s9, 2
      // Predicated region
      $region57: #{_lambda_.15} parent=55 // pred_check
        %p651 = pneg %p118
      $region58: #{_lambda_.15} parent=55 // pred_check_branch
        %653 = sbr.rel (%p651) target = $region60
      $region59: #{_lambda_.15} parent=55 // pred_region
        %s654 = smul.u32 32, %s21
        %p655 = scmp.lt.s32.totalorder %s654, 63
        %s656 = scalar_select %p655, %s654, 63
        %s657 = smul.addr %s656, 4
        %s658 = scalar_lea.vmem %s3, %s657
      $region60: #{_lambda_.15} parent=55 // pred_fallthru
        _
    $region56: #{_lambda_.15} parent=5 // pred_fallthru
      _
  $region6: #{_lambda_.15} parent=0 // loop_footer
    %s13 = sadd.s32 1, %s9
  $region7: #{_lambda_.15} parent=0 // loop_footer_branch
    %8 = sbr.rel target = $region3
  $region8: #{_lambda_.15} parent=0 // loop_exit
    _

// kernel: _lambda_.16
$region0: #{_lambda_.16}
  #allocation0 [shape = 'u32[]', space=smem, size = 0x4, offset = 0x4, fixed_abs, tag = 'smem constant byte address 0x4 - core index']
  #allocation1 [shape = 'u32[72,128]{1,0:T(1,128)}', space=vmem, size = 0x9000, scoped, tag = 'internal scratch']
  %s0 = inlined_call_operand.vmem [shape: bf16[512,128], index: 0, kind: input, shape index: {}]
  %s1 = inlined_call_operand.vmem [shape: bf16[128,128], index: 1, kind: input, shape index: {}]
  %s2 = inlined_call_operand.vmem [shape: f32[512,128], index: 2, kind: output, shape index: {}]
  %s3 = sld [smem:[#allocation0]]
  $region45: #{_lambda_.16} parent=0
    _
  %s5 = ssub.s32 1, %s3
  %s6 = scalar_select 0, %s5, %s3
  loop: start=0, step=1, limit=4
  $region2: #{_lambda_.16} parent=0 // loop_pre_header
    _
  $region3: #{_lambda_.16} parent=0 // loop_header
    %s8 = sphi 0, %s12
    %p9 = scmp.ge.s32.totalorder %s8, 4
    %s15 = sphi 0, %s27
    %s16 = sphi 0, %s23
    %s17 = sphi 0, %s15
    %s18 = sphi 0, %s16
    %s19 = sphi 0, %s17
    %s20 = sphi 0, %s18
    %s32 = sphi 0, %s34
    %s35 = sphi 0, %s32
    %s36 = sphi 0, %s35
    %s52 = sphi 0, %s36
    %s58 = sphi 0, %s60
    %s61 = sphi 0, %s58
    %s62 = sphi 0, %s61
    %s78 = sphi 0, %s62
    %s84 = sphi 0, %s86
    %s87 = sphi 0, %s84
    %s88 = sphi 0, %s87
    %s104 = sphi 0, %s88
  $region4: #{_lambda_.16} parent=0 // loop_header_branch
    %11 = sbr.rel (%p9) target = $region8
  $region5: #{_lambda_.16} parent=0 // loop_body
    %s13 = ssub.s32 %s8, 1
    %s14 = ssub.s32 %s8, 2
    %s21 = sadd.s32 1, %s16
    %p22 = scmp.ge.s32.totalorder %s21, 1
    %s23 = scalar_select %p22, 0, %s21
    %s24 = sadd.s32 1, %s15
    %s25 = scalar_select %p22, %s24, %s15
    %p26 = scmp.ge.s32.totalorder %s25, 2
    %s27 = scalar_select %p26, 0, %s25
    %s28 = ssub.s32 %s15, %s27
    %s29 = ssub.s32 %s16, %s23
    %s30 = sor.u32 %s28, %s29
    %p31 = scmp.eq.s32.totalorder %s30, 0
    %s33 = sadd.s32 %s32, 1
    %s34 = scalar_select %p31, %s32, %s33
    %p37 = pneg %p31
    %p38 = scmp.eq.s32.totalorder %s8, 1
    %p39 = por %p37, %p38
    %p40 = scmp.ne.s32.totalorder %s32, %s35
    %p41 = scmp.eq.s32.totalorder %s8, 0
    %p42 = por %p40, %p41
    %p43 = scmp.ne.s32.totalorder %s32, %s35
    %p44 = scmp.eq.s32.totalorder %s13, 1
    %p45 = por %p43, %p44
    %p46 = scmp.ne.s32.totalorder %s35, %s36
    %p47 = scmp.eq.s32.totalorder %s13, 0
    %p48 = por %p46, %p47
    %p49 = scmp.ne.s32.totalorder %s35, %s36
    %p50 = scmp.eq.s32.totalorder %s14, 1
    %p51 = por %p49, %p50
    %p53 = scmp.ne.s32.totalorder %s36, %s52
    %p54 = scmp.eq.s32.totalorder %s14, 0
    %p55 = por %p53, %p54
    %s56 = ssub.s32 %s16, %s23
    %p57 = scmp.eq.s32.totalorder %s56, 0
    %s59 = sadd.s32 %s58, 1
    %s60 = scalar_select %p57, %s58, %s59
    %p63 = pneg %p57
    %p64 = scmp.eq.s32.totalorder %s8, 1
    %p65 = por %p63, %p64
    %p66 = scmp.ne.s32.totalorder %s58, %s61
    %p67 = scmp.eq.s32.totalorder %s8, 0
    %p68 = por %p66, %p67
    %p69 = scmp.ne.s32.totalorder %s58, %s61
    %p70 = scmp.eq.s32.totalorder %s13, 1
    %p71 = por %p69, %p70
    %p72 = scmp.ne.s32.totalorder %s61, %s62
    %p73 = scmp.eq.s32.totalorder %s13, 0
    %p74 = por %p72, %p73
    %p75 = scmp.ne.s32.totalorder %s61, %s62
    %p76 = scmp.eq.s32.totalorder %s14, 1
    %p77 = por %p75, %p76
    %p79 = scmp.ne.s32.totalorder %s62, %s78
    %p80 = scmp.eq.s32.totalorder %s14, 0
    %p81 = por %p79, %p80
    %s82 = ssub.s32 %s15, %s27
    %p83 = scmp.eq.s32.totalorder %s82, 0
    %s85 = sadd.s32 %s84, 1
    %s86 = scalar_select %p83, %s84, %s85
    %p89 = pneg %p83
    %p90 = scmp.eq.s32.totalorder %s8, 1
    %p91 = por %p89, %p90
    %p92 = scmp.ne.s32.totalorder %s84, %s87
    %p93 = scmp.eq.s32.totalorder %s8, 0
    %p94 = por %p92, %p93
    %p95 = scmp.ne.s32.totalorder %s84, %s87
    %p96 = scmp.eq.s32.totalorder %s13, 1
    %p97 = por %p95, %p96
    %p98 = scmp.ne.s32.totalorder %s87, %s88
    %p99 = scmp.eq.s32.totalorder %s13, 0
    %p100 = por %p98, %p99
    %p101 = scmp.ne.s32.totalorder %s87, %s88
    %p102 = scmp.eq.s32.totalorder %s14, 1
    %p103 = por %p101, %p102
    %p105 = scmp.ne.s32.totalorder %s88, %s104
    %p106 = scmp.eq.s32.totalorder %s14, 0
    %p107 = por %p105, %p106
    %p108 = scmp.le.s32.totalorder 1, %s8
    %p109 = scmp.lt.s32.totalorder %s8, 3
    %p110 = pnand %p108, %p109
    %p111 = pneg %p110
    // Predicated region
    $region9: #{_lambda_.16} parent=5 // pred_check
      _
    $region10: #{_lambda_.16} parent=5 // pred_check_branch
      %113 = sbr.rel (%p110) target = $region12
    $region11: #{_lambda_.16} parent=5 // pred_region
      %s114 = ssub.s32 %s8, 1
      // Predicated region
      $region13: #{_lambda_.16} parent=11 // pred_check
        %p115 = pneg %p74
      $region14: #{_lambda_.16} parent=11 // pred_check_branch
        %117 = sbr.rel (%p115) target = $region16
      $region15: #{_lambda_.16} parent=11 // pred_region
        %s118 = smul.u32 16, %s18
        %p119 = scmp.lt.s32.totalorder %s118, 15
        %s120 = scalar_select %p119, %s118, 15
        %s121 = smul.addr %s120, 4
        %s122 = scalar_lea.vmem %s1, %s121
        %s123 = smul.u32 16, %s18
      $region16: #{_lambda_.16} parent=11 // pred_fallthru
        _
    $region12: #{_lambda_.16} parent=5 // pred_fallthru
      _
    %p124 = scmp.lt.s32.totalorder %s8, 2
    // Predicated region
    $region17: #{_lambda_.16} parent=5 // pred_check
      %p125 = pneg %p124
    $region18: #{_lambda_.16} parent=5 // pred_check_branch
      %127 = sbr.rel (%p125) target = $region20
    $region19: #{_lambda_.16} parent=5 // pred_region
      // Predicated region
      $region21: #{_lambda_.16} parent=19 // pred_check
        %p128 = pneg %p42
      $region22: #{_lambda_.16} parent=19 // pred_check_branch
        %130 = sbr.rel (%p128) target = $region24
      $region23: #{_lambda_.16} parent=19 // pred_region
        %s131 = smul.u32 32, %s15
        %p132 = scmp.lt.s32.totalorder %s131, 63
        %s133 = scalar_select %p132, %s131, 63
        %p134 = scmp.lt.s32.totalorder %s16, 0
        %s135 = scalar_select %p134, %s16, 0
        %s136 = sadd.s32 %s135, %s133
        %s137 = smul.addr %s136, 4
        %s138 = scalar_lea.vmem %s0, %s137
        %s139 = smul.u32 32, %s15
      $region24: #{_lambda_.16} parent=19 // pred_fallthru
        _
    $region20: #{_lambda_.16} parent=5 // pred_fallthru
      _
    %p140 = scmp.le.s32.totalorder 1, %s8
    %p141 = scmp.lt.s32.totalorder %s8, 3
    %p142 = pnand %p140, %p141
    %p143 = pneg %p142
    // Predicated region
    $region25: #{_lambda_.16} parent=5 // pred_check
      _
    $region26: #{_lambda_.16} parent=5 // pred_check_branch
      %145 = sbr.rel (%p142) target = $region28
    $region27: #{_lambda_.16} parent=5 // pred_region
      %s146 = ssub.s32 %s8, 1
      %s147 = smul.u32 32, %s17
      %p148 = scmp.lt.s32.totalorder %s147, 63
      %s149 = scalar_select %p148, %s147, 63
      %p150 = scmp.lt.s32.totalorder %s18, 0
      %s151 = scalar_select %p150, %s18, 0
      %s152 = sadd.s32 %s151, %s149
      %s153 = smul.addr %s152, 4
      %s154 = scalar_lea.vmem %s0, %s153
      %p155 = pneg %p48
      %p156 = pneg %p45
      %s157 = smul.u32 16, %s18
      %p158 = scmp.lt.s32.totalorder %s157, 15
      %s159 = scalar_select %p158, %s157, 15
      %s160 = smul.addr %s159, 4
      %s161 = scalar_lea.vmem %s1, %s160
      %p162 = pneg %p74
      %p163 = pneg %p71
      %p164 = pneg %p100
      %p165 = pneg %p97
      %s166 = smul.u32 32, %s17
      %p167 = scmp.lt.s32.totalorder %s166, 63
      %s168 = scalar_select %p167, %s166, 63
      %s169 = smul.addr %s168, 8
      %s170 = scalar_lea.vmem %s2, %s169
      %s171 = smul.u32 32, %s17
      %p172 = scmp.lt.s32.totalorder %s171, 63
      %s173 = scalar_select %p172, %s171, 63
      %p174 = scmp.lt.s32.totalorder %s18, 0
      %s175 = scalar_select %p174, %s18, 0
      %s176 = sadd.s32 %s175, %s173
      %s177 = smul.addr %s176, 4
      %s178 = scalar_lea.vmem %s0, %s177
      %s179 = smul.u32 32, %s17
      %s180 = smul.u32 16, %s18
      %p181 = scmp.lt.s32.totalorder %s180, 15
      %s182 = scalar_select %p181, %s180, 15
      %s183 = smul.addr %s182, 4
      %s184 = scalar_lea.vmem %s1, %s183
      %s185 = smul.u32 16, %s18
      %s186 = smul.u32 32, %s17
      %p187 = scmp.lt.s32.totalorder %s186, 63
      %s188 = scalar_select %p187, %s186, 63
      %s189 = smul.addr %s188, 8
      %s190 = scalar_lea.vmem %s2, %s189
      %s191 = smul.u32 32, %s17
      %p192 = scmp.eq.s32.totalorder %s18, 0
      // Predicated region
      $region29: #{_lambda_.16} parent=27 // pred_check
        %p193 = pneg %p192
      $region30: #{_lambda_.16} parent=27 // pred_check_branch
        %195 = sbr.rel (%p193) target = $region32
      $region31: #{_lambda_.16} parent=27 // pred_region
        %196 = vst [vmem:[%s190] sm:$0xff] 0.0
        %197 = vst [vmem:[%s190 + $0x8] sm:$0xff] 0.0
        %198 = vst [vmem:[%s190 + $0x10] sm:$0xff] 0.0
        %199 = vst [vmem:[%s190 + $0x18] sm:$0xff] 0.0
        %200 = vst [vmem:[%s190 + $0x20] sm:$0xff] 0.0
        %201 = vst [vmem:[%s190 + $0x28] sm:$0xff] 0.0
        %202 = vst [vmem:[%s190 + $0x30] sm:$0xff] 0.0
        %203 = vst [vmem:[%s190 + $0x38] sm:$0xff] 0.0
        %204 = vst [vmem:[%s190 + $0x40] sm:$0xff] 0.0
        %205 = vst [vmem:[%s190 + $0x48] sm:$0xff] 0.0
        %206 = vst [vmem:[%s190 + $0x50] sm:$0xff] 0.0
        %207 = vst [vmem:[%s190 + $0x58] sm:$0xff] 0.0
        %208 = vst [vmem:[%s190 + $0x60] sm:$0xff] 0.0
        %209 = vst [vmem:[%s190 + $0x68] sm:$0xff] 0.0
        %210 = vst [vmem:[%s190 + $0x70] sm:$0xff] 0.0
        %211 = vst [vmem:[%s190 + $0x78] sm:$0xff] 0.0
        %212 = vst [vmem:[%s190 + $0x80] sm:$0xff] 0.0
        %213 = vst [vmem:[%s190 + $0x88] sm:$0xff] 0.0
        %214 = vst [vmem:[%s190 + $0x90] sm:$0xff] 0.0
        %215 = vst [vmem:[%s190 + $0x98] sm:$0xff] 0.0
        %216 = vst [vmem:[%s190 + $0xa0] sm:$0xff] 0.0
        %217 = vst [vmem:[%s190 + $0xa8] sm:$0xff] 0.0
        %218 = vst [vmem:[%s190 + $0xb0] sm:$0xff] 0.0
        %219 = vst [vmem:[%s190 + $0xb8] sm:$0xff] 0.0
        %220 = vst [vmem:[%s190 + $0xc0] sm:$0xff] 0.0
        %221 = vst [vmem:[%s190 + $0xc8] sm:$0xff] 0.0
        %222 = vst [vmem:[%s190 + $0xd0] sm:$0xff] 0.0
        %223 = vst [vmem:[%s190 + $0xd8] sm:$0xff] 0.0
        %224 = vst [vmem:[%s190 + $0xe0] sm:$0xff] 0.0
        %225 = vst [vmem:[%s190 + $0xe8] sm:$0xff] 0.0
        %226 = vst [vmem:[%s190 + $0xf0] sm:$0xff] 0.0
        %227 = vst [vmem:[%s190 + $0xf8] sm:$0xff] 0.0
      $region32: #{_lambda_.16} parent=27 // pred_fallthru
        _
      %v228 = vld [vmem:[%s190] sm:$0xff]
      %v229 = vld [vmem:[%s190 + $0x8] sm:$0xff]
      %v230 = vld [vmem:[%s190 + $0x10] sm:$0xff]
      %v231 = vld [vmem:[%s190 + $0x18] sm:$0xff]
      %v232 = vld [vmem:[%s190 + $0x20] sm:$0xff]
      %v233 = vld [vmem:[%s190 + $0x28] sm:$0xff]
      %v234 = vld [vmem:[%s190 + $0x30] sm:$0xff]
      %v235 = vld [vmem:[%s190 + $0x38] sm:$0xff]
      %v236 = vld [vmem:[%s190 + $0x40] sm:$0xff]
      %v237 = vld [vmem:[%s190 + $0x48] sm:$0xff]
      %v238 = vld [vmem:[%s190 + $0x50] sm:$0xff]
      %v239 = vld [vmem:[%s190 + $0x58] sm:$0xff]
      %v240 = vld [vmem:[%s190 + $0x60] sm:$0xff]
      %v241 = vld [vmem:[%s190 + $0x68] sm:$0xff]
      %v242 = vld [vmem:[%s190 + $0x70] sm:$0xff]
      %v243 = vld [vmem:[%s190 + $0x78] sm:$0xff]
      %v244 = vld [vmem:[%s190 + $0x80] sm:$0xff]
      %v245 = vld [vmem:[%s190 + $0x88] sm:$0xff]
      %v246 = vld [vmem:[%s190 + $0x90] sm:$0xff]
      %v247 = vld [vmem:[%s190 + $0x98] sm:$0xff]
      %v248 = vld [vmem:[%s190 + $0xa0] sm:$0xff]
      %v249 = vld [vmem:[%s190 + $0xa8] sm:$0xff]
      %v250 = vld [vmem:[%s190 + $0xb0] sm:$0xff]
      %v251 = vld [vmem:[%s190 + $0xb8] sm:$0xff]
      %v252 = vld [vmem:[%s190 + $0xc0] sm:$0xff]
      %v253 = vld [vmem:[%s190 + $0xc8] sm:$0xff]
      %v254 = vld [vmem:[%s190 + $0xd0] sm:$0xff]
      %v255 = vld [vmem:[%s190 + $0xd8] sm:$0xff]
      %v256 = vld [vmem:[%s190 + $0xe0] sm:$0xff]
      %v257 = vld [vmem:[%s190 + $0xe8] sm:$0xff]
      %v258 = vld [vmem:[%s190 + $0xf0] sm:$0xff]
      %v259 = vld [vmem:[%s190 + $0xf8] sm:$0xff]
      %v260 = vld [vmem:[%s178] sm:$0xf]
      %v261 = vld [vmem:[%s178 + $0x4] sm:$0xf]
      %v262 = vld [vmem:[%s178 + $0x8] sm:$0xf]
      %v263 = vld [vmem:[%s178 + $0xc] sm:$0xf]
      %v264 = vld [vmem:[%s178 + $0x10] sm:$0xf]
      %v265 = vld [vmem:[%s178 + $0x14] sm:$0xf]
      %v266 = vld [vmem:[%s178 + $0x18] sm:$0xf]
      %v267 = vld [vmem:[%s178 + $0x1c] sm:$0xf]
      %v268 = vld [vmem:[%s178 + $0x20] sm:$0xf]
      %v269 = vld [vmem:[%s178 + $0x24] sm:$0xf]
      %v270 = vld [vmem:[%s178 + $0x28] sm:$0xf]
      %v271 = vld [vmem:[%s178 + $0x2c] sm:$0xf]
      %v272 = vld [vmem:[%s178 + $0x30] sm:$0xf]
      %v273 = vld [vmem:[%s178 + $0x34] sm:$0xf]
      %v274 = vld [vmem:[%s178 + $0x38] sm:$0xf]
      %v275 = vld [vmem:[%s178 + $0x3c] sm:$0xf]
      %v276 = vld [vmem:[%s178 + $0x40] sm:$0xf]
      %v277 = vld [vmem:[%s178 + $0x44] sm:$0xf]
      %v278 = vld [vmem:[%s178 + $0x48] sm:$0xf]
      %v279 = vld [vmem:[%s178 + $0x4c] sm:$0xf]
      %v280 = vld [vmem:[%s178 + $0x50] sm:$0xf]
      %v281 = vld [vmem:[%s178 + $0x54] sm:$0xf]
      %v282 = vld [vmem:[%s178 + $0x58] sm:$0xf]
      %v283 = vld [vmem:[%s178 + $0x5c] sm:$0xf]
      %v284 = vld [vmem:[%s178 + $0x60] sm:$0xf]
      %v285 = vld [vmem:[%s178 + $0x64] sm:$0xf]
      %v286 = vld [vmem:[%s178 + $0x68] sm:$0xf]
      %v287 = vld [vmem:[%s178 + $0x6c] sm:$0xf]
      %v288 = vld [vmem:[%s178 + $0x70] sm:$0xf]
      %v289 = vld [vmem:[%s178 + $0x74] sm:$0xf]
      %v290 = vld [vmem:[%s178 + $0x78] sm:$0xf]
      %v291 = vld [vmem:[%s178 + $0x7c] sm:$0xf]
      %v292 = vld [vmem:[%s184] sm:$0xf]
      %v293 = vld [vmem:[%s184 + $0x4] sm:$0xf]
      %v294 = vld [vmem:[%s184 + $0x8] sm:$0xf]
      %v295 = vld [vmem:[%s184 + $0xc] sm:$0xf]
      %v296 = vld [vmem:[%s184 + $0x10] sm:$0xf]
      %v297 = vld [vmem:[%s184 + $0x14] sm:$0xf]
      %v298 = vld [vmem:[%s184 + $0x18] sm:$0xf]
      %v299 = vld [vmem:[%s184 + $0x1c] sm:$0xf]
      %v300 = vld [vmem:[%s184 + $0x20] sm:$0xf]
      %v301 = vld [vmem:[%s184 + $0x24] sm:$0xf]
      %v302 = vld [vmem:[%s184 + $0x28] sm:$0xf]
      %v303 = vld [vmem:[%s184 + $0x2c] sm:$0xf]
      %v304 = vld [vmem:[%s184 + $0x30] sm:$0xf]
      %v305 = vld [vmem:[%s184 + $0x34] sm:$0xf]
      %v306 = vld [vmem:[%s184 + $0x38] sm:$0xf]
      %v307 = vld [vmem:[%s184 + $0x3c] sm:$0xf]
      %v340 = vunpack.c.l.b16 %v260
      %v341 = vunpack.c.l.b16 %v261
      %v342 = vunpack.c.l.b16 %v262
      %v343 = vunpack.c.l.b16 %v263
      %v344 = vunpack.c.l.b16 %v264
      %v345 = vunpack.c.l.b16 %v265
      %v346 = vunpack.c.l.b16 %v266
      %v347 = vunpack.c.l.b16 %v267
      %v348 = vunpack.c.l.b16 %v268
      %v349 = vunpack.c.l.b16 %v269
      %v350 = vunpack.c.l.b16 %v270
      %v351 = vunpack.c.l.b16 %v271
      %v352 = vunpack.c.l.b16 %v272
      %v353 = vunpack.c.l.b16 %v273
      %v354 = vunpack.c.l.b16 %v274
      %v355 = vunpack.c.l.b16 %v275
      %v356 = vunpack.c.l.b16 %v276
      %v357 = vunpack.c.l.b16 %v277
      %v358 = vunpack.c.l.b16 %v278
      %v359 = vunpack.c.l.b16 %v279
      %v360 = vunpack.c.l.b16 %v280
      %v361 = vunpack.c.l.b16 %v281
      %v362 = vunpack.c.l.b16 %v282
      %v363 = vunpack.c.l.b16 %v283
      %v364 = vunpack.c.l.b16 %v284
      %v365 = vunpack.c.l.b16 %v285
      %v366 = vunpack.c.l.b16 %v286
      %v367 = vunpack.c.l.b16 %v287
      %v368 = vunpack.c.l.b16 %v288
      %v369 = vunpack.c.l.b16 %v289
      %v370 = vunpack.c.l.b16 %v290
      %v371 = vunpack.c.l.b16 %v291
      %v372 = vpack.c.b16 %v341, %v340
      %v373 = vpack.c.b16 %v343, %v342
      %v374 = vpack.c.b16 %v345, %v344
      %v375 = vpack.c.b16 %v347, %v346
      %v376 = vpack.c.b16 %v349, %v348
      %v377 = vpack.c.b16 %v351, %v350
      %v378 = vpack.c.b16 %v353, %v352
      %v379 = vpack.c.b16 %v355, %v354
      %v380 = vpack.c.b16 %v357, %v356
      %v381 = vpack.c.b16 %v359, %v358
      %v382 = vpack.c.b16 %v361, %v360
      %v383 = vpack.c.b16 %v363, %v362
      %v384 = vpack.c.b16 %v365, %v364
      %v385 = vpack.c.b16 %v367, %v366
      %v386 = vpack.c.b16 %v369, %v368
      %v387 = vpack.c.b16 %v371, %v370
      %v420 = vunpack.c.l.b16 %v292
      %v421 = vunpack.c.l.b16 %v293
      %v422 = vunpack.c.l.b16 %v294
      %v423 = vunpack.c.l.b16 %v295
      %v424 = vunpack.c.l.b16 %v296
      %v425 = vunpack.c.l.b16 %v297
      %v426 = vunpack.c.l.b16 %v298
      %v427 = vunpack.c.l.b16 %v299
      %v428 = vunpack.c.l.b16 %v300
      %v429 = vunpack.c.l.b16 %v301
      %v430 = vunpack.c.l.b16 %v302
      %v431 = vunpack.c.l.b16 %v303
      %v432 = vunpack.c.l.b16 %v304
      %v433 = vunpack.c.l.b16 %v305
      %v434 = vunpack.c.l.b16 %v306
      %v435 = vunpack.c.l.b16 %v307
      %v436 = vpack.c.b16 %v421, %v420
      %v437 = vpack.c.b16 %v423, %v422
      %v438 = vpack.c.b16 %v425, %v424
      %v439 = vpack.c.b16 %v427, %v426
      %v440 = vpack.c.b16 %v429, %v428
      %v441 = vpack.c.b16 %v431, %v430
      %v442 = vpack.c.b16 %v433, %v432
      %v443 = vpack.c.b16 %v435, %v434
      %452 = vmatpush.bf16.msra.mxu0 %v443
      %453 = vmatpush.bf16.msra.mxu0 %v442
      %454 = vmatpush.bf16.msra.mxu0 %v441
      %455 = vmatpush.bf16.msra.mxu0 %v440
      %456 = vmatpush.bf16.msra.mxu0 %v439
      %457 = vmatpush.bf16.msra.mxu0 %v438
      %458 = vmatpush.bf16.msra.mxu0 %v437
      %459 = vmatpush.bf16.msra.mxu0 %v436
      %460 = vmatmul.bf16.gmra.mxu0 %v372
      %v461 = vpop.f32.mrf.mxu0
      %v462 = vadd.f32 0.0, %v461
      %v463 = vpop.f32.mrf.mxu0
      %v464 = vadd.f32 0.0, %v463
      %465 = vmatmul.bf16.gmra.mxu0 %v373
      %v466 = vpop.f32.mrf.mxu0
      %v467 = vadd.f32 0.0, %v466
      %v468 = vpop.f32.mrf.mxu0
      %v469 = vadd.f32 0.0, %v468
      %470 = vmatmul.bf16.gmra.mxu0 %v374
      %v471 = vpop.f32.mrf.mxu0
      %v472 = vadd.f32 0.0, %v471
      %v473 = vpop.f32.mrf.mxu0
      %v474 = vadd.f32 0.0, %v473
      %475 = vmatmul.bf16.gmra.mxu0 %v375
      %v476 = vpop.f32.mrf.mxu0
      %v477 = vadd.f32 0.0, %v476
      %v478 = vpop.f32.mrf.mxu0
      %v479 = vadd.f32 0.0, %v478
      %480 = vmatmul.bf16.gmra.mxu0 %v376
      %v481 = vpop.f32.mrf.mxu0
      %v482 = vadd.f32 0.0, %v481
      %v483 = vpop.f32.mrf.mxu0
      %v484 = vadd.f32 0.0, %v483
      %485 = vmatmul.bf16.gmra.mxu0 %v377
      %v486 = vpop.f32.mrf.mxu0
      %v487 = vadd.f32 0.0, %v486
      %v488 = vpop.f32.mrf.mxu0
      %v489 = vadd.f32 0.0, %v488
      %490 = vmatmul.bf16.gmra.mxu0 %v378
      %v491 = vpop.f32.mrf.mxu0
      %v492 = vadd.f32 0.0, %v491
      %v493 = vpop.f32.mrf.mxu0
      %v494 = vadd.f32 0.0, %v493
      %495 = vmatmul.bf16.gmra.mxu0 %v379
      %v496 = vpop.f32.mrf.mxu0
      %v497 = vadd.f32 0.0, %v496
      %v498 = vpop.f32.mrf.mxu0
      %v499 = vadd.f32 0.0, %v498
      %500 = vmatmul.bf16.gmra.mxu0 %v380
      %v501 = vpop.f32.mrf.mxu0
      %v502 = vadd.f32 0.0, %v501
      %v503 = vpop.f32.mrf.mxu0
      %v504 = vadd.f32 0.0, %v503
      %505 = vmatmul.bf16.gmra.mxu0 %v381
      %v506 = vpop.f32.mrf.mxu0
      %v507 = vadd.f32 0.0, %v506
      %v508 = vpop.f32.mrf.mxu0
      %v509 = vadd.f32 0.0, %v508
      %510 = vmatmul.bf16.gmra.mxu0 %v382
      %v511 = vpop.f32.mrf.mxu0
      %v512 = vadd.f32 0.0, %v511
      %v513 = vpop.f32.mrf.mxu0
      %v514 = vadd.f32 0.0, %v513
      %515 = vmatmul.bf16.gmra.mxu0 %v383
      %v516 = vpop.f32.mrf.mxu0
      %v517 = vadd.f32 0.0, %v516
      %v518 = vpop.f32.mrf.mxu0
      %v519 = vadd.f32 0.0, %v518
      %520 = vmatmul.bf16.gmra.mxu0 %v384
      %v521 = vpop.f32.mrf.mxu0
      %v522 = vadd.f32 0.0, %v521
      %v523 = vpop.f32.mrf.mxu0
      %v524 = vadd.f32 0.0, %v523
      %525 = vmatmul.bf16.gmra.mxu0 %v385
      %v526 = vpop.f32.mrf.mxu0
      %v527 = vadd.f32 0.0, %v526
      %v528 = vpop.f32.mrf.mxu0
      %v529 = vadd.f32 0.0, %v528
      %530 = vmatmul.bf16.gmra.mxu0 %v386
      %v531 = vpop.f32.mrf.mxu0
      %v532 = vadd.f32 0.0, %v531
      %v533 = vpop.f32.mrf.mxu0
      %v534 = vadd.f32 0.0, %v533
      %535 = vmatmul.bf16.gmra.mxu0 %v387
      %v536 = vpop.f32.mrf.mxu0
      %v537 = vadd.f32 0.0, %v536
      %v538 = vpop.f32.mrf.mxu0
      %v539 = vadd.f32 0.0, %v538
      %540 = vdwg.mxu0
      %v541 = vadd.f32 %v228, %v462
      %v542 = vadd.f32 %v229, %v464
      %v543 = vadd.f32 %v230, %v467
      %v544 = vadd.f32 %v231, %v469
      %v545 = vadd.f32 %v232, %v472
      %v546 = vadd.f32 %v233, %v474
      %v547 = vadd.f32 %v234, %v477
      %v548 = vadd.f32 %v235, %v479
      %v549 = vadd.f32 %v236, %v482
      %v550 = vadd.f32 %v237, %v484
      %v551 = vadd.f32 %v238, %v487
      %v552 = vadd.f32 %v239, %v489
      %v553 = vadd.f32 %v240, %v492
      %v554 = vadd.f32 %v241, %v494
      %v555 = vadd.f32 %v242, %v497
      %v556 = vadd.f32 %v243, %v499
      %v557 = vadd.f32 %v244, %v502
      %v558 = vadd.f32 %v245, %v504
      %v559 = vadd.f32 %v246, %v507
      %v560 = vadd.f32 %v247, %v509
      %v561 = vadd.f32 %v248, %v512
      %v562 = vadd.f32 %v249, %v514
      %v563 = vadd.f32 %v250, %v517
      %v564 = vadd.f32 %v251, %v519
      %v565 = vadd.f32 %v252, %v522
      %v566 = vadd.f32 %v253, %v524
      %v567 = vadd.f32 %v254, %v527
      %v568 = vadd.f32 %v255, %v529
      %v569 = vadd.f32 %v256, %v532
      %v570 = vadd.f32 %v257, %v534
      %v571 = vadd.f32 %v258, %v537
      %v572 = vadd.f32 %v259, %v539
      %573 = vst [vmem:[%s190] sm:$0xff] %v541
      %574 = vst [vmem:[%s190 + $0x8] sm:$0xff] %v542
      %575 = vst [vmem:[%s190 + $0x10] sm:$0xff] %v543
      %576 = vst [vmem:[%s190 + $0x18] sm:$0xff] %v544
      %577 = vst [vmem:[%s190 + $0x20] sm:$0xff] %v545
      %578 = vst [vmem:[%s190 + $0x28] sm:$0xff] %v546
      %579 = vst [vmem:[%s190 + $0x30] sm:$0xff] %v547
      %580 = vst [vmem:[%s190 + $0x38] sm:$0xff] %v548
      %581 = vst [vmem:[%s190 + $0x40] sm:$0xff] %v549
      %582 = vst [vmem:[%s190 + $0x48] sm:$0xff] %v550
      %583 = vst [vmem:[%s190 + $0x50] sm:$0xff] %v551
      %584 = vst [vmem:[%s190 + $0x58] sm:$0xff] %v552
      %585 = vst [vmem:[%s190 + $0x60] sm:$0xff] %v553
      %586 = vst [vmem:[%s190 + $0x68] sm:$0xff] %v554
      %587 = vst [vmem:[%s190 + $0x70] sm:$0xff] %v555
      %588 = vst [vmem:[%s190 + $0x78] sm:$0xff] %v556
      %589 = vst [vmem:[%s190 + $0x80] sm:$0xff] %v557
      %590 = vst [vmem:[%s190 + $0x88] sm:$0xff] %v558
      %591 = vst [vmem:[%s190 + $0x90] sm:$0xff] %v559
      %592 = vst [vmem:[%s190 + $0x98] sm:$0xff] %v560
      %593 = vst [vmem:[%s190 + $0xa0] sm:$0xff] %v561
      %594 = vst [vmem:[%s190 + $0xa8] sm:$0xff] %v562
      %595 = vst [vmem:[%s190 + $0xb0] sm:$0xff] %v563
      %596 = vst [vmem:[%s190 + $0xb8] sm:$0xff] %v564
      %597 = vst [vmem:[%s190 + $0xc0] sm:$0xff] %v565
      %598 = vst [vmem:[%s190 + $0xc8] sm:$0xff] %v566
      %599 = vst [vmem:[%s190 + $0xd0] sm:$0xff] %v567
      %600 = vst [vmem:[%s190 + $0xd8] sm:$0xff] %v568
      %601 = vst [vmem:[%s190 + $0xe0] sm:$0xff] %v569
      %602 = vst [vmem:[%s190 + $0xe8] sm:$0xff] %v570
      %603 = vst [vmem:[%s190 + $0xf0] sm:$0xff] %v571
      %604 = vst [vmem:[%s190 + $0xf8] sm:$0xff] %v572
      %s605 = smul.u32 32, %s17
      %p606 = scmp.lt.s32.totalorder %s605, 63
      %s607 = scalar_select %p606, %s605, 63
      %s608 = smul.addr %s607, 8
      %s609 = scalar_lea.vmem %s2, %s608
      // Predicated region
      $region33: #{_lambda_.16} parent=27 // pred_check
        %p610 = pneg %p97
      $region34: #{_lambda_.16} parent=27 // pred_check_branch
        %612 = sbr.rel (%p610) target = $region36
      $region35: #{_lambda_.16} parent=27 // pred_region
        %s613 = smul.u32 32, %s17
      $region36: #{_lambda_.16} parent=27 // pred_fallthru
        _
    $region28: #{_lambda_.16} parent=5 // pred_fallthru
      _
    %p614 = scmp.le.s32.totalorder 2, %s8
    // Predicated region
    $region37: #{_lambda_.16} parent=5 // pred_check
      %p615 = pneg %p614
    $region38: #{_lambda_.16} parent=5 // pred_check_branch
      %617 = sbr.rel (%p615) target = $region40
    $region39: #{_lambda_.16} parent=5 // pred_region
      %s618 = ssub.s32 %s8, 2
      // Predicated region
      $region41: #{_lambda_.16} parent=39 // pred_check
        %p619 = pneg %p103
      $region42: #{_lambda_.16} parent=39 // pred_check_branch
        %621 = sbr.rel (%p619) target = $region44
      $region43: #{_lambda_.16} parent=39 // pred_region
        %s622 = smul.u32 32, %s19
        %p623 = scmp.lt.s32.totalorder %s622, 63
        %s624 = scalar_select %p623, %s622, 63
        %s625 = smul.addr %s624, 8
        %s626 = scalar_lea.vmem %s2, %s625
      $region44: #{_lambda_.16} parent=39 // pred_fallthru
        _
    $region40: #{_lambda_.16} parent=5 // pred_fallthru
      _
  $region6: #{_lambda_.16} parent=0 // loop_footer
    %s12 = sadd.s32 1, %s8
  $region7: #{_lambda_.16} parent=0 // loop_footer_branch
    %7 = sbr.rel target = $region3
  $region8: #{_lambda_.16} parent=0 // loop_exit
    _

// kernel: _lambda_.17
$region0: #{_lambda_.17}
  #allocation0 [shape = 'u32[]', space=smem, size = 0x4, offset = 0x4, fixed_abs, tag = 'smem constant byte address 0x4 - core index']
  #allocation1 [shape = 'u32[72,128]{1,0:T(1,128)}', space=vmem, size = 0x9000, scoped, tag = 'internal scratch']
  %s0 = inlined_call_operand.vmem [shape: f32[2048,128], index: 0, kind: input, shape index: {}]
  %s1 = inlined_call_operand.vmem [shape: f32[1,128], index: 1, kind: input, shape index: {}]
  %s2 = inlined_call_operand.vmem [shape: f32[2048,128], index: 2, kind: output, shape index: {}]
  %s3 = sld [smem:[#allocation0]]
  $region41: #{_lambda_.17} parent=0
    _
  %s5 = ssub.s32 1, %s3
  %s6 = scalar_select 0, %s5, %s3
  loop: start=0, step=1, limit=10
  $region2: #{_lambda_.17} parent=0 // loop_pre_header
    _
  $region3: #{_lambda_.17} parent=0 // loop_header
    %s8 = sphi 0, %s12
    %p9 = scmp.ge.s32.totalorder %s8, 10
    %s18 = sphi 0, %s20
    %s21 = sphi 0, %s18
    %s22 = sphi 0, %s21
    %s38 = sphi 0, %s22
    %s42 = sphi 0, %s42
    %s44 = sphi 0, %s42
    %s45 = sphi 0, %s44
    %s59 = sphi 0, %s45
    %s65 = sphi 0, %s67
    %s68 = sphi 0, %s65
    %s69 = sphi 0, %s68
    %s85 = sphi 0, %s69
  $region4: #{_lambda_.17} parent=0 // loop_header_branch
    %11 = sbr.rel (%p9) target = $region8
  $region5: #{_lambda_.17} parent=0 // loop_body
    %s13 = ssub.s32 %s8, 1
    %s14 = ssub.s32 %s8, 2
    %s15 = sadd.s32 %s8, 1
    %s16 = ssub.s32 %s8, %s15
    %p17 = scmp.eq.s32.totalorder %s16, 0
    %s19 = sadd.s32 %s18, 1
    %s20 = scalar_select %p17, %s18, %s19
    %p23 = pneg %p17
    %p24 = scmp.eq.s32.totalorder %s8, 7
    %p25 = por %p23, %p24
    %p26 = scmp.ne.s32.totalorder %s18, %s21
    %p27 = scmp.eq.s32.totalorder %s8, 0
    %p28 = por %p26, %p27
    %p29 = scmp.ne.s32.totalorder %s18, %s21
    %p30 = scmp.eq.s32.totalorder %s13, 7
    %p31 = por %p29, %p30
    %p32 = scmp.ne.s32.totalorder %s21, %s22
    %p33 = scmp.eq.s32.totalorder %s13, 0
    %p34 = por %p32, %p33
    %p35 = scmp.ne.s32.totalorder %s21, %s22
    %p36 = scmp.eq.s32.totalorder %s14, 7
    %p37 = por %p35, %p36
    %p39 = scmp.ne.s32.totalorder %s22, %s38
    %p40 = scmp.eq.s32.totalorder %s14, 0
    %p41 = por %p39, %p40
    %s43 = sadd.s32 %s42, 1
    %p46 = scmp.eq.s32.totalorder %s8, 7
    %p47 = scmp.ne.s32.totalorder %s42, %s44
    %p48 = scmp.eq.s32.totalorder %s8, 0
    %p49 = por %p47, %p48
    %p50 = scmp.ne.s32.totalorder %s42, %s44
    %p51 = scmp.eq.s32.totalorder %s13, 7
    %p52 = por %p50, %p51
    %p53 = scmp.ne.s32.totalorder %s44, %s45
    %p54 = scmp.eq.s32.totalorder %s13, 0
    %p55 = por %p53, %p54
    %p56 = scmp.ne.s32.totalorder %s44, %s45
    %p57 = scmp.eq.s32.totalorder %s14, 7
    %p58 = por %p56, %p57
    %p60 = scmp.ne.s32.totalorder %s45, %s59
    %p61 = scmp.eq.s32.totalorder %s14, 0
    %p62 = por %p60, %p61
    %s63 = ssub.s32 %s8, %s15
    %p64 = scmp.eq.s32.totalorder %s63, 0
    %s66 = sadd.s32 %s65, 1
    %s67 = scalar_select %p64, %s65, %s66
    %p70 = pneg %p64
    %p71 = scmp.eq.s32.totalorder %s8, 7
    %p72 = por %p70, %p71
    %p73 = scmp.ne.s32.totalorder %s65, %s68
    %p74 = scmp.eq.s32.totalorder %s8, 0
    %p75 = por %p73, %p74
    %p76 = scmp.ne.s32.totalorder %s65, %s68
    %p77 = scmp.eq.s32.totalorder %s13, 7
    %p78 = por %p76, %p77
    %p79 = scmp.ne.s32.totalorder %s68, %s69
    %p80 = scmp.eq.s32.totalorder %s13, 0
    %p81 = por %p79, %p80
    %p82 = scmp.ne.s32.totalorder %s68, %s69
    %p83 = scmp.eq.s32.totalorder %s14, 7
    %p84 = por %p82, %p83
    %p86 = scmp.ne.s32.totalorder %s69, %s85
    %p87 = scmp.eq.s32.totalorder %s14, 0
    %p88 = por %p86, %p87
    %p89 = scmp.le.s32.totalorder 1, %s8
    %p90 = scmp.lt.s32.totalorder %s8, 9
    %p91 = pnand %p89, %p90
    %p92 = pneg %p91
    // Predicated region
    $region9: #{_lambda_.17} parent=5 // pred_check
      _
    $region10: #{_lambda_.17} parent=5 // pred_check_branch
      %94 = sbr.rel (%p91) target = $region12
    $region11: #{_lambda_.17} parent=5 // pred_region
      %s95 = ssub.s32 %s8, 1
      // Predicated region
      $region13: #{_lambda_.17} parent=11 // pred_check
        %p96 = pneg %p55
      $region14: #{_lambda_.17} parent=11 // pred_check_branch
        %98 = sbr.rel (%p96) target = $region16
      $region15: #{_lambda_.17} parent=11 // pred_region
        _
      $region16: #{_lambda_.17} parent=11 // pred_fallthru
        _
    $region12: #{_lambda_.17} parent=5 // pred_fallthru
      _
    %p99 = scmp.lt.s32.totalorder %s8, 8
    // Predicated region
    $region17: #{_lambda_.17} parent=5 // pred_check
      %p100 = pneg %p99
    $region18: #{_lambda_.17} parent=5 // pred_check_branch
      %102 = sbr.rel (%p100) target = $region20
    $region19: #{_lambda_.17} parent=5 // pred_region
      // Predicated region
      $region21: #{_lambda_.17} parent=19 // pred_check
        %p103 = pneg %p28
      $region22: #{_lambda_.17} parent=19 // pred_check_branch
        %105 = sbr.rel (%p103) target = $region24
      $region23: #{_lambda_.17} parent=19 // pred_region
        %s106 = smul.u32 32, %s8
        %p107 = scmp.lt.s32.totalorder %s106, 255
        %s108 = scalar_select %p107, %s106, 255
        %s109 = smul.addr %s108, 8
        %s110 = scalar_lea.vmem %s0, %s109
        %s111 = smul.u32 32, %s8
      $region24: #{_lambda_.17} parent=19 // pred_fallthru
        _
    $region20: #{_lambda_.17} parent=5 // pred_fallthru
      _
    %p112 = scmp.le.s32.totalorder 1, %s8
    %p113 = scmp.lt.s32.totalorder %s8, 9
    %p114 = pnand %p112, %p113
    %p115 = pneg %p114
    // Predicated region
    $region25: #{_lambda_.17} parent=5 // pred_check
      _
    $region26: #{_lambda_.17} parent=5 // pred_check_branch
      %117 = sbr.rel (%p114) target = $region28
    $region27: #{_lambda_.17} parent=5 // pred_region
      %s118 = ssub.s32 %s8, 1
      %s119 = smul.u32 32, %s13
      %p120 = scmp.lt.s32.totalorder %s119, 255
      %s121 = scalar_select %p120, %s119, 255
      %s122 = smul.addr %s121, 8
      %s123 = scalar_lea.vmem %s0, %s122
      %p124 = pneg %p34
      %p125 = pneg %p31
      %p126 = pneg %p55
      %p127 = pneg %p52
      %p128 = pneg %p81
      %p129 = pneg %p78
      %s130 = smul.u32 32, %s13
      %p131 = scmp.lt.s32.totalorder %s130, 255
      %s132 = scalar_select %p131, %s130, 255
      %s133 = smul.addr %s132, 8
      %s134 = scalar_lea.vmem %s2, %s133
      %s135 = smul.u32 32, %s13
      %p136 = scmp.lt.s32.totalorder %s135, 255
      %s137 = scalar_select %p136, %s135, 255
      %s138 = smul.addr %s137, 8
      %s139 = scalar_lea.vmem %s0, %s138
      %s140 = smul.u32 32, %s13
      %s141 = smul.u32 32, %s13
      %p142 = scmp.lt.s32.totalorder %s141, 255
      %s143 = scalar_select %p142, %s141, 255
      %s144 = smul.addr %s143, 8
      %s145 = scalar_lea.vmem %s2, %s144
      %s146 = smul.u32 32, %s13
      %v147 = vld [vmem:[%s139] sm:$0xff]
      %v148 = vld [vmem:[%s139 + $0x8] sm:$0xff]
      %v149 = vld [vmem:[%s139 + $0x10] sm:$0xff]
      %v150 = vld [vmem:[%s139 + $0x18] sm:$0xff]
      %v151 = vld [vmem:[%s139 + $0x20] sm:$0xff]
      %v152 = vld [vmem:[%s139 + $0x28] sm:$0xff]
      %v153 = vld [vmem:[%s139 + $0x30] sm:$0xff]
      %v154 = vld [vmem:[%s139 + $0x38] sm:$0xff]
      %v155 = vld [vmem:[%s139 + $0x40] sm:$0xff]
      %v156 = vld [vmem:[%s139 + $0x48] sm:$0xff]
      %v157 = vld [vmem:[%s139 + $0x50] sm:$0xff]
      %v158 = vld [vmem:[%s139 + $0x58] sm:$0xff]
      %v159 = vld [vmem:[%s139 + $0x60] sm:$0xff]
      %v160 = vld [vmem:[%s139 + $0x68] sm:$0xff]
      %v161 = vld [vmem:[%s139 + $0x70] sm:$0xff]
      %v162 = vld [vmem:[%s139 + $0x78] sm:$0xff]
      %v163 = vld [vmem:[%s139 + $0x80] sm:$0xff]
      %v164 = vld [vmem:[%s139 + $0x88] sm:$0xff]
      %v165 = vld [vmem:[%s139 + $0x90] sm:$0xff]
      %v166 = vld [vmem:[%s139 + $0x98] sm:$0xff]
      %v167 = vld [vmem:[%s139 + $0xa0] sm:$0xff]
      %v168 = vld [vmem:[%s139 + $0xa8] sm:$0xff]
      %v169 = vld [vmem:[%s139 + $0xb0] sm:$0xff]
      %v170 = vld [vmem:[%s139 + $0xb8] sm:$0xff]
      %v171 = vld [vmem:[%s139 + $0xc0] sm:$0xff]
      %v172 = vld [vmem:[%s139 + $0xc8] sm:$0xff]
      %v173 = vld [vmem:[%s139 + $0xd0] sm:$0xff]
      %v174 = vld [vmem:[%s139 + $0xd8] sm:$0xff]
      %v175 = vld [vmem:[%s139 + $0xe0] sm:$0xff]
      %v176 = vld [vmem:[%s139 + $0xe8] sm:$0xff]
      %v177 = vld [vmem:[%s139 + $0xf0] sm:$0xff]
      %v178 = vld [vmem:[%s139 + $0xf8] sm:$0xff]
      %v179 = vld [vmem:[%s1] sm:$0x1]
      %v181 = vperm.slane %v179, 0
      %v183 = vadd.f32 %v147, %v181
      %v184 = vadd.f32 %v148, %v181
      %v185 = vadd.f32 %v149, %v181
      %v186 = vadd.f32 %v150, %v181
      %v187 = vadd.f32 %v151, %v181
      %v188 = vadd.f32 %v152, %v181
      %v189 = vadd.f32 %v153, %v181
      %v190 = vadd.f32 %v154, %v181
      %v191 = vadd.f32 %v155, %v181
      %v192 = vadd.f32 %v156, %v181
      %v193 = vadd.f32 %v157, %v181
      %v194 = vadd.f32 %v158, %v181
      %v195 = vadd.f32 %v159, %v181
      %v196 = vadd.f32 %v160, %v181
      %v197 = vadd.f32 %v161, %v181
      %v198 = vadd.f32 %v162, %v181
      %v199 = vadd.f32 %v163, %v181
      %v200 = vadd.f32 %v164, %v181
      %v201 = vadd.f32 %v165, %v181
      %v202 = vadd.f32 %v166, %v181
      %v203 = vadd.f32 %v167, %v181
      %v204 = vadd.f32 %v168, %v181
      %v205 = vadd.f32 %v169, %v181
      %v206 = vadd.f32 %v170, %v181
      %v207 = vadd.f32 %v171, %v181
      %v208 = vadd.f32 %v172, %v181
      %v209 = vadd.f32 %v173, %v181
      %v210 = vadd.f32 %v174, %v181
      %v211 = vadd.f32 %v175, %v181
      %v212 = vadd.f32 %v176, %v181
      %v213 = vadd.f32 %v177, %v181
      %v214 = vadd.f32 %v178, %v181
      %v215 = vtanh.pop %v183
      %v216 = vtanh.pop %v184
      %v217 = vtanh.pop %v185
      %v218 = vtanh.pop %v186
      %v219 = vtanh.pop %v187
      %v220 = vtanh.pop %v188
      %v221 = vtanh.pop %v189
      %v222 = vtanh.pop %v190
      %v223 = vtanh.pop %v191
      %v224 = vtanh.pop %v192
      %v225 = vtanh.pop %v193
      %v226 = vtanh.pop %v194
      %v227 = vtanh.pop %v195
      %v228 = vtanh.pop %v196
      %v229 = vtanh.pop %v197
      %v230 = vtanh.pop %v198
      %v231 = vtanh.pop %v199
      %v232 = vtanh.pop %v200
      %v233 = vtanh.pop %v201
      %v234 = vtanh.pop %v202
      %v235 = vtanh.pop %v203
      %v236 = vtanh.pop %v204
      %v237 = vtanh.pop %v205
      %v238 = vtanh.pop %v206
      %v239 = vtanh.pop %v207
      %v240 = vtanh.pop %v208
      %v241 = vtanh.pop %v209
      %v242 = vtanh.pop %v210
      %v243 = vtanh.pop %v211
      %v244 = vtanh.pop %v212
      %v245 = vtanh.pop %v213
      %v246 = vtanh.pop %v214
      %v247 = vmul.f32 %v215, 0.5
      %v248 = vmul.f32 %v216, 0.5
      %v249 = vmul.f32 %v217, 0.5
      %v250 = vmul.f32 %v218, 0.5
      %v251 = vmul.f32 %v219, 0.5
      %v252 = vmul.f32 %v220, 0.5
      %v253 = vmul.f32 %v221, 0.5
      %v254 = vmul.f32 %v222, 0.5
      %v255 = vmul.f32 %v223, 0.5
      %v256 = vmul.f32 %v224, 0.5
      %v257 = vmul.f32 %v225, 0.5
      %v258 = vmul.f32 %v226, 0.5
      %v259 = vmul.f32 %v227, 0.5
      %v260 = vmul.f32 %v228, 0.5
      %v261 = vmul.f32 %v229, 0.5
      %v262 = vmul.f32 %v230, 0.5
      %v263 = vmul.f32 %v231, 0.5
      %v264 = vmul.f32 %v232, 0.5
      %v265 = vmul.f32 %v233, 0.5
      %v266 = vmul.f32 %v234, 0.5
      %v267 = vmul.f32 %v235, 0.5
      %v268 = vmul.f32 %v236, 0.5
      %v269 = vmul.f32 %v237, 0.5
      %v270 = vmul.f32 %v238, 0.5
      %v271 = vmul.f32 %v239, 0.5
      %v272 = vmul.f32 %v240, 0.5
      %v273 = vmul.f32 %v241, 0.5
      %v274 = vmul.f32 %v242, 0.5
      %v275 = vmul.f32 %v243, 0.5
      %v276 = vmul.f32 %v244, 0.5
      %v277 = vmul.f32 %v245, 0.5
      %v278 = vmul.f32 %v246, 0.5
      %v279 = vadd.f32 %v247, 0.5
      %v280 = vadd.f32 %v248, 0.5
      %v281 = vadd.f32 %v249, 0.5
      %v282 = vadd.f32 %v250, 0.5
      %v283 = vadd.f32 %v251, 0.5
      %v284 = vadd.f32 %v252, 0.5
      %v285 = vadd.f32 %v253, 0.5
      %v286 = vadd.f32 %v254, 0.5
      %v287 = vadd.f32 %v255, 0.5
      %v288 = vadd.f32 %v256, 0.5
      %v289 = vadd.f32 %v257, 0.5
      %v290 = vadd.f32 %v258, 0.5
      %v291 = vadd.f32 %v259, 0.5
      %v292 = vadd.f32 %v260, 0.5
      %v293 = vadd.f32 %v261, 0.5
      %v294 = vadd.f32 %v262, 0.5
      %v295 = vadd.f32 %v263, 0.5
      %v296 = vadd.f32 %v264, 0.5
      %v297 = vadd.f32 %v265, 0.5
      %v298 = vadd.f32 %v266, 0.5
      %v299 = vadd.f32 %v267, 0.5
      %v300 = vadd.f32 %v268, 0.5
      %v301 = vadd.f32 %v269, 0.5
      %v302 = vadd.f32 %v270, 0.5
      %v303 = vadd.f32 %v271, 0.5
      %v304 = vadd.f32 %v272, 0.5
      %v305 = vadd.f32 %v273, 0.5
      %v306 = vadd.f32 %v274, 0.5
      %v307 = vadd.f32 %v275, 0.5
      %v308 = vadd.f32 %v276, 0.5
      %v309 = vadd.f32 %v277, 0.5
      %v310 = vadd.f32 %v278, 0.5
      %311 = vst [vmem:[%s145] sm:$0xff] %v279
      %312 = vst [vmem:[%s145 + $0x8] sm:$0xff] %v280
      %313 = vst [vmem:[%s145 + $0x10] sm:$0xff] %v281
      %314 = vst [vmem:[%s145 + $0x18] sm:$0xff] %v282
      %315 = vst [vmem:[%s145 + $0x20] sm:$0xff] %v283
      %316 = vst [vmem:[%s145 + $0x28] sm:$0xff] %v284
      %317 = vst [vmem:[%s145 + $0x30] sm:$0xff] %v285
      %318 = vst [vmem:[%s145 + $0x38] sm:$0xff] %v286
      %319 = vst [vmem:[%s145 + $0x40] sm:$0xff] %v287
      %320 = vst [vmem:[%s145 + $0x48] sm:$0xff] %v288
      %321 = vst [vmem:[%s145 + $0x50] sm:$0xff] %v289
      %322 = vst [vmem:[%s145 + $0x58] sm:$0xff] %v290
      %323 = vst [vmem:[%s145 + $0x60] sm:$0xff] %v291
      %324 = vst [vmem:[%s145 + $0x68] sm:$0xff] %v292
      %325 = vst [vmem:[%s145 + $0x70] sm:$0xff] %v293
      %326 = vst [vmem:[%s145 + $0x78] sm:$0xff] %v294
      %327 = vst [vmem:[%s145 + $0x80] sm:$0xff] %v295
      %328 = vst [vmem:[%s145 + $0x88] sm:$0xff] %v296
      %329 = vst [vmem:[%s145 + $0x90] sm:$0xff] %v297
      %330 = vst [vmem:[%s145 + $0x98] sm:$0xff] %v298
      %331 = vst [vmem:[%s145 + $0xa0] sm:$0xff] %v299
      %332 = vst [vmem:[%s145 + $0xa8] sm:$0xff] %v300
      %333 = vst [vmem:[%s145 + $0xb0] sm:$0xff] %v301
      %334 = vst [vmem:[%s145 + $0xb8] sm:$0xff] %v302
      %335 = vst [vmem:[%s145 + $0xc0] sm:$0xff] %v303
      %336 = vst [vmem:[%s145 + $0xc8] sm:$0xff] %v304
      %337 = vst [vmem:[%s145 + $0xd0] sm:$0xff] %v305
      %338 = vst [vmem:[%s145 + $0xd8] sm:$0xff] %v306
      %339 = vst [vmem:[%s145 + $0xe0] sm:$0xff] %v307
      %340 = vst [vmem:[%s145 + $0xe8] sm:$0xff] %v308
      %341 = vst [vmem:[%s145 + $0xf0] sm:$0xff] %v309
      %342 = vst [vmem:[%s145 + $0xf8] sm:$0xff] %v310
      %s343 = smul.u32 32, %s13
      %p344 = scmp.lt.s32.totalorder %s343, 255
      %s345 = scalar_select %p344, %s343, 255
      %s346 = smul.addr %s345, 8
      %s347 = scalar_lea.vmem %s2, %s346
      // Predicated region
      $region29: #{_lambda_.17} parent=27 // pred_check
        %p348 = pneg %p78
      $region30: #{_lambda_.17} parent=27 // pred_check_branch
        %350 = sbr.rel (%p348) target = $region32
      $region31: #{_lambda_.17} parent=27 // pred_region
        %s351 = smul.u32 32, %s13
      $region32: #{_lambda_.17} parent=27 // pred_fallthru
        _
    $region28: #{_lambda_.17} parent=5 // pred_fallthru
      _
    %p352 = scmp.le.s32.totalorder 2, %s8
    // Predicated region
    $region33: #{_lambda_.17} parent=5 // pred_check
      %p353 = pneg %p352
    $region34: #{_lambda_.17} parent=5 // pred_check_branch
      %355 = sbr.rel (%p353) target = $region36
    $region35: #{_lambda_.17} parent=5 // pred_region
      %s356 = ssub.s32 %s8, 2
      // Predicated region
      $region37: #{_lambda_.17} parent=35 // pred_check
        %p357 = pneg %p84
      $region38: #{_lambda_.17} parent=35 // pred_check_branch
        %359 = sbr.rel (%p357) target = $region40
      $region39: #{_lambda_.17} parent=35 // pred_region
        %s360 = smul.u32 32, %s14
        %p361 = scmp.lt.s32.totalorder %s360, 255
        %s362 = scalar_select %p361, %s360, 255
        %s363 = smul.addr %s362, 8
        %s364 = scalar_lea.vmem %s2, %s363
      $region40: #{_lambda_.17} parent=35 // pred_fallthru
        _
    $region36: #{_lambda_.17} parent=5 // pred_fallthru
      _
  $region6: #{_lambda_.17} parent=0 // loop_footer
    %s12 = sadd.s32 1, %s8
  $region7: #{_lambda_.17} parent=0 // loop_footer_branch
    %7 = sbr.rel target = $region3
  $region8: #{_lambda_.17} parent=0 // loop_exit
    _

</llo_original>
